<compile_context>
chip_gen: v7x
topology: tpu7x:2x2x1
jax: 0.10.0
libtpu: 0.0.40
codegen_flags: <defaults>
</compile_context>

<pallas_src>
import functools

import numpy as np
import jax
import jax.numpy as jnp
from jax import lax
from jax.experimental import pallas as pl
from jax.experimental.pallas import tpu as pltpu

EPS = 1e-5  # PyTorch InstanceNorm3d default (affine=False, biased variance)


def _inorm_relu(v, inv_n):
    # v: (CP, DHW) -- per-channel (row) InstanceNorm over the flattened spatial
    # lane dim (two-pass / centered variance), then ReLU.
    mean = jnp.sum(v, axis=1, keepdims=True) * inv_n
    d = v - mean
    var = jnp.sum(d * d, axis=1, keepdims=True) * inv_n
    return jnp.maximum(d * lax.rsqrt(var + EPS), 0.0)


def dfw_kernel(x_ref, edge_ref, w1_ref, b1_ref, w2_ref, b2_ref, o_ref,
               pad_ref, col_ref, *, C, CP, D, H, W, Nb, PADL):
    # x_ref    : (Nb, C, DHW)  Nb samples, channels-first, spatial flattened (lanes)
    # edge_ref : (8, L)        edge predicates: d>=1, d<=D-2, h>=1, h<=H-2, w>=1, w<=W-2
    # w1_ref   : (CP, 27*CP)   3x3x3 weights, columns ordered [tap, c_in]
    # b1_ref   : (CP, 1)
    # w2_ref   : (CP, CP)      1x1x1 weights [c_out, c_in]
    # b2_ref   : (CP, 1)
    # o_ref    : (Nb, C, DHW)
    # pad_ref  : (CP, PADL + L + PADL) zero-haloed flat scratch (L = Nb*DHW)
    # col_ref  : (27*CP, L)    im2col tap stack
    DHW = D * H * W
    HW = H * W
    L = Nb * DHW
    f32 = jnp.float32

    # --- Stage the samples into the zero-haloed flat scratch.  Only the halos
    #     and the channel-pad rows need zeros; re-zeroing them each step is
    #     cheap, idempotent and therefore megacore-safe.
    pad_ref[:, 0:PADL] = jnp.zeros((CP, PADL), f32)
    pad_ref[:, PADL + L:PADL + L + PADL] = jnp.zeros((CP, PADL), f32)
    if CP > C:
        pad_ref[C:CP, PADL:PADL + L] = jnp.zeros((CP - C, L), f32)
    for n in range(Nb):
        pad_ref[0:C, PADL + n * DHW:PADL + (n + 1) * DHW] = x_ref[n].astype(f32)

    # --- im2col: 27 shifted flat views, boundary-masked while being stored.
    #     Masked positions are exactly the flat-index row/plane/sample wraps.
    for kd in range(3):
        for kh in range(3):
            for kw in range(3):
                k = (kd * 3 + kh) * 3 + kw
                shift = (kd - 1) * HW + (kh - 1) * W + (kw - 1)
                start = PADL + shift
                tap = pad_ref[:, start:start + L]
                m = None
                for off, lo_row, hi_row in ((kd - 1, 0, 1),
                                            (kh - 1, 2, 3),
                                            (kw - 1, 4, 5)):
                    if off == 0:
                        continue
                    row = lo_row if off < 0 else hi_row
                    e = edge_ref[row:row + 1, :]
                    m = e if m is None else m * e
                if m is not None:
                    tap = tap * m
                col_ref[k * CP:(k + 1) * CP, :] = tap

    # --- DW_Conv (3x3x3): one K = 27*CP matmul on the MXU, f32 accumulation.
    acc = jnp.dot(w1_ref[...], col_ref[...], preferred_element_type=f32) + b1_ref[...]

    # --- Per sample: InstanceNorm+ReLU, PW_Conv (1x1x1), InstanceNorm+ReLU,
    #     double residual, final ReLU, lane-dense store.
    inv_n = 1.0 / float(DHW)
    for n in range(Nb):
        off = n * DHW
        y = _inorm_relu(acc[:, off:off + DHW], inv_n)               # DW_Conv output
        z = jnp.dot(w2_ref[...], y, preferred_element_type=f32) + b2_ref[...]
        z = _inorm_relu(z, inv_n)                                    # PW_Conv output
        res = x_ref[n].astype(f32)                                   # original input
        o_ref[n] = jnp.maximum(z[0:C, :] + y[0:C, :] + res, 0.0).astype(o_ref.dtype)


def _pick_nb(N, CP, DHW, budget_bytes=16 * 2**20):
    # Samples per grid step: batch to amortize per-step overhead, but keep at
    # least 2 grid steps when N >= 2 (v7x megacore) and the im2col under budget.
    best = 1
    for nb in range(1, N + 1):
        if N % nb:
            continue
        if N >= 2 and N // nb < 2:
            continue
        if 4 * (27 * CP + 3 * CP) * nb * DHW > budget_bytes:
            continue
        best = nb
    return best


def dfw_pallas(x, w1, b1, w2, b2, samples_per_step=None):
    # x: (N, C, D, H, W) float32; w1: (C, C, 3, 3, 3); w2: (C, C, 1, 1, 1)
    N, C, D, H, W = x.shape
    DHW, HW = D * H * W, H * W
    CP = ((C + 7) // 8) * 8                        # channels padded to sublane multiple
    PADL = ((HW + W + 1 + 127) // 128) * 128       # flat halo >= max |tap shift|

    Nb = _pick_nb(N, CP, DHW) if samples_per_step is None else samples_per_step
    assert N % Nb == 0
    L = Nb * DHW

    # Channels-first, spatial flattened into lanes. Wrapper does reshapes only.
    x3 = x.reshape(N, C, DHW)

    # Parameter prep (tiny, constant-foldable).
    # w1_flat columns ordered [tap, c_in] to match the im2col row layout.
    w1_t = jnp.transpose(w1, (2, 3, 4, 0, 1)).reshape(27, C, C)     # [k, co, ci]
    w1_p = jnp.pad(w1_t, ((0, 0), (0, CP - C), (0, CP - C)))         # [k, CP, CP]
    w1_flat = jnp.transpose(w1_p, (1, 0, 2)).reshape(CP, 27 * CP)    # [co, k*CP+ci]
    w2_k = jnp.pad(w2.reshape(C, C), ((0, CP - C), (0, CP - C)))     # [co, ci]
    b1_k = jnp.pad(b1, (0, CP - C)).reshape(CP, 1)
    b2_k = jnp.pad(b2, (0, CP - C)).reshape(CP, 1)

    # 6 edge-predicate rows (shape constants, tiled per sample along the lane
    # slab) + 2 unused pad rows; 3.4x smaller than a per-tap (27, DHW) mask.
    dd = np.arange(D)[:, None, None]
    hh = np.arange(H)[None, :, None]
    ww = np.arange(W)[None, None, :]

    def pred(a):
        return np.broadcast_to(a, (D, H, W)).astype(np.float32).reshape(-1)

    edge_np = np.stack([
        pred(dd >= 1), pred(dd <= D - 2),
        pred(hh >= 1), pred(hh <= H - 2),
        pred(ww >= 1), pred(ww <= W - 2),
        np.ones(DHW, np.float32), np.ones(DHW, np.float32),
    ])                                                               # (8, DHW)
    edge = jnp.asarray(np.tile(edge_np, (1, Nb)))                    # (8, L)

    kern = functools.partial(dfw_kernel, C=C, CP=CP, D=D, H=H, W=W, Nb=Nb, PADL=PADL)

    scratch_bytes = 4 * (CP * (2 * PADL + L) + 27 * CP * L)
    vmem_limit = int(min(max(4 * scratch_bytes, 32 * 2**20), 60 * 2**20))

    out3 = pl.pallas_call(
        kern,
        out_shape=jax.ShapeDtypeStruct((N, C, DHW), jnp.float32),
        grid=(N // Nb,),
        in_specs=[
            pl.BlockSpec((Nb, C, DHW), lambda n: (n, 0, 0)),
            # Constant (grid-invariant) operands: index maps return block 0 every
            # step, so they stay resident and are not re-fetched.
            pl.BlockSpec((8, L), lambda n: (0, 0)),
            pl.BlockSpec((CP, 27 * CP), lambda n: (0, 0)),
            pl.BlockSpec((CP, 1), lambda n: (0, 0)),
            pl.BlockSpec((CP, CP), lambda n: (0, 0)),
            pl.BlockSpec((CP, 1), lambda n: (0, 0)),
        ],
        out_specs=pl.BlockSpec((Nb, C, DHW), lambda n: (n, 0, 0)),
        scratch_shapes=[
            pltpu.VMEM((CP, PADL + L + PADL), jnp.float32),   # zero-haloed flat slab
            pltpu.VMEM((27 * CP, L), jnp.float32),            # im2col tap stack
        ],
        compiler_params=pltpu.CompilerParams(
            dimension_semantics=("parallel",),
            vmem_limit_bytes=vmem_limit,
        ),
    )(x3, edge, w1_flat, b1_k, w2_k, b2_k)

    return out3.reshape(N, C, D, H, W)


def dfw_reference(x, w1, b1, w2, b2):
    # Pure-JAX reference of the PyTorch forward (NCDHW).
    def inorm(v):
        mean = jnp.mean(v, axis=(2, 3, 4), keepdims=True)
        var = jnp.mean((v - mean) ** 2, axis=(2, 3, 4), keepdims=True)
        return (v - mean) * lax.rsqrt(var + EPS)

    dn1 = lax.conv_dimension_numbers(x.shape, w1.shape, ("NCDHW", "OIDHW", "NCDHW"))
    y = lax.conv_general_dilated(x, w1, (1, 1, 1), [(1, 1)] * 3, dimension_numbers=dn1)
    y = y + b1.reshape(1, -1, 1, 1, 1)
    y = jax.nn.relu(inorm(y))

    dn2 = lax.conv_dimension_numbers(y.shape, w2.shape, ("NCDHW", "OIDHW", "NCDHW"))
    z = lax.conv_general_dilated(y, w2, (1, 1, 1), [(0, 0)] * 3, dimension_numbers=dn2)
    z = z + b2.reshape(1, -1, 1, 1, 1)
    z = jax.nn.relu(inorm(z))

    return jax.nn.relu(z + y + x)


if __name__ == "__main__":
    key = jax.random.PRNGKey(0)
    k_x, k_w1, k_b1, k_w2, k_b2 = jax.random.split(key, 5)

    N, C, D, H, W = 2, 4, 8, 8, 8
    x = jax.random.normal(k_x, (N, C, D, H, W), jnp.float32)
    # Deterministic synthetic parameters (nn.Conv3d shapes).
    w1 = 0.1 * jax.random.normal(k_w1, (C, C, 3, 3, 3), jnp.float32)
    b1 = 0.1 * jax.random.normal(k_b1, (C,), jnp.float32)
    w2 = 0.1 * jax.random.normal(k_w2, (C, C, 1, 1, 1), jnp.float32)
    b2 = 0.1 * jax.random.normal(k_b2, (C,), jnp.float32)

    ref = jax.block_until_ready(dfw_reference(x, w1, b1, w2, b2))

    # Default config: 1 sample per step, grid=(2,) (keeps v7x megacore sharding).
    out = jax.block_until_ready(dfw_pallas(x, w1, b1, w2, b2))
    assert out.shape == x.shape and out.dtype == jnp.float32
    err = float(jnp.max(jnp.abs(out - ref)))
    if err > 1e-3:
        raise AssertionError(f"kernel/reference mismatch (Nb=1), max abs err = {err}")

    # Also exercise the batched-samples-per-step path (both samples in one step).
    out_b = jax.block_until_ready(dfw_pallas(x, w1, b1, w2, b2, samples_per_step=2))
    err_b = float(jnp.max(jnp.abs(out_b - ref)))
    if err_b > 1e-3:
        raise AssertionError(f"kernel/reference mismatch (Nb=2), max abs err = {err_b}")

    print("KERNEL_OK")
</pallas_src>

<mosaic_0001>
module attributes {stable_mosaic.version = 11 : i64} {
  func.func @dfw_kernel(%arg0: i32, %arg1: memref<1x4x512xf32, #tpu.memory_space<vmem>>, %arg2: memref<8x512xf32, #tpu.memory_space<vmem>>, %arg3: memref<8x216xf32, #tpu.memory_space<vmem>>, %arg4: memref<8x1xf32, #tpu.memory_space<vmem>>, %arg5: memref<8x8xf32, #tpu.memory_space<vmem>>, %arg6: memref<8x1xf32, #tpu.memory_space<vmem>>, %arg7: memref<1x4x512xf32, #tpu.memory_space<vmem>>, %arg8: memref<8x768xf32, #tpu.memory_space<vmem>>, %arg9: memref<216x512xf32, #tpu.memory_space<vmem>>) attributes {dimension_semantics = [#tpu.dimension_semantics<parallel>], iteration_bounds = array<i64: 2>, scalar_prefetch = 0 : i64, scratch_operands = 2 : i64, tpu.core_type = #tpu.core_type<tc>, window_params = [{transform_indices = @transform_0, window_bounds = array<i64: 1, 4, 512>}, {pipeline_mode = #tpu.pipeline_mode<synchronous>, transform_indices = @transform_1, window_bounds = array<i64: 8, 512>}, {pipeline_mode = #tpu.pipeline_mode<synchronous>, transform_indices = @transform_2, window_bounds = array<i64: 8, 216>}, {pipeline_mode = #tpu.pipeline_mode<synchronous>, transform_indices = @transform_3, window_bounds = array<i64: 8, 1>}, {pipeline_mode = #tpu.pipeline_mode<synchronous>, transform_indices = @transform_4, window_bounds = array<i64: 8, 8>}, {pipeline_mode = #tpu.pipeline_mode<synchronous>, transform_indices = @transform_5, window_bounds = array<i64: 8, 1>}, {transform_indices = @transform_6, window_bounds = array<i64: 1, 4, 512>}]} {
    %cst = arith.constant 0.000000e+00 : f32
    %0 = vector.broadcast %cst : f32 to vector<8x128xf32>
    %c0 = arith.constant 0 : index
    %c0_0 = arith.constant 0 : index
    %1 = vector.load %arg8[%c0, %c0_0] : memref<8x768xf32, #tpu.memory_space<vmem>>, vector<8x128xf32>
    tpu.vector_store %arg8[%c0, %c0_0], %0 {strides = array<i32>} : memref<8x768xf32, #tpu.memory_space<vmem>>, vector<8x128xf32>,
    %cst_1 = arith.constant 0.000000e+00 : f32
    %2 = vector.broadcast %cst_1 : f32 to vector<8x128xf32>
    %c0_2 = arith.constant 0 : index
    %c640 = arith.constant 640 : index
    %3 = vector.load %arg8[%c0_2, %c640] : memref<8x768xf32, #tpu.memory_space<vmem>>, vector<8x128xf32>
    tpu.vector_store %arg8[%c0_2, %c640], %2 {strides = array<i32>} : memref<8x768xf32, #tpu.memory_space<vmem>>, vector<8x128xf32>,
    %cst_3 = arith.constant 0.000000e+00 : f32
    %4 = vector.broadcast %cst_3 : f32 to vector<4x512xf32>
    %c4 = arith.constant 4 : index
    %c128 = arith.constant 128 : index
    %5 = vector.load %arg8[%c4, %c128] : memref<8x768xf32, #tpu.memory_space<vmem>>, vector<4x512xf32>
    tpu.vector_store %arg8[%c4, %c128], %4 {strides = array<i32>} : memref<8x768xf32, #tpu.memory_space<vmem>>, vector<4x512xf32>,
    %c0_4 = arith.constant 0 : index
    %c0_5 = arith.constant 0 : index
    %c0_6 = arith.constant 0 : index
    %6 = vector.load %arg1[%c0_4, %c0_5, %c0_6] : memref<1x4x512xf32, #tpu.memory_space<vmem>>, vector<1x4x512xf32>
    %7 = vector.shape_cast %6 : vector<1x4x512xf32> to vector<4x512xf32>
    %c0_7 = arith.constant 0 : index
    %c128_8 = arith.constant 128 : index
    %8 = vector.load %arg8[%c0_7, %c128_8] : memref<8x768xf32, #tpu.memory_space<vmem>>, vector<4x512xf32>
    tpu.vector_store %arg8[%c0_7, %c128_8], %7 {strides = array<i32>} : memref<8x768xf32, #tpu.memory_space<vmem>>, vector<4x512xf32>,
    %c0_9 = arith.constant 0 : index
    %c55 = arith.constant 55 : index
    %9 = vector.load %arg8[%c0_9, %c55] : memref<8x768xf32, #tpu.memory_space<vmem>>, vector<8x512xf32>
    %c0_10 = arith.constant 0 : index
    %c0_11 = arith.constant 0 : index
    %10 = vector.load %arg2[%c0_10, %c0_11] : memref<8x512xf32, #tpu.memory_space<vmem>>, vector<1x512xf32>
    %c2 = arith.constant 2 : index
    %c0_12 = arith.constant 0 : index
    %11 = vector.load %arg2[%c2, %c0_12] : memref<8x512xf32, #tpu.memory_space<vmem>>, vector<1x512xf32>
    %12 = arith.mulf %10, %11 : vector<1x512xf32>
    %c4_13 = arith.constant 4 : index
    %c0_14 = arith.constant 0 : index
    %13 = vector.load %arg2[%c4_13, %c0_14] : memref<8x512xf32, #tpu.memory_space<vmem>>, vector<1x512xf32>
    %14 = arith.mulf %12, %13 : vector<1x512xf32>
    %15 = vector.broadcast %14 : vector<1x512xf32> to vector<8x512xf32>
    %16 = arith.mulf %9, %15 : vector<8x512xf32>
    %c0_15 = arith.constant 0 : index
    %c0_16 = arith.constant 0 : index
    %17 = vector.load %arg9[%c0_15, %c0_16] : memref<216x512xf32, #tpu.memory_space<vmem>>, vector<8x512xf32>
    tpu.vector_store %arg9[%c0_15, %c0_16], %16 {strides = array<i32>} : memref<216x512xf32, #tpu.memory_space<vmem>>, vector<8x512xf32>,
    %c0_17 = arith.constant 0 : index
    %c56 = arith.constant 56 : index
    %18 = vector.load %arg8[%c0_17, %c56] : memref<8x768xf32, #tpu.memory_space<vmem>>, vector<8x512xf32>
    %c0_18 = arith.constant 0 : index
    %c0_19 = arith.constant 0 : index
    %19 = vector.load %arg2[%c0_18, %c0_19] : memref<8x512xf32, #tpu.memory_space<vmem>>, vector<1x512xf32>
    %c2_20 = arith.constant 2 : index
    %c0_21 = arith.constant 0 : index
    %20 = vector.load %arg2[%c2_20, %c0_21] : memref<8x512xf32, #tpu.memory_space<vmem>>, vector<1x512xf32>
    %21 = arith.mulf %19, %20 : vector<1x512xf32>
    %22 = vector.broadcast %21 : vector<1x512xf32> to vector<8x512xf32>
    %23 = arith.mulf %18, %22 : vector<8x512xf32>
    %c8 = arith.constant 8 : index
    %c0_22 = arith.constant 0 : index
    %24 = vector.load %arg9[%c8, %c0_22] : memref<216x512xf32, #tpu.memory_space<vmem>>, vector<8x512xf32>
    tpu.vector_store %arg9[%c8, %c0_22], %23 {strides = array<i32>} : memref<216x512xf32, #tpu.memory_space<vmem>>, vector<8x512xf32>,
    %c0_23 = arith.constant 0 : index
    %c57 = arith.constant 57 : index
    %25 = vector.load %arg8[%c0_23, %c57] : memref<8x768xf32, #tpu.memory_space<vmem>>, vector<8x512xf32>
    %c0_24 = arith.constant 0 : index
    %c0_25 = arith.constant 0 : index
    %26 = vector.load %arg2[%c0_24, %c0_25] : memref<8x512xf32, #tpu.memory_space<vmem>>, vector<1x512xf32>
    %c2_26 = arith.constant 2 : index
    %c0_27 = arith.constant 0 : index
    %27 = vector.load %arg2[%c2_26, %c0_27] : memref<8x512xf32, #tpu.memory_space<vmem>>, vector<1x512xf32>
    %28 = arith.mulf %26, %27 : vector<1x512xf32>
    %c5 = arith.constant 5 : index
    %c0_28 = arith.constant 0 : index
    %29 = vector.load %arg2[%c5, %c0_28] : memref<8x512xf32, #tpu.memory_space<vmem>>, vector<1x512xf32>
    %30 = arith.mulf %28, %29 : vector<1x512xf32>
    %31 = vector.broadcast %30 : vector<1x512xf32> to vector<8x512xf32>
    %32 = arith.mulf %25, %31 : vector<8x512xf32>
    %c16 = arith.constant 16 : index
    %c0_29 = arith.constant 0 : index
    %33 = vector.load %arg9[%c16, %c0_29] : memref<216x512xf32, #tpu.memory_space<vmem>>, vector<8x512xf32>
    tpu.vector_store %arg9[%c16, %c0_29], %32 {strides = array<i32>} : memref<216x512xf32, #tpu.memory_space<vmem>>, vector<8x512xf32>,
    %c0_30 = arith.constant 0 : index
    %c63 = arith.constant 63 : index
    %34 = vector.load %arg8[%c0_30, %c63] : memref<8x768xf32, #tpu.memory_space<vmem>>, vector<8x512xf32>
    %c0_31 = arith.constant 0 : index
    %c0_32 = arith.constant 0 : index
    %35 = vector.load %arg2[%c0_31, %c0_32] : memref<8x512xf32, #tpu.memory_space<vmem>>, vector<1x512xf32>
    %c4_33 = arith.constant 4 : index
    %c0_34 = arith.constant 0 : index
    %36 = vector.load %arg2[%c4_33, %c0_34] : memref<8x512xf32, #tpu.memory_space<vmem>>, vector<1x512xf32>
    %37 = arith.mulf %35, %36 : vector<1x512xf32>
    %38 = vector.broadcast %37 : vector<1x512xf32> to vector<8x512xf32>
    %39 = arith.mulf %34, %38 : vector<8x512xf32>
    %c24 = arith.constant 24 : index
    %c0_35 = arith.constant 0 : index
    %40 = vector.load %arg9[%c24, %c0_35] : memref<216x512xf32, #tpu.memory_space<vmem>>, vector<8x512xf32>
    tpu.vector_store %arg9[%c24, %c0_35], %39 {strides = array<i32>} : memref<216x512xf32, #tpu.memory_space<vmem>>, vector<8x512xf32>,
    %c0_36 = arith.constant 0 : index
    %c64 = arith.constant 64 : index
    %41 = vector.load %arg8[%c0_36, %c64] : memref<8x768xf32, #tpu.memory_space<vmem>>, vector<8x512xf32>
    %c0_37 = arith.constant 0 : index
    %c0_38 = arith.constant 0 : index
    %42 = vector.load %arg2[%c0_37, %c0_38] : memref<8x512xf32, #tpu.memory_space<vmem>>, vector<1x512xf32>
    %43 = vector.broadcast %42 : vector<1x512xf32> to vector<8x512xf32>
    %44 = arith.mulf %41, %43 : vector<8x512xf32>
    %c32 = arith.constant 32 : index
    %c0_39 = arith.constant 0 : index
    %45 = vector.load %arg9[%c32, %c0_39] : memref<216x512xf32, #tpu.memory_space<vmem>>, vector<8x512xf32>
    tpu.vector_store %arg9[%c32, %c0_39], %44 {strides = array<i32>} : memref<216x512xf32, #tpu.memory_space<vmem>>, vector<8x512xf32>,
    %c0_40 = arith.constant 0 : index
    %c65 = arith.constant 65 : index
    %46 = vector.load %arg8[%c0_40, %c65] : memref<8x768xf32, #tpu.memory_space<vmem>>, vector<8x512xf32>
    %c0_41 = arith.constant 0 : index
    %c0_42 = arith.constant 0 : index
    %47 = vector.load %arg2[%c0_41, %c0_42] : memref<8x512xf32, #tpu.memory_space<vmem>>, vector<1x512xf32>
    %c5_43 = arith.constant 5 : index
    %c0_44 = arith.constant 0 : index
    %48 = vector.load %arg2[%c5_43, %c0_44] : memref<8x512xf32, #tpu.memory_space<vmem>>, vector<1x512xf32>
    %49 = arith.mulf %47, %48 : vector<1x512xf32>
    %50 = vector.broadcast %49 : vector<1x512xf32> to vector<8x512xf32>
    %51 = arith.mulf %46, %50 : vector<8x512xf32>
    %c40 = arith.constant 40 : index
    %c0_45 = arith.constant 0 : index
    %52 = vector.load %arg9[%c40, %c0_45] : memref<216x512xf32, #tpu.memory_space<vmem>>, vector<8x512xf32>
    tpu.vector_store %arg9[%c40, %c0_45], %51 {strides = array<i32>} : memref<216x512xf32, #tpu.memory_space<vmem>>, vector<8x512xf32>,
    %c0_46 = arith.constant 0 : index
    %c71 = arith.constant 71 : index
    %53 = vector.load %arg8[%c0_46, %c71] : memref<8x768xf32, #tpu.memory_space<vmem>>, vector<8x512xf32>
    %c0_47 = arith.constant 0 : index
    %c0_48 = arith.constant 0 : index
    %54 = vector.load %arg2[%c0_47, %c0_48] : memref<8x512xf32, #tpu.memory_space<vmem>>, vector<1x512xf32>
    %c3 = arith.constant 3 : index
    %c0_49 = arith.constant 0 : index
    %55 = vector.load %arg2[%c3, %c0_49] : memref<8x512xf32, #tpu.memory_space<vmem>>, vector<1x512xf32>
    %56 = arith.mulf %54, %55 : vector<1x512xf32>
    %c4_50 = arith.constant 4 : index
    %c0_51 = arith.constant 0 : index
    %57 = vector.load %arg2[%c4_50, %c0_51] : memref<8x512xf32, #tpu.memory_space<vmem>>, vector<1x512xf32>
    %58 = arith.mulf %56, %57 : vector<1x512xf32>
    %59 = vector.broadcast %58 : vector<1x512xf32> to vector<8x512xf32>
    %60 = arith.mulf %53, %59 : vector<8x512xf32>
    %c48 = arith.constant 48 : index
    %c0_52 = arith.constant 0 : index
    %61 = vector.load %arg9[%c48, %c0_52] : memref<216x512xf32, #tpu.memory_space<vmem>>, vector<8x512xf32>
    tpu.vector_store %arg9[%c48, %c0_52], %60 {strides = array<i32>} : memref<216x512xf32, #tpu.memory_space<vmem>>, vector<8x512xf32>,
    %c0_53 = arith.constant 0 : index
    %c72 = arith.constant 72 : index
    %62 = vector.load %arg8[%c0_53, %c72] : memref<8x768xf32, #tpu.memory_space<vmem>>, vector<8x512xf32>
    %c0_54 = arith.constant 0 : index
    %c0_55 = arith.constant 0 : index
    %63 = vector.load %arg2[%c0_54, %c0_55] : memref<8x512xf32, #tpu.memory_space<vmem>>, vector<1x512xf32>
    %c3_56 = arith.constant 3 : index
    %c0_57 = arith.constant 0 : index
    %64 = vector.load %arg2[%c3_56, %c0_57] : memref<8x512xf32, #tpu.memory_space<vmem>>, vector<1x512xf32>
    %65 = arith.mulf %63, %64 : vector<1x512xf32>
    %66 = vector.broadcast %65 : vector<1x512xf32> to vector<8x512xf32>
    %67 = arith.mulf %62, %66 : vector<8x512xf32>
    %c56_58 = arith.constant 56 : index
    %c0_59 = arith.constant 0 : index
    %68 = vector.load %arg9[%c56_58, %c0_59] : memref<216x512xf32, #tpu.memory_space<vmem>>, vector<8x512xf32>
    tpu.vector_store %arg9[%c56_58, %c0_59], %67 {strides = array<i32>} : memref<216x512xf32, #tpu.memory_space<vmem>>, vector<8x512xf32>,
    %c0_60 = arith.constant 0 : index
    %c73 = arith.constant 73 : index
    %69 = vector.load %arg8[%c0_60, %c73] : memref<8x768xf32, #tpu.memory_space<vmem>>, vector<8x512xf32>
    %c0_61 = arith.constant 0 : index
    %c0_62 = arith.constant 0 : index
    %70 = vector.load %arg2[%c0_61, %c0_62] : memref<8x512xf32, #tpu.memory_space<vmem>>, vector<1x512xf32>
    %c3_63 = arith.constant 3 : index
    %c0_64 = arith.constant 0 : index
    %71 = vector.load %arg2[%c3_63, %c0_64] : memref<8x512xf32, #tpu.memory_space<vmem>>, vector<1x512xf32>
    %72 = arith.mulf %70, %71 : vector<1x512xf32>
    %c5_65 = arith.constant 5 : index
    %c0_66 = arith.constant 0 : index
    %73 = vector.load %arg2[%c5_65, %c0_66] : memref<8x512xf32, #tpu.memory_space<vmem>>, vector<1x512xf32>
    %74 = arith.mulf %72, %73 : vector<1x512xf32>
    %75 = vector.broadcast %74 : vector<1x512xf32> to vector<8x512xf32>
    %76 = arith.mulf %69, %75 : vector<8x512xf32>
    %c64_67 = arith.constant 64 : index
    %c0_68 = arith.constant 0 : index
    %77 = vector.load %arg9[%c64_67, %c0_68] : memref<216x512xf32, #tpu.memory_space<vmem>>, vector<8x512xf32>
    tpu.vector_store %arg9[%c64_67, %c0_68], %76 {strides = array<i32>} : memref<216x512xf32, #tpu.memory_space<vmem>>, vector<8x512xf32>,
    %c0_69 = arith.constant 0 : index
    %c119 = arith.constant 119 : index
    %78 = vector.load %arg8[%c0_69, %c119] : memref<8x768xf32, #tpu.memory_space<vmem>>, vector<8x512xf32>
    %c2_70 = arith.constant 2 : index
    %c0_71 = arith.constant 0 : index
    %79 = vector.load %arg2[%c2_70, %c0_71] : memref<8x512xf32, #tpu.memory_space<vmem>>, vector<1x512xf32>
    %c4_72 = arith.constant 4 : index
    %c0_73 = arith.constant 0 : index
    %80 = vector.load %arg2[%c4_72, %c0_73] : memref<8x512xf32, #tpu.memory_space<vmem>>, vector<1x512xf32>
    %81 = arith.mulf %79, %80 : vector<1x512xf32>
    %82 = vector.broadcast %81 : vector<1x512xf32> to vector<8x512xf32>
    %83 = arith.mulf %78, %82 : vector<8x512xf32>
    %c72_74 = arith.constant 72 : index
    %c0_75 = arith.constant 0 : index
    %84 = vector.load %arg9[%c72_74, %c0_75] : memref<216x512xf32, #tpu.memory_space<vmem>>, vector<8x512xf32>
    tpu.vector_store %arg9[%c72_74, %c0_75], %83 {strides = array<i32>} : memref<216x512xf32, #tpu.memory_space<vmem>>, vector<8x512xf32>,
    %c0_76 = arith.constant 0 : index
    %c120 = arith.constant 120 : index
    %85 = vector.load %arg8[%c0_76, %c120] : memref<8x768xf32, #tpu.memory_space<vmem>>, vector<8x512xf32>
    %c2_77 = arith.constant 2 : index
    %c0_78 = arith.constant 0 : index
    %86 = vector.load %arg2[%c2_77, %c0_78] : memref<8x512xf32, #tpu.memory_space<vmem>>, vector<1x512xf32>
    %87 = vector.broadcast %86 : vector<1x512xf32> to vector<8x512xf32>
    %88 = arith.mulf %85, %87 : vector<8x512xf32>
    %c80 = arith.constant 80 : index
    %c0_79 = arith.constant 0 : index
    %89 = vector.load %arg9[%c80, %c0_79] : memref<216x512xf32, #tpu.memory_space<vmem>>, vector<8x512xf32>
    tpu.vector_store %arg9[%c80, %c0_79], %88 {strides = array<i32>} : memref<216x512xf32, #tpu.memory_space<vmem>>, vector<8x512xf32>,
    %c0_80 = arith.constant 0 : index
    %c121 = arith.constant 121 : index
    %90 = vector.load %arg8[%c0_80, %c121] : memref<8x768xf32, #tpu.memory_space<vmem>>, vector<8x512xf32>
    %c2_81 = arith.constant 2 : index
    %c0_82 = arith.constant 0 : index
    %91 = vector.load %arg2[%c2_81, %c0_82] : memref<8x512xf32, #tpu.memory_space<vmem>>, vector<1x512xf32>
    %c5_83 = arith.constant 5 : index
    %c0_84 = arith.constant 0 : index
    %92 = vector.load %arg2[%c5_83, %c0_84] : memref<8x512xf32, #tpu.memory_space<vmem>>, vector<1x512xf32>
    %93 = arith.mulf %91, %92 : vector<1x512xf32>
    %94 = vector.broadcast %93 : vector<1x512xf32> to vector<8x512xf32>
    %95 = arith.mulf %90, %94 : vector<8x512xf32>
    %c88 = arith.constant 88 : index
    %c0_85 = arith.constant 0 : index
    %96 = vector.load %arg9[%c88, %c0_85] : memref<216x512xf32, #tpu.memory_space<vmem>>, vector<8x512xf32>
    tpu.vector_store %arg9[%c88, %c0_85], %95 {strides = array<i32>} : memref<216x512xf32, #tpu.memory_space<vmem>>, vector<8x512xf32>,
    %c0_86 = arith.constant 0 : index
    %c127 = arith.constant 127 : index
    %97 = vector.load %arg8[%c0_86, %c127] : memref<8x768xf32, #tpu.memory_space<vmem>>, vector<8x512xf32>
    %c4_87 = arith.constant 4 : index
    %c0_88 = arith.constant 0 : index
    %98 = vector.load %arg2[%c4_87, %c0_88] : memref<8x512xf32, #tpu.memory_space<vmem>>, vector<1x512xf32>
    %99 = vector.broadcast %98 : vector<1x512xf32> to vector<8x512xf32>
    %100 = arith.mulf %97, %99 : vector<8x512xf32>
    %c96 = arith.constant 96 : index
    %c0_89 = arith.constant 0 : index
    %101 = vector.load %arg9[%c96, %c0_89] : memref<216x512xf32, #tpu.memory_space<vmem>>, vector<8x512xf32>
    tpu.vector_store %arg9[%c96, %c0_89], %100 {strides = array<i32>} : memref<216x512xf32, #tpu.memory_space<vmem>>, vector<8x512xf32>,
    %c0_90 = arith.constant 0 : index
    %c128_91 = arith.constant 128 : index
    %102 = vector.load %arg8[%c0_90, %c128_91] : memref<8x768xf32, #tpu.memory_space<vmem>>, vector<8x512xf32>
    %c104 = arith.constant 104 : index
    %c0_92 = arith.constant 0 : index
    %103 = vector.load %arg9[%c104, %c0_92] : memref<216x512xf32, #tpu.memory_space<vmem>>, vector<8x512xf32>
    tpu.vector_store %arg9[%c104, %c0_92], %102 {strides = array<i32>} : memref<216x512xf32, #tpu.memory_space<vmem>>, vector<8x512xf32>,
    %c0_93 = arith.constant 0 : index
    %c129 = arith.constant 129 : index
    %104 = vector.load %arg8[%c0_93, %c129] : memref<8x768xf32, #tpu.memory_space<vmem>>, vector<8x512xf32>
    %c5_94 = arith.constant 5 : index
    %c0_95 = arith.constant 0 : index
    %105 = vector.load %arg2[%c5_94, %c0_95] : memref<8x512xf32, #tpu.memory_space<vmem>>, vector<1x512xf32>
    %106 = vector.broadcast %105 : vector<1x512xf32> to vector<8x512xf32>
    %107 = arith.mulf %104, %106 : vector<8x512xf32>
    %c112 = arith.constant 112 : index
    %c0_96 = arith.constant 0 : index
    %108 = vector.load %arg9[%c112, %c0_96] : memref<216x512xf32, #tpu.memory_space<vmem>>, vector<8x512xf32>
    tpu.vector_store %arg9[%c112, %c0_96], %107 {strides = array<i32>} : memref<216x512xf32, #tpu.memory_space<vmem>>, vector<8x512xf32>,
    %c0_97 = arith.constant 0 : index
    %c135 = arith.constant 135 : index
    %109 = vector.load %arg8[%c0_97, %c135] : memref<8x768xf32, #tpu.memory_space<vmem>>, vector<8x512xf32>
    %c3_98 = arith.constant 3 : index
    %c0_99 = arith.constant 0 : index
    %110 = vector.load %arg2[%c3_98, %c0_99] : memref<8x512xf32, #tpu.memory_space<vmem>>, vector<1x512xf32>
    %c4_100 = arith.constant 4 : index
    %c0_101 = arith.constant 0 : index
    %111 = vector.load %arg2[%c4_100, %c0_101] : memref<8x512xf32, #tpu.memory_space<vmem>>, vector<1x512xf32>
    %112 = arith.mulf %110, %111 : vector<1x512xf32>
    %113 = vector.broadcast %112 : vector<1x512xf32> to vector<8x512xf32>
    %114 = arith.mulf %109, %113 : vector<8x512xf32>
    %c120_102 = arith.constant 120 : index
    %c0_103 = arith.constant 0 : index
    %115 = vector.load %arg9[%c120_102, %c0_103] : memref<216x512xf32, #tpu.memory_space<vmem>>, vector<8x512xf32>
    tpu.vector_store %arg9[%c120_102, %c0_103], %114 {strides = array<i32>} : memref<216x512xf32, #tpu.memory_space<vmem>>, vector<8x512xf32>,
    %c0_104 = arith.constant 0 : index
    %c136 = arith.constant 136 : index
    %116 = vector.load %arg8[%c0_104, %c136] : memref<8x768xf32, #tpu.memory_space<vmem>>, vector<8x512xf32>
    %c3_105 = arith.constant 3 : index
    %c0_106 = arith.constant 0 : index
    %117 = vector.load %arg2[%c3_105, %c0_106] : memref<8x512xf32, #tpu.memory_space<vmem>>, vector<1x512xf32>
    %118 = vector.broadcast %117 : vector<1x512xf32> to vector<8x512xf32>
    %119 = arith.mulf %116, %118 : vector<8x512xf32>
    %c128_107 = arith.constant 128 : index
    %c0_108 = arith.constant 0 : index
    %120 = vector.load %arg9[%c128_107, %c0_108] : memref<216x512xf32, #tpu.memory_space<vmem>>, vector<8x512xf32>
    tpu.vector_store %arg9[%c128_107, %c0_108], %119 {strides = array<i32>} : memref<216x512xf32, #tpu.memory_space<vmem>>, vector<8x512xf32>,
    %c0_109 = arith.constant 0 : index
    %c137 = arith.constant 137 : index
    %121 = vector.load %arg8[%c0_109, %c137] : memref<8x768xf32, #tpu.memory_space<vmem>>, vector<8x512xf32>
    %c3_110 = arith.constant 3 : index
    %c0_111 = arith.constant 0 : index
    %122 = vector.load %arg2[%c3_110, %c0_111] : memref<8x512xf32, #tpu.memory_space<vmem>>, vector<1x512xf32>
    %c5_112 = arith.constant 5 : index
    %c0_113 = arith.constant 0 : index
    %123 = vector.load %arg2[%c5_112, %c0_113] : memref<8x512xf32, #tpu.memory_space<vmem>>, vector<1x512xf32>
    %124 = arith.mulf %122, %123 : vector<1x512xf32>
    %125 = vector.broadcast %124 : vector<1x512xf32> to vector<8x512xf32>
    %126 = arith.mulf %121, %125 : vector<8x512xf32>
    %c136_114 = arith.constant 136 : index
    %c0_115 = arith.constant 0 : index
    %127 = vector.load %arg9[%c136_114, %c0_115] : memref<216x512xf32, #tpu.memory_space<vmem>>, vector<8x512xf32>
    tpu.vector_store %arg9[%c136_114, %c0_115], %126 {strides = array<i32>} : memref<216x512xf32, #tpu.memory_space<vmem>>, vector<8x512xf32>,
    %c0_116 = arith.constant 0 : index
    %c183 = arith.constant 183 : index
    %128 = vector.load %arg8[%c0_116, %c183] : memref<8x768xf32, #tpu.memory_space<vmem>>, vector<8x512xf32>
    %c1 = arith.constant 1 : index
    %c0_117 = arith.constant 0 : index
    %129 = vector.load %arg2[%c1, %c0_117] : memref<8x512xf32, #tpu.memory_space<vmem>>, vector<1x512xf32>
    %c2_118 = arith.constant 2 : index
    %c0_119 = arith.constant 0 : index
    %130 = vector.load %arg2[%c2_118, %c0_119] : memref<8x512xf32, #tpu.memory_space<vmem>>, vector<1x512xf32>
    %131 = arith.mulf %129, %130 : vector<1x512xf32>
    %c4_120 = arith.constant 4 : index
    %c0_121 = arith.constant 0 : index
    %132 = vector.load %arg2[%c4_120, %c0_121] : memref<8x512xf32, #tpu.memory_space<vmem>>, vector<1x512xf32>
    %133 = arith.mulf %131, %132 : vector<1x512xf32>
    %134 = vector.broadcast %133 : vector<1x512xf32> to vector<8x512xf32>
    %135 = arith.mulf %128, %134 : vector<8x512xf32>
    %c144 = arith.constant 144 : index
    %c0_122 = arith.constant 0 : index
    %136 = vector.load %arg9[%c144, %c0_122] : memref<216x512xf32, #tpu.memory_space<vmem>>, vector<8x512xf32>
    tpu.vector_store %arg9[%c144, %c0_122], %135 {strides = array<i32>} : memref<216x512xf32, #tpu.memory_space<vmem>>, vector<8x512xf32>,
    %c0_123 = arith.constant 0 : index
    %c184 = arith.constant 184 : index
    %137 = vector.load %arg8[%c0_123, %c184] : memref<8x768xf32, #tpu.memory_space<vmem>>, vector<8x512xf32>
    %c1_124 = arith.constant 1 : index
    %c0_125 = arith.constant 0 : index
    %138 = vector.load %arg2[%c1_124, %c0_125] : memref<8x512xf32, #tpu.memory_space<vmem>>, vector<1x512xf32>
    %c2_126 = arith.constant 2 : index
    %c0_127 = arith.constant 0 : index
    %139 = vector.load %arg2[%c2_126, %c0_127] : memref<8x512xf32, #tpu.memory_space<vmem>>, vector<1x512xf32>
    %140 = arith.mulf %138, %139 : vector<1x512xf32>
    %141 = vector.broadcast %140 : vector<1x512xf32> to vector<8x512xf32>
    %142 = arith.mulf %137, %141 : vector<8x512xf32>
    %c152 = arith.constant 152 : index
    %c0_128 = arith.constant 0 : index
    %143 = vector.load %arg9[%c152, %c0_128] : memref<216x512xf32, #tpu.memory_space<vmem>>, vector<8x512xf32>
    tpu.vector_store %arg9[%c152, %c0_128], %142 {strides = array<i32>} : memref<216x512xf32, #tpu.memory_space<vmem>>, vector<8x512xf32>,
    %c0_129 = arith.constant 0 : index
    %c185 = arith.constant 185 : index
    %144 = vector.load %arg8[%c0_129, %c185] : memref<8x768xf32, #tpu.memory_space<vmem>>, vector<8x512xf32>
    %c1_130 = arith.constant 1 : index
    %c0_131 = arith.constant 0 : index
    %145 = vector.load %arg2[%c1_130, %c0_131] : memref<8x512xf32, #tpu.memory_space<vmem>>, vector<1x512xf32>
    %c2_132 = arith.constant 2 : index
    %c0_133 = arith.constant 0 : index
    %146 = vector.load %arg2[%c2_132, %c0_133] : memref<8x512xf32, #tpu.memory_space<vmem>>, vector<1x512xf32>
    %147 = arith.mulf %145, %146 : vector<1x512xf32>
    %c5_134 = arith.constant 5 : index
    %c0_135 = arith.constant 0 : index
    %148 = vector.load %arg2[%c5_134, %c0_135] : memref<8x512xf32, #tpu.memory_space<vmem>>, vector<1x512xf32>
    %149 = arith.mulf %147, %148 : vector<1x512xf32>
    %150 = vector.broadcast %149 : vector<1x512xf32> to vector<8x512xf32>
    %151 = arith.mulf %144, %150 : vector<8x512xf32>
    %c160 = arith.constant 160 : index
    %c0_136 = arith.constant 0 : index
    %152 = vector.load %arg9[%c160, %c0_136] : memref<216x512xf32, #tpu.memory_space<vmem>>, vector<8x512xf32>
    tpu.vector_store %arg9[%c160, %c0_136], %151 {strides = array<i32>} : memref<216x512xf32, #tpu.memory_space<vmem>>, vector<8x512xf32>,
    %c0_137 = arith.constant 0 : index
    %c191 = arith.constant 191 : index
    %153 = vector.load %arg8[%c0_137, %c191] : memref<8x768xf32, #tpu.memory_space<vmem>>, vector<8x512xf32>
    %c1_138 = arith.constant 1 : index
    %c0_139 = arith.constant 0 : index
    %154 = vector.load %arg2[%c1_138, %c0_139] : memref<8x512xf32, #tpu.memory_space<vmem>>, vector<1x512xf32>
    %c4_140 = arith.constant 4 : index
    %c0_141 = arith.constant 0 : index
    %155 = vector.load %arg2[%c4_140, %c0_141] : memref<8x512xf32, #tpu.memory_space<vmem>>, vector<1x512xf32>
    %156 = arith.mulf %154, %155 : vector<1x512xf32>
    %157 = vector.broadcast %156 : vector<1x512xf32> to vector<8x512xf32>
    %158 = arith.mulf %153, %157 : vector<8x512xf32>
    %c168 = arith.constant 168 : index
    %c0_142 = arith.constant 0 : index
    %159 = vector.load %arg9[%c168, %c0_142] : memref<216x512xf32, #tpu.memory_space<vmem>>, vector<8x512xf32>
    tpu.vector_store %arg9[%c168, %c0_142], %158 {strides = array<i32>} : memref<216x512xf32, #tpu.memory_space<vmem>>, vector<8x512xf32>,
    %c0_143 = arith.constant 0 : index
    %c192 = arith.constant 192 : index
    %160 = vector.load %arg8[%c0_143, %c192] : memref<8x768xf32, #tpu.memory_space<vmem>>, vector<8x512xf32>
    %c1_144 = arith.constant 1 : index
    %c0_145 = arith.constant 0 : index
    %161 = vector.load %arg2[%c1_144, %c0_145] : memref<8x512xf32, #tpu.memory_space<vmem>>, vector<1x512xf32>
    %162 = vector.broadcast %161 : vector<1x512xf32> to vector<8x512xf32>
    %163 = arith.mulf %160, %162 : vector<8x512xf32>
    %c176 = arith.constant 176 : index
    %c0_146 = arith.constant 0 : index
    %164 = vector.load %arg9[%c176, %c0_146] : memref<216x512xf32, #tpu.memory_space<vmem>>, vector<8x512xf32>
    tpu.vector_store %arg9[%c176, %c0_146], %163 {strides = array<i32>} : memref<216x512xf32, #tpu.memory_space<vmem>>, vector<8x512xf32>,
    %c0_147 = arith.constant 0 : index
    %c193 = arith.constant 193 : index
    %165 = vector.load %arg8[%c0_147, %c193] : memref<8x768xf32, #tpu.memory_space<vmem>>, vector<8x512xf32>
    %c1_148 = arith.constant 1 : index
    %c0_149 = arith.constant 0 : index
    %166 = vector.load %arg2[%c1_148, %c0_149] : memref<8x512xf32, #tpu.memory_space<vmem>>, vector<1x512xf32>
    %c5_150 = arith.constant 5 : index
    %c0_151 = arith.constant 0 : index
    %167 = vector.load %arg2[%c5_150, %c0_151] : memref<8x512xf32, #tpu.memory_space<vmem>>, vector<1x512xf32>
    %168 = arith.mulf %166, %167 : vector<1x512xf32>
    %169 = vector.broadcast %168 : vector<1x512xf32> to vector<8x512xf32>
    %170 = arith.mulf %165, %169 : vector<8x512xf32>
    %c184_152 = arith.constant 184 : index
    %c0_153 = arith.constant 0 : index
    %171 = vector.load %arg9[%c184_152, %c0_153] : memref<216x512xf32, #tpu.memory_space<vmem>>, vector<8x512xf32>
    tpu.vector_store %arg9[%c184_152, %c0_153], %170 {strides = array<i32>} : memref<216x512xf32, #tpu.memory_space<vmem>>, vector<8x512xf32>,
    %c0_154 = arith.constant 0 : index
    %c199 = arith.constant 199 : index
    %172 = vector.load %arg8[%c0_154, %c199] : memref<8x768xf32, #tpu.memory_space<vmem>>, vector<8x512xf32>
    %c1_155 = arith.constant 1 : index
    %c0_156 = arith.constant 0 : index
    %173 = vector.load %arg2[%c1_155, %c0_156] : memref<8x512xf32, #tpu.memory_space<vmem>>, vector<1x512xf32>
    %c3_157 = arith.constant 3 : index
    %c0_158 = arith.constant 0 : index
    %174 = vector.load %arg2[%c3_157, %c0_158] : memref<8x512xf32, #tpu.memory_space<vmem>>, vector<1x512xf32>
    %175 = arith.mulf %173, %174 : vector<1x512xf32>
    %c4_159 = arith.constant 4 : index
    %c0_160 = arith.constant 0 : index
    %176 = vector.load %arg2[%c4_159, %c0_160] : memref<8x512xf32, #tpu.memory_space<vmem>>, vector<1x512xf32>
    %177 = arith.mulf %175, %176 : vector<1x512xf32>
    %178 = vector.broadcast %177 : vector<1x512xf32> to vector<8x512xf32>
    %179 = arith.mulf %172, %178 : vector<8x512xf32>
    %c192_161 = arith.constant 192 : index
    %c0_162 = arith.constant 0 : index
    %180 = vector.load %arg9[%c192_161, %c0_162] : memref<216x512xf32, #tpu.memory_space<vmem>>, vector<8x512xf32>
    tpu.vector_store %arg9[%c192_161, %c0_162], %179 {strides = array<i32>} : memref<216x512xf32, #tpu.memory_space<vmem>>, vector<8x512xf32>,
    %c0_163 = arith.constant 0 : index
    %c200 = arith.constant 200 : index
    %181 = vector.load %arg8[%c0_163, %c200] : memref<8x768xf32, #tpu.memory_space<vmem>>, vector<8x512xf32>
    %c1_164 = arith.constant 1 : index
    %c0_165 = arith.constant 0 : index
    %182 = vector.load %arg2[%c1_164, %c0_165] : memref<8x512xf32, #tpu.memory_space<vmem>>, vector<1x512xf32>
    %c3_166 = arith.constant 3 : index
    %c0_167 = arith.constant 0 : index
    %183 = vector.load %arg2[%c3_166, %c0_167] : memref<8x512xf32, #tpu.memory_space<vmem>>, vector<1x512xf32>
    %184 = arith.mulf %182, %183 : vector<1x512xf32>
    %185 = vector.broadcast %184 : vector<1x512xf32> to vector<8x512xf32>
    %186 = arith.mulf %181, %185 : vector<8x512xf32>
    %c200_168 = arith.constant 200 : index
    %c0_169 = arith.constant 0 : index
    %187 = vector.load %arg9[%c200_168, %c0_169] : memref<216x512xf32, #tpu.memory_space<vmem>>, vector<8x512xf32>
    tpu.vector_store %arg9[%c200_168, %c0_169], %186 {strides = array<i32>} : memref<216x512xf32, #tpu.memory_space<vmem>>, vector<8x512xf32>,
    %c0_170 = arith.constant 0 : index
    %c201 = arith.constant 201 : index
    %188 = vector.load %arg8[%c0_170, %c201] : memref<8x768xf32, #tpu.memory_space<vmem>>, vector<8x512xf32>
    %c1_171 = arith.constant 1 : index
    %c0_172 = arith.constant 0 : index
    %189 = vector.load %arg2[%c1_171, %c0_172] : memref<8x512xf32, #tpu.memory_space<vmem>>, vector<1x512xf32>
    %c3_173 = arith.constant 3 : index
    %c0_174 = arith.constant 0 : index
    %190 = vector.load %arg2[%c3_173, %c0_174] : memref<8x512xf32, #tpu.memory_space<vmem>>, vector<1x512xf32>
    %191 = arith.mulf %189, %190 : vector<1x512xf32>
    %c5_175 = arith.constant 5 : index
    %c0_176 = arith.constant 0 : index
    %192 = vector.load %arg2[%c5_175, %c0_176] : memref<8x512xf32, #tpu.memory_space<vmem>>, vector<1x512xf32>
    %193 = arith.mulf %191, %192 : vector<1x512xf32>
    %194 = vector.broadcast %193 : vector<1x512xf32> to vector<8x512xf32>
    %195 = arith.mulf %188, %194 : vector<8x512xf32>
    %c208 = arith.constant 208 : index
    %c0_177 = arith.constant 0 : index
    %196 = vector.load %arg9[%c208, %c0_177] : memref<216x512xf32, #tpu.memory_space<vmem>>, vector<8x512xf32>
    tpu.vector_store %arg9[%c208, %c0_177], %195 {strides = array<i32>} : memref<216x512xf32, #tpu.memory_space<vmem>>, vector<8x512xf32>,
    %c0_178 = arith.constant 0 : index
    %c0_179 = arith.constant 0 : index
    %197 = vector.load %arg3[%c0_178, %c0_179] : memref<8x216xf32, #tpu.memory_space<vmem>>, vector<8x216xf32>
    %c0_180 = arith.constant 0 : index
    %c0_181 = arith.constant 0 : index
    %198 = vector.load %arg9[%c0_180, %c0_181] : memref<216x512xf32, #tpu.memory_space<vmem>>, vector<216x512xf32>
    %cst_182 = arith.constant dense<0.000000e+00> : vector<8x512xf32>
    %199 = tpu.matmul %197, %198, %cst_182 {dimension_numbers = #tpu.dot_dimension_numbers<[1], [0], [0], [1], [0, 0, 1, 1], [], []>} : vector<8x216xf32>, vector<216x512xf32>, vector<8x512xf32> -> vector<8x512xf32>
    %c0_183 = arith.constant 0 : index
    %c0_184 = arith.constant 0 : index
    %200 = vector.load %arg4[%c0_183, %c0_184] : memref<8x1xf32, #tpu.memory_space<vmem>>, vector<8x1xf32>
    %201 = vector.broadcast %200 : vector<8x1xf32> to vector<8x512xf32>
    %202 = arith.addf %199, %201 : vector<8x512xf32>
    %cst_185 = arith.constant dense<0.000000e+00> : vector<8xf32>
    %203 = vector.multi_reduction <add>, %202, %cst_185 [1] : vector<8x512xf32> to vector<8xf32>
    %204 = vector.shape_cast %203 : vector<8xf32> to vector<8x1xf32>
    %cst_186 = arith.constant 0.001953125 : f32
    %205 = vector.broadcast %cst_186 : f32 to vector<8x1xf32>
    %206 = arith.mulf %204, %205 : vector<8x1xf32>
    %207 = vector.broadcast %206 : vector<8x1xf32> to vector<8x512xf32>
    %208 = arith.subf %202, %207 : vector<8x512xf32>
    %209 = arith.mulf %208, %208 : vector<8x512xf32>
    %cst_187 = arith.constant dense<0.000000e+00> : vector<8xf32>
    %210 = vector.multi_reduction <add>, %209, %cst_187 [1] : vector<8x512xf32> to vector<8xf32>
    %211 = vector.shape_cast %210 : vector<8xf32> to vector<8x1xf32>
    %cst_188 = arith.constant 0.001953125 : f32
    %212 = vector.broadcast %cst_188 : f32 to vector<8x1xf32>
    %213 = arith.mulf %211, %212 : vector<8x1xf32>
    %cst_189 = arith.constant 9.99999974E-6 : f32
    %214 = vector.broadcast %cst_189 : f32 to vector<8x1xf32>
    %215 = arith.addf %213, %214 : vector<8x1xf32>
    %216 = math.rsqrt %215 : vector<8x1xf32>
    %217 = vector.broadcast %216 : vector<8x1xf32> to vector<8x512xf32>
    %218 = arith.mulf %208, %217 : vector<8x512xf32>
    %cst_190 = arith.constant 0.000000e+00 : f32
    %219 = vector.broadcast %cst_190 : f32 to vector<8x512xf32>
    %220 = arith.maximumf %218, %219 : vector<8x512xf32>
    %c0_191 = arith.constant 0 : index
    %c0_192 = arith.constant 0 : index
    %221 = vector.load %arg5[%c0_191, %c0_192] : memref<8x8xf32, #tpu.memory_space<vmem>>, vector<8x8xf32>
    %cst_193 = arith.constant dense<0.000000e+00> : vector<8x512xf32>
    %222 = tpu.matmul %221, %220, %cst_193 {dimension_numbers = #tpu.dot_dimension_numbers<[1], [0], [0], [1], [0, 0, 1, 1], [], []>} : vector<8x8xf32>, vector<8x512xf32>, vector<8x512xf32> -> vector<8x512xf32>
    %c0_194 = arith.constant 0 : index
    %c0_195 = arith.constant 0 : index
    %223 = vector.load %arg6[%c0_194, %c0_195] : memref<8x1xf32, #tpu.memory_space<vmem>>, vector<8x1xf32>
    %224 = vector.broadcast %223 : vector<8x1xf32> to vector<8x512xf32>
    %225 = arith.addf %222, %224 : vector<8x512xf32>
    %cst_196 = arith.constant dense<0.000000e+00> : vector<8xf32>
    %226 = vector.multi_reduction <add>, %225, %cst_196 [1] : vector<8x512xf32> to vector<8xf32>
    %227 = vector.shape_cast %226 : vector<8xf32> to vector<8x1xf32>
    %cst_197 = arith.constant 0.001953125 : f32
    %228 = vector.broadcast %cst_197 : f32 to vector<8x1xf32>
    %229 = arith.mulf %227, %228 : vector<8x1xf32>
    %230 = vector.broadcast %229 : vector<8x1xf32> to vector<8x512xf32>
    %231 = arith.subf %225, %230 : vector<8x512xf32>
    %232 = arith.mulf %231, %231 : vector<8x512xf32>
    %cst_198 = arith.constant dense<0.000000e+00> : vector<8xf32>
    %233 = vector.multi_reduction <add>, %232, %cst_198 [1] : vector<8x512xf32> to vector<8xf32>
    %234 = vector.shape_cast %233 : vector<8xf32> to vector<8x1xf32>
    %cst_199 = arith.constant 0.001953125 : f32
    %235 = vector.broadcast %cst_199 : f32 to vector<8x1xf32>
    %236 = arith.mulf %234, %235 : vector<8x1xf32>
    %cst_200 = arith.constant 9.99999974E-6 : f32
    %237 = vector.broadcast %cst_200 : f32 to vector<8x1xf32>
    %238 = arith.addf %236, %237 : vector<8x1xf32>
    %239 = math.rsqrt %238 : vector<8x1xf32>
    %240 = vector.broadcast %239 : vector<8x1xf32> to vector<8x512xf32>
    %241 = arith.mulf %231, %240 : vector<8x512xf32>
    %cst_201 = arith.constant 0.000000e+00 : f32
    %242 = vector.broadcast %cst_201 : f32 to vector<8x512xf32>
    %243 = arith.maximumf %241, %242 : vector<8x512xf32>
    %c0_202 = arith.constant 0 : index
    %c0_203 = arith.constant 0 : index
    %c0_204 = arith.constant 0 : index
    %244 = vector.load %arg1[%c0_202, %c0_203, %c0_204] : memref<1x4x512xf32, #tpu.memory_space<vmem>>, vector<1x4x512xf32>
    %245 = vector.shape_cast %244 : vector<1x4x512xf32> to vector<4x512xf32>
    %246 = vector.extract_strided_slice %243 {offsets = [0, 0], sizes = [4, 512], strides = [1, 1]} : vector<8x512xf32> to vector<4x512xf32>
    %247 = vector.extract_strided_slice %220 {offsets = [0, 0], sizes = [4, 512], strides = [1, 1]} : vector<8x512xf32> to vector<4x512xf32>
    %248 = arith.addf %246, %247 : vector<4x512xf32>
    %249 = arith.addf %248, %245 : vector<4x512xf32>
    %cst_205 = arith.constant 0.000000e+00 : f32
    %250 = vector.broadcast %cst_205 : f32 to vector<4x512xf32>
    %251 = arith.maximumf %249, %250 : vector<4x512xf32>
    %c0_206 = arith.constant 0 : index
    %c0_207 = arith.constant 0 : index
    %c0_208 = arith.constant 0 : index
    %252 = vector.load %arg7[%c0_206, %c0_207, %c0_208] : memref<1x4x512xf32, #tpu.memory_space<vmem>>, vector<1x4x512xf32>
    %253 = vector.shape_cast %252 : vector<1x4x512xf32> to vector<4x512xf32>
    %254 = vector.shape_cast %251 : vector<4x512xf32> to vector<1x4x512xf32>
    tpu.vector_store %arg7[%c0_206, %c0_207, %c0_208], %254 {strides = array<i32>} : memref<1x4x512xf32, #tpu.memory_space<vmem>>, vector<1x4x512xf32>,
    return
  }
  func.func @transform_0(%arg0: i32) -> (i32, i32, i32) {
    %c0_i32 = arith.constant 0 : i32
    %c0_i32_0 = arith.constant 0 : i32
    %c0_i32_1 = arith.constant 0 : i32
    return %arg0, %c0_i32, %c0_i32_0 : i32, i32, i32
  }
  func.func @transform_1(%arg0: i32) -> (i32, i32) {
    %c0_i32 = arith.constant 0 : i32
    %c0_i32_0 = arith.constant 0 : i32
    %c0_i32_1 = arith.constant 0 : i32
    return %c0_i32, %c0_i32_0 : i32, i32
  }
  func.func @transform_2(%arg0: i32) -> (i32, i32) {
    %c0_i32 = arith.constant 0 : i32
    %c0_i32_0 = arith.constant 0 : i32
    %c0_i32_1 = arith.constant 0 : i32
    return %c0_i32, %c0_i32_0 : i32, i32
  }
  func.func @transform_3(%arg0: i32) -> (i32, i32) {
    %c0_i32 = arith.constant 0 : i32
    %c0_i32_0 = arith.constant 0 : i32
    %c0_i32_1 = arith.constant 0 : i32
    return %c0_i32, %c0_i32_0 : i32, i32
  }
  func.func @transform_4(%arg0: i32) -> (i32, i32) {
    %c0_i32 = arith.constant 0 : i32
    %c0_i32_0 = arith.constant 0 : i32
    %c0_i32_1 = arith.constant 0 : i32
    return %c0_i32, %c0_i32_0 : i32, i32
  }
  func.func @transform_5(%arg0: i32) -> (i32, i32) {
    %c0_i32 = arith.constant 0 : i32
    %c0_i32_0 = arith.constant 0 : i32
    %c0_i32_1 = arith.constant 0 : i32
    return %c0_i32, %c0_i32_0 : i32, i32
  }
  func.func @transform_6(%arg0: i32) -> (i32, i32, i32) {
    %c0_i32 = arith.constant 0 : i32
    %c0_i32_0 = arith.constant 0 : i32
    %c0_i32_1 = arith.constant 0 : i32
    return %arg0, %c0_i32, %c0_i32_0 : i32, i32, i32
  }
}

</mosaic_0001>

<llo_original>
// kernel: tpu_custom_call.1
$region0: #{tpu_custom_call.1}
  #allocation0 [shape = 'u32[]', space=smem, size = 0x4, offset = 0x4, fixed_abs, tag = 'smem constant byte address 0x4 - core index']
  #allocation1 [shape = 'u32[144,128]{1,0:T(1,128)}', space=vmem, size = 0x12000, scoped, tag = 'internal scratch']
  #allocation2 [shape = 'f32[8,768]{1,0:T(8,128)}', space=vmem, size = 0x6000, scoped, tag = 'scratch operand']
  #allocation3 [shape = 'f32[216,512]{1,0:T(8,128)}', space=vmem, size = 0x6c000, scoped, tag = 'scratch operand']
  %s0 = inlined_call_operand.hbm [shape: f32[2,4,512], index: 0, kind: input, shape index: {}]
  %s1 = inlined_call_operand.hbm [shape: f32[8,512], index: 1, kind: input, shape index: {}]
  %s2 = inlined_call_operand.vmem [shape: f32[8,216], index: 2, kind: input, shape index: {}]
  %s3 = inlined_call_operand.vmem [shape: f32[8,1], index: 3, kind: input, shape index: {}]
  %s4 = inlined_call_operand.vmem [shape: f32[8,8], index: 4, kind: input, shape index: {}]
  %s5 = inlined_call_operand.vmem [shape: f32[8,1], index: 5, kind: input, shape index: {}]
  %s6 = inlined_call_operand.hbm [shape: f32[2,4,512], index: 6, kind: output, shape index: {}]
  %s7 = sld [smem:[#allocation0]]
  $region65: #{tpu_custom_call.1} parent=0
    _
  %s9 = ssub.s32 1, %s7
  %s10 = scalar_select 0, %s9, %s7
  $region1: #{tpu_custom_call.1} parent=0
    #allocation4 [shape = 'u8[16384]{0}', space=vmem, size = 0x4000, scoped, tag = 'input window, operand 0']
    #allocation5 [shape = 's32[2]{0}', space=sflag, size = 0x8, scoped, tag = 'scoped memory for tpu_custom_call.1']
    #allocation6 [shape = 's32[2]{0}', space=sflag, size = 0x8, scoped, tag = 'scoped memory for tpu_custom_call.1']
    #allocation7 [shape = 'u8[16384]{0}', space=vmem, size = 0x4000, scoped, tag = 'input window, operand 1, single buffered']
    #allocation8 [shape = 's32[1]{0}', space=sflag, size = 0x4, scoped, tag = 'scoped memory for tpu_custom_call.1']
    #allocation9 [shape = 'u8[16384]{0}', space=vmem, size = 0x4000, scoped, tag = 'output window, operand 0']
    %11 = vsyncpa [#allocation5], 0
    %s12 = scalar_lea.sflag [#allocation5], 1
    %13 = vsyncpa %s12, 0
    %14 = vsyncpa [#allocation8], 0
    %15 = vsyncpa [#allocation6], 0
    %s16 = scalar_lea.sflag [#allocation6], 1
    %17 = vsyncpa %s16, 0
    loop: start=0, step=1, limit=4
    $region2: #{tpu_custom_call.1} parent=1 // loop_pre_header
      _
    $region3: #{tpu_custom_call.1} parent=1 // loop_header
      %s19 = sphi 0, %s23
      %p20 = scmp.ge.s32.totalorder %s19, 4
      %s29 = sphi 0, %s31
      %s32 = sphi 0, %s29
      %s33 = sphi 0, %s32
      %s49 = sphi 0, %s33
      %s53 = sphi 0, %s53
      %s55 = sphi 0, %s53
      %s56 = sphi 0, %s55
      %s70 = sphi 0, %s56
      %s74 = sphi 0, %s74
      %s76 = sphi 0, %s74
      %s77 = sphi 0, %s76
      %s91 = sphi 0, %s77
      %s95 = sphi 0, %s95
      %s97 = sphi 0, %s95
      %s98 = sphi 0, %s97
      %s112 = sphi 0, %s98
      %s116 = sphi 0, %s116
      %s118 = sphi 0, %s116
      %s119 = sphi 0, %s118
      %s133 = sphi 0, %s119
      %s137 = sphi 0, %s137
      %s139 = sphi 0, %s137
      %s140 = sphi 0, %s139
      %s154 = sphi 0, %s140
      %s160 = sphi 0, %s162
      %s163 = sphi 0, %s160
      %s164 = sphi 0, %s163
      %s180 = sphi 0, %s164
    $region4: #{tpu_custom_call.1} parent=1 // loop_header_branch
      %22 = sbr.rel (%p20) target = $region8
    $region5: #{tpu_custom_call.1} parent=1 // loop_body
      %s24 = ssub.s32 %s19, 1
      %s25 = ssub.s32 %s19, 2
      %s26 = sadd.s32 %s19, 1
      %s27 = ssub.s32 %s19, %s26
      %p28 = scmp.eq.s32.totalorder %s27, 0
      %s30 = sadd.s32 %s29, 1
      %s31 = scalar_select %p28, %s29, %s30
      %p34 = pneg %p28
      %p35 = scmp.eq.s32.totalorder %s19, 1
      %p36 = por %p34, %p35
      %p37 = scmp.ne.s32.totalorder %s29, %s32
      %p38 = scmp.eq.s32.totalorder %s19, 0
      %p39 = por %p37, %p38
      %p40 = scmp.ne.s32.totalorder %s29, %s32
      %p41 = scmp.eq.s32.totalorder %s24, 1
      %p42 = por %p40, %p41
      %p43 = scmp.ne.s32.totalorder %s32, %s33
      %p44 = scmp.eq.s32.totalorder %s24, 0
      %p45 = por %p43, %p44
      %p46 = scmp.ne.s32.totalorder %s32, %s33
      %p47 = scmp.eq.s32.totalorder %s25, 1
      %p48 = por %p46, %p47
      %p50 = scmp.ne.s32.totalorder %s33, %s49
      %p51 = scmp.eq.s32.totalorder %s25, 0
      %p52 = por %p50, %p51
      %s54 = sadd.s32 %s53, 1
      %p57 = scmp.eq.s32.totalorder %s19, 1
      %p58 = scmp.ne.s32.totalorder %s53, %s55
      %p59 = scmp.eq.s32.totalorder %s19, 0
      %p60 = por %p58, %p59
      %p61 = scmp.ne.s32.totalorder %s53, %s55
      %p62 = scmp.eq.s32.totalorder %s24, 1
      %p63 = por %p61, %p62
      %p64 = scmp.ne.s32.totalorder %s55, %s56
      %p65 = scmp.eq.s32.totalorder %s24, 0
      %p66 = por %p64, %p65
      %p67 = scmp.ne.s32.totalorder %s55, %s56
      %p68 = scmp.eq.s32.totalorder %s25, 1
      %p69 = por %p67, %p68
      %p71 = scmp.ne.s32.totalorder %s56, %s70
      %p72 = scmp.eq.s32.totalorder %s25, 0
      %p73 = por %p71, %p72
      %s75 = sadd.s32 %s74, 1
      %p78 = scmp.eq.s32.totalorder %s19, 1
      %p79 = scmp.ne.s32.totalorder %s74, %s76
      %p80 = scmp.eq.s32.totalorder %s19, 0
      %p81 = por %p79, %p80
      %p82 = scmp.ne.s32.totalorder %s74, %s76
      %p83 = scmp.eq.s32.totalorder %s24, 1
      %p84 = por %p82, %p83
      %p85 = scmp.ne.s32.totalorder %s76, %s77
      %p86 = scmp.eq.s32.totalorder %s24, 0
      %p87 = por %p85, %p86
      %p88 = scmp.ne.s32.totalorder %s76, %s77
      %p89 = scmp.eq.s32.totalorder %s25, 1
      %p90 = por %p88, %p89
      %p92 = scmp.ne.s32.totalorder %s77, %s91
      %p93 = scmp.eq.s32.totalorder %s25, 0
      %p94 = por %p92, %p93
      %s96 = sadd.s32 %s95, 1
      %p99 = scmp.eq.s32.totalorder %s19, 1
      %p100 = scmp.ne.s32.totalorder %s95, %s97
      %p101 = scmp.eq.s32.totalorder %s19, 0
      %p102 = por %p100, %p101
      %p103 = scmp.ne.s32.totalorder %s95, %s97
      %p104 = scmp.eq.s32.totalorder %s24, 1
      %p105 = por %p103, %p104
      %p106 = scmp.ne.s32.totalorder %s97, %s98
      %p107 = scmp.eq.s32.totalorder %s24, 0
      %p108 = por %p106, %p107
      %p109 = scmp.ne.s32.totalorder %s97, %s98
      %p110 = scmp.eq.s32.totalorder %s25, 1
      %p111 = por %p109, %p110
      %p113 = scmp.ne.s32.totalorder %s98, %s112
      %p114 = scmp.eq.s32.totalorder %s25, 0
      %p115 = por %p113, %p114
      %s117 = sadd.s32 %s116, 1
      %p120 = scmp.eq.s32.totalorder %s19, 1
      %p121 = scmp.ne.s32.totalorder %s116, %s118
      %p122 = scmp.eq.s32.totalorder %s19, 0
      %p123 = por %p121, %p122
      %p124 = scmp.ne.s32.totalorder %s116, %s118
      %p125 = scmp.eq.s32.totalorder %s24, 1
      %p126 = por %p124, %p125
      %p127 = scmp.ne.s32.totalorder %s118, %s119
      %p128 = scmp.eq.s32.totalorder %s24, 0
      %p129 = por %p127, %p128
      %p130 = scmp.ne.s32.totalorder %s118, %s119
      %p131 = scmp.eq.s32.totalorder %s25, 1
      %p132 = por %p130, %p131
      %p134 = scmp.ne.s32.totalorder %s119, %s133
      %p135 = scmp.eq.s32.totalorder %s25, 0
      %p136 = por %p134, %p135
      %s138 = sadd.s32 %s137, 1
      %p141 = scmp.eq.s32.totalorder %s19, 1
      %p142 = scmp.ne.s32.totalorder %s137, %s139
      %p143 = scmp.eq.s32.totalorder %s19, 0
      %p144 = por %p142, %p143
      %p145 = scmp.ne.s32.totalorder %s137, %s139
      %p146 = scmp.eq.s32.totalorder %s24, 1
      %p147 = por %p145, %p146
      %p148 = scmp.ne.s32.totalorder %s139, %s140
      %p149 = scmp.eq.s32.totalorder %s24, 0
      %p150 = por %p148, %p149
      %p151 = scmp.ne.s32.totalorder %s139, %s140
      %p152 = scmp.eq.s32.totalorder %s25, 1
      %p153 = por %p151, %p152
      %p155 = scmp.ne.s32.totalorder %s140, %s154
      %p156 = scmp.eq.s32.totalorder %s25, 0
      %p157 = por %p155, %p156
      %s158 = ssub.s32 %s19, %s26
      %p159 = scmp.eq.s32.totalorder %s158, 0
      %s161 = sadd.s32 %s160, 1
      %s162 = scalar_select %p159, %s160, %s161
      %p165 = pneg %p159
      %p166 = scmp.eq.s32.totalorder %s19, 1
      %p167 = por %p165, %p166
      %p168 = scmp.ne.s32.totalorder %s160, %s163
      %p169 = scmp.eq.s32.totalorder %s19, 0
      %p170 = por %p168, %p169
      %p171 = scmp.ne.s32.totalorder %s160, %s163
      %p172 = scmp.eq.s32.totalorder %s24, 1
      %p173 = por %p171, %p172
      %p174 = scmp.ne.s32.totalorder %s163, %s164
      %p175 = scmp.eq.s32.totalorder %s24, 0
      %p176 = por %p174, %p175
      %p177 = scmp.ne.s32.totalorder %s163, %s164
      %p178 = scmp.eq.s32.totalorder %s25, 1
      %p179 = por %p177, %p178
      %p181 = scmp.ne.s32.totalorder %s164, %s180
      %p182 = scmp.eq.s32.totalorder %s25, 0
      %p183 = por %p181, %p182
      %p184 = scmp.le.s32.totalorder 1, %s19
      %p185 = scmp.lt.s32.totalorder %s19, 3
      %p186 = pnand %p184, %p185
      %p187 = pneg %p186
      // Predicated region
      $region9: #{tpu_custom_call.1} parent=5 // pred_check
        _
      $region10: #{tpu_custom_call.1} parent=5 // pred_check_branch
        %189 = sbr.rel (%p186) target = $region12
      $region11: #{tpu_custom_call.1} parent=5 // pred_region
        %s190 = ssub.s32 %s19, 1
        // Predicated region
        $region13: #{tpu_custom_call.1} parent=11 // pred_check
          %p191 = pneg %p66
        $region14: #{tpu_custom_call.1} parent=11 // pred_check_branch
          %193 = sbr.rel (%p191) target = $region16
        $region15: #{tpu_custom_call.1} parent=11 // pred_region
          %s195 = ssub.s32 512, 512
          %196 = vsyncadd [#allocation8], %s195
          %s198 = sshll.u32 [#allocation7], 4
          %s199 = int_to_ptr.vmem [resolvable:$true] %s198
          %201 = dma.hbm_to_vmem [thread:$0]  %s1, 512, %s199, [#allocation8]
        $region16: #{tpu_custom_call.1} parent=11 // pred_fallthru
          _
        // Predicated region
        $region17: #{tpu_custom_call.1} parent=11 // pred_check
          %p202 = pneg %p87
        $region18: #{tpu_custom_call.1} parent=11 // pred_check_branch
          %204 = sbr.rel (%p202) target = $region20
        $region19: #{tpu_custom_call.1} parent=11 // pred_region
          _
        $region20: #{tpu_custom_call.1} parent=11 // pred_fallthru
          _
        // Predicated region
        $region21: #{tpu_custom_call.1} parent=11 // pred_check
          %p205 = pneg %p108
        $region22: #{tpu_custom_call.1} parent=11 // pred_check_branch
          %207 = sbr.rel (%p205) target = $region24
        $region23: #{tpu_custom_call.1} parent=11 // pred_region
          _
        $region24: #{tpu_custom_call.1} parent=11 // pred_fallthru
          _
        // Predicated region
        $region25: #{tpu_custom_call.1} parent=11 // pred_check
          %p208 = pneg %p129
        $region26: #{tpu_custom_call.1} parent=11 // pred_check_branch
          %210 = sbr.rel (%p208) target = $region28
        $region27: #{tpu_custom_call.1} parent=11 // pred_region
          _
        $region28: #{tpu_custom_call.1} parent=11 // pred_fallthru
          _
        // Predicated region
        $region29: #{tpu_custom_call.1} parent=11 // pred_check
          %p211 = pneg %p150
        $region30: #{tpu_custom_call.1} parent=11 // pred_check_branch
          %213 = sbr.rel (%p211) target = $region32
        $region31: #{tpu_custom_call.1} parent=11 // pred_region
          _
        $region32: #{tpu_custom_call.1} parent=11 // pred_fallthru
          _
      $region12: #{tpu_custom_call.1} parent=5 // pred_fallthru
        _
      %p214 = scmp.lt.s32.totalorder %s19, 2
      // Predicated region
      $region33: #{tpu_custom_call.1} parent=5 // pred_check
        %p215 = pneg %p214
      $region34: #{tpu_custom_call.1} parent=5 // pred_check_branch
        %217 = sbr.rel (%p215) target = $region36
      $region35: #{tpu_custom_call.1} parent=5 // pred_region
        // Predicated region
        $region37: #{tpu_custom_call.1} parent=35 // pred_check
          %p218 = pneg %p39
        $region38: #{tpu_custom_call.1} parent=35 // pred_check_branch
          %220 = sbr.rel (%p218) target = $region40
        $region39: #{tpu_custom_call.1} parent=35 // pred_region
          %s221 = sand.u32 %s29, 1
          %s222 = scalar_lea.sflag [#allocation5], %s221
          %s223 = sand.u32 %s29, 1
          %s224 = smul.addr %s223, 16
          %s225 = scalar_lea.vmem [#allocation4], %s224
          %s227 = ssub.s32 256, 256
          %228 = vsyncadd %s222, %s227
          %s229 = smul.addr %s19, 4
          %s230 = smul.addr %s229, 64
          %s231 = scalar_lea.hbm %s0, %s230
          %s233 = sshll.u32 %s225, 4
          %s234 = int_to_ptr.vmem [resolvable:$true] %s233
          %236 = dma.hbm_to_vmem [thread:$0]  %s231, 256, %s234, %s222
        $region40: #{tpu_custom_call.1} parent=35 // pred_fallthru
          _
      $region36: #{tpu_custom_call.1} parent=5 // pred_fallthru
        _
      %p237 = scmp.le.s32.totalorder 1, %s19
      %p238 = scmp.lt.s32.totalorder %s19, 3
      %p239 = pnand %p237, %p238
      %p240 = pneg %p239
      // Predicated region
      $region41: #{tpu_custom_call.1} parent=5 // pred_check
        _
      $region42: #{tpu_custom_call.1} parent=5 // pred_check_branch
        %242 = sbr.rel (%p239) target = $region44
      $region43: #{tpu_custom_call.1} parent=5 // pred_region
        %s243 = ssub.s32 %s19, 1
        %s244 = sand.u32 %s32, 1
        %s245 = scalar_lea.sflag [#allocation5], %s244
        %s246 = sand.u32 %s32, 1
        %s247 = smul.addr %s246, 16
        %s248 = scalar_lea.vmem [#allocation4], %s247
        // Predicated region
        $region45: #{tpu_custom_call.1} parent=43 // pred_check
          %p249 = pneg %p45
        $region46: #{tpu_custom_call.1} parent=43 // pred_check_branch
          %251 = sbr.rel (%p249) target = $region48
        $region47: #{tpu_custom_call.1} parent=43 // pred_region
          %252 = dma.done %s245, 256
        $region48: #{tpu_custom_call.1} parent=43 // pred_fallthru
          _
        // Predicated region
        $region49: #{tpu_custom_call.1} parent=43 // pred_check
          %p253 = pneg %p66
        $region50: #{tpu_custom_call.1} parent=43 // pred_check_branch
          %255 = sbr.rel (%p253) target = $region52
        $region51: #{tpu_custom_call.1} parent=43 // pred_region
          %256 = dma.done [#allocation8], 512
        $region52: #{tpu_custom_call.1} parent=43 // pred_fallthru
          _
        %s257 = sand.u32 %s32, 1
        %s258 = scalar_lea.sflag [#allocation5], %s257
        %s259 = sand.u32 %s32, 1
        %s260 = smul.addr %s259, 16
        %s261 = scalar_lea.vmem [#allocation4], %s260
        %p262 = pneg %p45
        %p263 = pneg %p42
        %p264 = pneg %p66
        %p265 = pneg %p63
        %p266 = pneg %p87
        %p267 = pneg %p84
        %p268 = pneg %p108
        %p269 = pneg %p105
        %p270 = pneg %p129
        %p271 = pneg %p126
        %p272 = pneg %p150
        %p273 = pneg %p147
        %p274 = pneg %p176
        %p275 = pneg %p173
        %s276 = sand.u32 %s163, 1
        %s277 = scalar_lea.sflag [#allocation6], %s276
        %s278 = sand.u32 %s163, 1
        %s279 = smul.addr %s278, 16
        %s280 = scalar_lea.vmem [#allocation9], %s279
        %281 = vst [vmem:[#allocation2] sm:$0xff] 0.0
        %282 = vst [vmem:[#allocation2 + $0x28] sm:$0xff] 0.0
        %283 = vst [vmem:[#allocation2 + $0x8] sm:$0xf0] 0.0
        %284 = vst [vmem:[#allocation2 + $0x10] sm:$0xf0] 0.0
        %285 = vst [vmem:[#allocation2 + $0x18] sm:$0xf0] 0.0
        %286 = vst [vmem:[#allocation2 + $0x20] sm:$0xf0] 0.0
        %v287 = vld [vmem:[%s248] sm:$0xff]
        %v288 = vld [vmem:[%s248 + $0x8] sm:$0xff]
        %v291 = vcombine.high %v287, %v287
        %v292 = vcombine.high %v288, %v288
        %295 = vst [vmem:[#allocation2 + $0x8] sm:$0xf] %v287
        %296 = vst [vmem:[#allocation2 + $0x10] sm:$0xf] %v291
        %297 = vst [vmem:[#allocation2 + $0x18] sm:$0xf] %v288
        %298 = vst [vmem:[#allocation2 + $0x20] sm:$0xf] %v292
        %v299 = vld [vmem:[#allocation2] sm:$0xff]
        %v300 = vld [vmem:[#allocation2 + $0x8] sm:$0xff]
        %v301 = vld [vmem:[#allocation2 + $0x10] sm:$0xff]
        %v302 = vld [vmem:[#allocation2 + $0x18] sm:$0xff]
        %v303 = vld [vmem:[#allocation2 + $0x20] sm:$0xff]
        %v304 = vld [vmem:[#allocation7] ss:$8 sm:$0xf]
        %s305 = scalar_lea.vmem [#allocation7], 2
        %v306 = vld [vmem:[%s305] ss:$8 sm:$0xf]
        %v307 = vmul.f32 %v304, %v306
        %s308 = scalar_lea.vmem [#allocation7], 4
        %v309 = vld [vmem:[%s308] ss:$8 sm:$0xf]
        %v310 = vmul.f32 %v307, %v309
        %v312 = vlaneseq
        %v313 = vshrl.u32 %v312, 7
        %v314 = vsub.s32 0, %v313
        %v315 = vrot.slane %v310, %v314
        %v316 = vlaneseq
        %v317 = vshrl.u32 %v316, 7
        %v318 = vsub.s32 1, %v317
        %v319 = vrot.slane %v310, %v318
        %v320 = vlaneseq
        %v321 = vshrl.u32 %v320, 7
        %v322 = vsub.s32 2, %v321
        %v323 = vrot.slane %v310, %v322
        %v324 = vlaneseq
        %v325 = vshrl.u32 %v324, 7
        %v326 = vsub.s32 3, %v325
        %v327 = vrot.slane %v310, %v326
        %328 = vrot.lane.b32.xlu0 %v315, 55
        %v329 = vpop.permute.xlu0 %328
        %330 = vrot.lane.b32.xlu0 %v319, 55
        %v331 = vpop.permute.xlu0 %330
        %332 = vrot.lane.b32.xlu0 %v323, 55
        %v333 = vpop.permute.xlu0 %332
        %334 = vrot.lane.b32.xlu0 %v327, 55
        %v335 = vpop.permute.xlu0 %334
        %vm336 = vcmask 449536
        %v337 = vsel %vm336, %v329, %v331
        %v338 = vsel %vm336, %v331, %v333
        %v339 = vsel %vm336, %v333, %v335
        %v345 = vmul.f32 %v299, %v329
        %v346 = vmul.f32 %v300, %v337
        %v347 = vmul.f32 %v301, %v338
        %v348 = vmul.f32 %v302, %v339
        %v349 = vmul.f32 %v303, %v335
        %355 = vrot.lane.b32.xlu0 %v345, 73
        %v356 = vpop.permute.xlu0 %355
        %357 = vrot.lane.b32.xlu0 %v346, 73
        %v358 = vpop.permute.xlu0 %357
        %359 = vrot.lane.b32.xlu0 %v347, 73
        %v360 = vpop.permute.xlu0 %359
        %361 = vrot.lane.b32.xlu0 %v348, 73
        %v362 = vpop.permute.xlu0 %361
        %363 = vrot.lane.b32.xlu0 %v349, 73
        %v364 = vpop.permute.xlu0 %363
        %vm365 = vcmask 596992
        %v366 = vsel %vm365, %v356, %v358
        %v367 = vsel %vm365, %v358, %v360
        %v368 = vsel %vm365, %v360, %v362
        %v369 = vsel %vm365, %v362, %v364
        %374 = vst [vmem:[#allocation3] sm:$0xff] %v366
        %375 = vst [vmem:[#allocation3 + $0x8] sm:$0xff] %v367
        %376 = vst [vmem:[#allocation3 + $0x10] sm:$0xff] %v368
        %377 = vst [vmem:[#allocation3 + $0x18] sm:$0xff] %v369
        %v378 = vld [vmem:[#allocation2] sm:$0xff]
        %v379 = vld [vmem:[#allocation2 + $0x8] sm:$0xff]
        %v380 = vld [vmem:[#allocation2 + $0x10] sm:$0xff]
        %v381 = vld [vmem:[#allocation2 + $0x18] sm:$0xff]
        %v382 = vld [vmem:[#allocation2 + $0x20] sm:$0xff]
        %v383 = vld [vmem:[#allocation7] ss:$8 sm:$0xf]
        %v384 = vld [vmem:[%s305] ss:$8 sm:$0xf]
        %v385 = vmul.f32 %v383, %v384
        %v387 = vlaneseq
        %v388 = vshrl.u32 %v387, 7
        %v389 = vsub.s32 0, %v388
        %v390 = vrot.slane %v385, %v389
        %v391 = vlaneseq
        %v392 = vshrl.u32 %v391, 7
        %v393 = vsub.s32 1, %v392
        %v394 = vrot.slane %v385, %v393
        %v395 = vlaneseq
        %v396 = vshrl.u32 %v395, 7
        %v397 = vsub.s32 2, %v396
        %v398 = vrot.slane %v385, %v397
        %v399 = vlaneseq
        %v400 = vshrl.u32 %v399, 7
        %v401 = vsub.s32 3, %v400
        %v402 = vrot.slane %v385, %v401
        %403 = vrot.lane.b32.xlu0 %v390, 56
        %v404 = vpop.permute.xlu0 %403
        %405 = vrot.lane.b32.xlu0 %v394, 56
        %v406 = vpop.permute.xlu0 %405
        %407 = vrot.lane.b32.xlu0 %v398, 56
        %v408 = vpop.permute.xlu0 %407
        %409 = vrot.lane.b32.xlu0 %v402, 56
        %v410 = vpop.permute.xlu0 %409
        %vm411 = vcmask 457728
        %v412 = vsel %vm411, %v404, %v406
        %v413 = vsel %vm411, %v406, %v408
        %v414 = vsel %vm411, %v408, %v410
        %v420 = vmul.f32 %v378, %v404
        %v421 = vmul.f32 %v379, %v412
        %v422 = vmul.f32 %v380, %v413
        %v423 = vmul.f32 %v381, %v414
        %v424 = vmul.f32 %v382, %v410
        %430 = vrot.lane.b32.xlu0 %v420, 72
        %v431 = vpop.permute.xlu0 %430
        %432 = vrot.lane.b32.xlu0 %v421, 72
        %v433 = vpop.permute.xlu0 %432
        %434 = vrot.lane.b32.xlu0 %v422, 72
        %v435 = vpop.permute.xlu0 %434
        %436 = vrot.lane.b32.xlu0 %v423, 72
        %v437 = vpop.permute.xlu0 %436
        %438 = vrot.lane.b32.xlu0 %v424, 72
        %v439 = vpop.permute.xlu0 %438
        %vm440 = vcmask 588800
        %v441 = vsel %vm440, %v431, %v433
        %v442 = vsel %vm440, %v433, %v435
        %v443 = vsel %vm440, %v435, %v437
        %v444 = vsel %vm440, %v437, %v439
        %449 = vst [vmem:[#allocation3 + $0x20] sm:$0xff] %v441
        %450 = vst [vmem:[#allocation3 + $0x28] sm:$0xff] %v442
        %451 = vst [vmem:[#allocation3 + $0x30] sm:$0xff] %v443
        %452 = vst [vmem:[#allocation3 + $0x38] sm:$0xff] %v444
        %v453 = vld [vmem:[#allocation2] sm:$0xff]
        %v454 = vld [vmem:[#allocation2 + $0x8] sm:$0xff]
        %v455 = vld [vmem:[#allocation2 + $0x10] sm:$0xff]
        %v456 = vld [vmem:[#allocation2 + $0x18] sm:$0xff]
        %v457 = vld [vmem:[#allocation2 + $0x20] sm:$0xff]
        %v458 = vld [vmem:[#allocation7] ss:$8 sm:$0xf]
        %v459 = vld [vmem:[%s305] ss:$8 sm:$0xf]
        %v460 = vmul.f32 %v458, %v459
        %s461 = scalar_lea.vmem [#allocation7], 5
        %v462 = vld [vmem:[%s461] ss:$8 sm:$0xf]
        %v463 = vmul.f32 %v460, %v462
        %v465 = vlaneseq
        %v466 = vshrl.u32 %v465, 7
        %v467 = vsub.s32 0, %v466
        %v468 = vrot.slane %v463, %v467
        %v469 = vlaneseq
        %v470 = vshrl.u32 %v469, 7
        %v471 = vsub.s32 1, %v470
        %v472 = vrot.slane %v463, %v471
        %v473 = vlaneseq
        %v474 = vshrl.u32 %v473, 7
        %v475 = vsub.s32 2, %v474
        %v476 = vrot.slane %v463, %v475
        %v477 = vlaneseq
        %v478 = vshrl.u32 %v477, 7
        %v479 = vsub.s32 3, %v478
        %v480 = vrot.slane %v463, %v479
        %481 = vrot.lane.b32.xlu0 %v468, 57
        %v482 = vpop.permute.xlu0 %481
        %483 = vrot.lane.b32.xlu0 %v472, 57
        %v484 = vpop.permute.xlu0 %483
        %485 = vrot.lane.b32.xlu0 %v476, 57
        %v486 = vpop.permute.xlu0 %485
        %487 = vrot.lane.b32.xlu0 %v480, 57
        %v488 = vpop.permute.xlu0 %487
        %vm489 = vcmask 465920
        %v490 = vsel %vm489, %v482, %v484
        %v491 = vsel %vm489, %v484, %v486
        %v492 = vsel %vm489, %v486, %v488
        %v498 = vmul.f32 %v453, %v482
        %v499 = vmul.f32 %v454, %v490
        %v500 = vmul.f32 %v455, %v491
        %v501 = vmul.f32 %v456, %v492
        %v502 = vmul.f32 %v457, %v488
        %508 = vrot.lane.b32.xlu0 %v498, 71
        %v509 = vpop.permute.xlu0 %508
        %510 = vrot.lane.b32.xlu0 %v499, 71
        %v511 = vpop.permute.xlu0 %510
        %512 = vrot.lane.b32.xlu0 %v500, 71
        %v513 = vpop.permute.xlu0 %512
        %514 = vrot.lane.b32.xlu0 %v501, 71
        %v515 = vpop.permute.xlu0 %514
        %516 = vrot.lane.b32.xlu0 %v502, 71
        %v517 = vpop.permute.xlu0 %516
        %vm518 = vcmask 580608
        %v519 = vsel %vm518, %v509, %v511
        %v520 = vsel %vm518, %v511, %v513
        %v521 = vsel %vm518, %v513, %v515
        %v522 = vsel %vm518, %v515, %v517
        %527 = vst [vmem:[#allocation3 + $0x40] sm:$0xff] %v519
        %528 = vst [vmem:[#allocation3 + $0x48] sm:$0xff] %v520
        %529 = vst [vmem:[#allocation3 + $0x50] sm:$0xff] %v521
        %530 = vst [vmem:[#allocation3 + $0x58] sm:$0xff] %v522
        %v531 = vld [vmem:[#allocation2] sm:$0xff]
        %v532 = vld [vmem:[#allocation2 + $0x8] sm:$0xff]
        %v533 = vld [vmem:[#allocation2 + $0x10] sm:$0xff]
        %v534 = vld [vmem:[#allocation2 + $0x18] sm:$0xff]
        %v535 = vld [vmem:[#allocation2 + $0x20] sm:$0xff]
        %v536 = vld [vmem:[#allocation7] ss:$8 sm:$0xf]
        %v537 = vld [vmem:[%s308] ss:$8 sm:$0xf]
        %v538 = vmul.f32 %v536, %v537
        %v540 = vlaneseq
        %v541 = vshrl.u32 %v540, 7
        %v542 = vsub.s32 0, %v541
        %v543 = vrot.slane %v538, %v542
        %v544 = vlaneseq
        %v545 = vshrl.u32 %v544, 7
        %v546 = vsub.s32 1, %v545
        %v547 = vrot.slane %v538, %v546
        %v548 = vlaneseq
        %v549 = vshrl.u32 %v548, 7
        %v550 = vsub.s32 2, %v549
        %v551 = vrot.slane %v538, %v550
        %v552 = vlaneseq
        %v553 = vshrl.u32 %v552, 7
        %v554 = vsub.s32 3, %v553
        %v555 = vrot.slane %v538, %v554
        %556 = vrot.lane.b32.xlu0 %v543, 63
        %v557 = vpop.permute.xlu0 %556
        %558 = vrot.lane.b32.xlu0 %v547, 63
        %v559 = vpop.permute.xlu0 %558
        %560 = vrot.lane.b32.xlu0 %v551, 63
        %v561 = vpop.permute.xlu0 %560
        %562 = vrot.lane.b32.xlu0 %v555, 63
        %v563 = vpop.permute.xlu0 %562
        %vm564 = vcmask 515072
        %v565 = vsel %vm564, %v557, %v559
        %v566 = vsel %vm564, %v559, %v561
        %v567 = vsel %vm564, %v561, %v563
        %v573 = vmul.f32 %v531, %v557
        %v574 = vmul.f32 %v532, %v565
        %v575 = vmul.f32 %v533, %v566
        %v576 = vmul.f32 %v534, %v567
        %v577 = vmul.f32 %v535, %v563
        %583 = vrot.lane.b32.xlu0 %v573, 65
        %v584 = vpop.permute.xlu0 %583
        %585 = vrot.lane.b32.xlu0 %v574, 65
        %v586 = vpop.permute.xlu0 %585
        %587 = vrot.lane.b32.xlu0 %v575, 65
        %v588 = vpop.permute.xlu0 %587
        %589 = vrot.lane.b32.xlu0 %v576, 65
        %v590 = vpop.permute.xlu0 %589
        %591 = vrot.lane.b32.xlu0 %v577, 65
        %v592 = vpop.permute.xlu0 %591
        %vm593 = vcmask 531456
        %v594 = vsel %vm593, %v584, %v586
        %v595 = vsel %vm593, %v586, %v588
        %v596 = vsel %vm593, %v588, %v590
        %v597 = vsel %vm593, %v590, %v592
        %602 = vst [vmem:[#allocation3 + $0x60] sm:$0xff] %v594
        %603 = vst [vmem:[#allocation3 + $0x68] sm:$0xff] %v595
        %604 = vst [vmem:[#allocation3 + $0x70] sm:$0xff] %v596
        %605 = vst [vmem:[#allocation3 + $0x78] sm:$0xff] %v597
        %v606 = vld [vmem:[#allocation2] sm:$0xff]
        %v607 = vld [vmem:[#allocation2 + $0x8] sm:$0xff]
        %v608 = vld [vmem:[#allocation2 + $0x10] sm:$0xff]
        %v609 = vld [vmem:[#allocation2 + $0x18] sm:$0xff]
        %v610 = vld [vmem:[#allocation2 + $0x20] sm:$0xff]
        %v611 = vld [vmem:[#allocation7] ss:$8 sm:$0xf]
        %v613 = vlaneseq
        %v614 = vshrl.u32 %v613, 7
        %v615 = vsub.s32 0, %v614
        %v616 = vrot.slane %v611, %v615
        %v617 = vlaneseq
        %v618 = vshrl.u32 %v617, 7
        %v619 = vsub.s32 1, %v618
        %v620 = vrot.slane %v611, %v619
        %v621 = vlaneseq
        %v622 = vshrl.u32 %v621, 7
        %v623 = vsub.s32 2, %v622
        %v624 = vrot.slane %v611, %v623
        %v625 = vlaneseq
        %v626 = vshrl.u32 %v625, 7
        %v627 = vsub.s32 3, %v626
        %v628 = vrot.slane %v611, %v627
        %629 = vrot.lane.b32.xlu0 %v616, 64
        %v630 = vpop.permute.xlu0 %629
        %631 = vrot.lane.b32.xlu0 %v620, 64
        %v632 = vpop.permute.xlu0 %631
        %633 = vrot.lane.b32.xlu0 %v624, 64
        %v634 = vpop.permute.xlu0 %633
        %635 = vrot.lane.b32.xlu0 %v628, 64
        %v636 = vpop.permute.xlu0 %635
        %vm637 = vcmask 523264
        %v638 = vsel %vm637, %v630, %v632
        %v639 = vsel %vm637, %v632, %v634
        %v640 = vsel %vm637, %v634, %v636
        %v646 = vmul.f32 %v606, %v630
        %v647 = vmul.f32 %v607, %v638
        %v648 = vmul.f32 %v608, %v639
        %v649 = vmul.f32 %v609, %v640
        %v650 = vmul.f32 %v610, %v636
        %656 = vrot.lane.b32.xlu0 %v646, 64
        %v657 = vpop.permute.xlu0 %656
        %658 = vrot.lane.b32.xlu0 %v647, 64
        %v659 = vpop.permute.xlu0 %658
        %660 = vrot.lane.b32.xlu0 %v648, 64
        %v661 = vpop.permute.xlu0 %660
        %662 = vrot.lane.b32.xlu0 %v649, 64
        %v663 = vpop.permute.xlu0 %662
        %664 = vrot.lane.b32.xlu0 %v650, 64
        %v665 = vpop.permute.xlu0 %664
        %v666 = vsel %vm637, %v657, %v659
        %v667 = vsel %vm637, %v659, %v661
        %v668 = vsel %vm637, %v661, %v663
        %v669 = vsel %vm637, %v663, %v665
        %674 = vst [vmem:[#allocation3 + $0x80] sm:$0xff] %v666
        %675 = vst [vmem:[#allocation3 + $0x88] sm:$0xff] %v667
        %676 = vst [vmem:[#allocation3 + $0x90] sm:$0xff] %v668
        %677 = vst [vmem:[#allocation3 + $0x98] sm:$0xff] %v669
        %v678 = vld [vmem:[#allocation2] sm:$0xff]
        %v679 = vld [vmem:[#allocation2 + $0x8] sm:$0xff]
        %v680 = vld [vmem:[#allocation2 + $0x10] sm:$0xff]
        %v681 = vld [vmem:[#allocation2 + $0x18] sm:$0xff]
        %v682 = vld [vmem:[#allocation2 + $0x20] sm:$0xff]
        %v683 = vld [vmem:[#allocation7] ss:$8 sm:$0xf]
        %v684 = vld [vmem:[%s461] ss:$8 sm:$0xf]
        %v685 = vmul.f32 %v683, %v684
        %v687 = vlaneseq
        %v688 = vshrl.u32 %v687, 7
        %v689 = vsub.s32 0, %v688
        %v690 = vrot.slane %v685, %v689
        %v691 = vlaneseq
        %v692 = vshrl.u32 %v691, 7
        %v693 = vsub.s32 1, %v692
        %v694 = vrot.slane %v685, %v693
        %v695 = vlaneseq
        %v696 = vshrl.u32 %v695, 7
        %v697 = vsub.s32 2, %v696
        %v698 = vrot.slane %v685, %v697
        %v699 = vlaneseq
        %v700 = vshrl.u32 %v699, 7
        %v701 = vsub.s32 3, %v700
        %v702 = vrot.slane %v685, %v701
        %703 = vrot.lane.b32.xlu0 %v690, 65
        %v704 = vpop.permute.xlu0 %703
        %705 = vrot.lane.b32.xlu0 %v694, 65
        %v706 = vpop.permute.xlu0 %705
        %707 = vrot.lane.b32.xlu0 %v698, 65
        %v708 = vpop.permute.xlu0 %707
        %709 = vrot.lane.b32.xlu0 %v702, 65
        %v710 = vpop.permute.xlu0 %709
        %v711 = vsel %vm593, %v704, %v706
        %v712 = vsel %vm593, %v706, %v708
        %v713 = vsel %vm593, %v708, %v710
        %v719 = vmul.f32 %v678, %v704
        %v720 = vmul.f32 %v679, %v711
        %v721 = vmul.f32 %v680, %v712
        %v722 = vmul.f32 %v681, %v713
        %v723 = vmul.f32 %v682, %v710
        %729 = vrot.lane.b32.xlu0 %v719, 63
        %v730 = vpop.permute.xlu0 %729
        %731 = vrot.lane.b32.xlu0 %v720, 63
        %v732 = vpop.permute.xlu0 %731
        %733 = vrot.lane.b32.xlu0 %v721, 63
        %v734 = vpop.permute.xlu0 %733
        %735 = vrot.lane.b32.xlu0 %v722, 63
        %v736 = vpop.permute.xlu0 %735
        %737 = vrot.lane.b32.xlu0 %v723, 63
        %v738 = vpop.permute.xlu0 %737
        %v739 = vsel %vm564, %v730, %v732
        %v740 = vsel %vm564, %v732, %v734
        %v741 = vsel %vm564, %v734, %v736
        %v742 = vsel %vm564, %v736, %v738
        %747 = vst [vmem:[#allocation3 + $0xa0] sm:$0xff] %v739
        %748 = vst [vmem:[#allocation3 + $0xa8] sm:$0xff] %v740
        %749 = vst [vmem:[#allocation3 + $0xb0] sm:$0xff] %v741
        %750 = vst [vmem:[#allocation3 + $0xb8] sm:$0xff] %v742
        %v751 = vld [vmem:[#allocation2] sm:$0xff]
        %v752 = vld [vmem:[#allocation2 + $0x8] sm:$0xff]
        %v753 = vld [vmem:[#allocation2 + $0x10] sm:$0xff]
        %v754 = vld [vmem:[#allocation2 + $0x18] sm:$0xff]
        %v755 = vld [vmem:[#allocation2 + $0x20] sm:$0xff]
        %v756 = vld [vmem:[#allocation7] ss:$8 sm:$0xf]
        %s757 = scalar_lea.vmem [#allocation7], 3
        %v758 = vld [vmem:[%s757] ss:$8 sm:$0xf]
        %v759 = vmul.f32 %v756, %v758
        %v760 = vld [vmem:[%s308] ss:$8 sm:$0xf]
        %v761 = vmul.f32 %v759, %v760
        %v763 = vlaneseq
        %v764 = vshrl.u32 %v763, 7
        %v765 = vsub.s32 0, %v764
        %v766 = vrot.slane %v761, %v765
        %v767 = vlaneseq
        %v768 = vshrl.u32 %v767, 7
        %v769 = vsub.s32 1, %v768
        %v770 = vrot.slane %v761, %v769
        %v771 = vlaneseq
        %v772 = vshrl.u32 %v771, 7
        %v773 = vsub.s32 2, %v772
        %v774 = vrot.slane %v761, %v773
        %v775 = vlaneseq
        %v776 = vshrl.u32 %v775, 7
        %v777 = vsub.s32 3, %v776
        %v778 = vrot.slane %v761, %v777
        %779 = vrot.lane.b32.xlu0 %v766, 71
        %v780 = vpop.permute.xlu0 %779
        %781 = vrot.lane.b32.xlu0 %v770, 71
        %v782 = vpop.permute.xlu0 %781
        %783 = vrot.lane.b32.xlu0 %v774, 71
        %v784 = vpop.permute.xlu0 %783
        %785 = vrot.lane.b32.xlu0 %v778, 71
        %v786 = vpop.permute.xlu0 %785
        %v787 = vsel %vm518, %v780, %v782
        %v788 = vsel %vm518, %v782, %v784
        %v789 = vsel %vm518, %v784, %v786
        %v795 = vmul.f32 %v751, %v780
        %v796 = vmul.f32 %v752, %v787
        %v797 = vmul.f32 %v753, %v788
        %v798 = vmul.f32 %v754, %v789
        %v799 = vmul.f32 %v755, %v786
        %805 = vrot.lane.b32.xlu0 %v795, 57
        %v806 = vpop.permute.xlu0 %805
        %807 = vrot.lane.b32.xlu0 %v796, 57
        %v808 = vpop.permute.xlu0 %807
        %809 = vrot.lane.b32.xlu0 %v797, 57
        %v810 = vpop.permute.xlu0 %809
        %811 = vrot.lane.b32.xlu0 %v798, 57
        %v812 = vpop.permute.xlu0 %811
        %813 = vrot.lane.b32.xlu0 %v799, 57
        %v814 = vpop.permute.xlu0 %813
        %v815 = vsel %vm489, %v806, %v808
        %v816 = vsel %vm489, %v808, %v810
        %v817 = vsel %vm489, %v810, %v812
        %v818 = vsel %vm489, %v812, %v814
        %823 = vst [vmem:[#allocation3 + $0xc0] sm:$0xff] %v815
        %824 = vst [vmem:[#allocation3 + $0xc8] sm:$0xff] %v816
        %825 = vst [vmem:[#allocation3 + $0xd0] sm:$0xff] %v817
        %826 = vst [vmem:[#allocation3 + $0xd8] sm:$0xff] %v818
        %v827 = vld [vmem:[#allocation2] sm:$0xff]
        %v828 = vld [vmem:[#allocation2 + $0x8] sm:$0xff]
        %v829 = vld [vmem:[#allocation2 + $0x10] sm:$0xff]
        %v830 = vld [vmem:[#allocation2 + $0x18] sm:$0xff]
        %v831 = vld [vmem:[#allocation2 + $0x20] sm:$0xff]
        %v832 = vld [vmem:[#allocation7] ss:$8 sm:$0xf]
        %v833 = vld [vmem:[%s757] ss:$8 sm:$0xf]
        %v834 = vmul.f32 %v832, %v833
        %v836 = vlaneseq
        %v837 = vshrl.u32 %v836, 7
        %v838 = vsub.s32 0, %v837
        %v839 = vrot.slane %v834, %v838
        %v840 = vlaneseq
        %v841 = vshrl.u32 %v840, 7
        %v842 = vsub.s32 1, %v841
        %v843 = vrot.slane %v834, %v842
        %v844 = vlaneseq
        %v845 = vshrl.u32 %v844, 7
        %v846 = vsub.s32 2, %v845
        %v847 = vrot.slane %v834, %v846
        %v848 = vlaneseq
        %v849 = vshrl.u32 %v848, 7
        %v850 = vsub.s32 3, %v849
        %v851 = vrot.slane %v834, %v850
        %852 = vrot.lane.b32.xlu0 %v839, 72
        %v853 = vpop.permute.xlu0 %852
        %854 = vrot.lane.b32.xlu0 %v843, 72
        %v855 = vpop.permute.xlu0 %854
        %856 = vrot.lane.b32.xlu0 %v847, 72
        %v857 = vpop.permute.xlu0 %856
        %858 = vrot.lane.b32.xlu0 %v851, 72
        %v859 = vpop.permute.xlu0 %858
        %v860 = vsel %vm440, %v853, %v855
        %v861 = vsel %vm440, %v855, %v857
        %v862 = vsel %vm440, %v857, %v859
        %v868 = vmul.f32 %v827, %v853
        %v869 = vmul.f32 %v828, %v860
        %v870 = vmul.f32 %v829, %v861
        %v871 = vmul.f32 %v830, %v862
        %v872 = vmul.f32 %v831, %v859
        %878 = vrot.lane.b32.xlu0 %v868, 56
        %v879 = vpop.permute.xlu0 %878
        %880 = vrot.lane.b32.xlu0 %v869, 56
        %v881 = vpop.permute.xlu0 %880
        %882 = vrot.lane.b32.xlu0 %v870, 56
        %v883 = vpop.permute.xlu0 %882
        %884 = vrot.lane.b32.xlu0 %v871, 56
        %v885 = vpop.permute.xlu0 %884
        %886 = vrot.lane.b32.xlu0 %v872, 56
        %v887 = vpop.permute.xlu0 %886
        %v888 = vsel %vm411, %v879, %v881
        %v889 = vsel %vm411, %v881, %v883
        %v890 = vsel %vm411, %v883, %v885
        %v891 = vsel %vm411, %v885, %v887
        %896 = vst [vmem:[#allocation3 + $0xe0] sm:$0xff] %v888
        %897 = vst [vmem:[#allocation3 + $0xe8] sm:$0xff] %v889
        %898 = vst [vmem:[#allocation3 + $0xf0] sm:$0xff] %v890
        %899 = vst [vmem:[#allocation3 + $0xf8] sm:$0xff] %v891
        %v900 = vld [vmem:[#allocation2] sm:$0xff]
        %v901 = vld [vmem:[#allocation2 + $0x8] sm:$0xff]
        %v902 = vld [vmem:[#allocation2 + $0x10] sm:$0xff]
        %v903 = vld [vmem:[#allocation2 + $0x18] sm:$0xff]
        %v904 = vld [vmem:[#allocation2 + $0x20] sm:$0xff]
        %v905 = vld [vmem:[#allocation7] ss:$8 sm:$0xf]
        %v906 = vld [vmem:[%s757] ss:$8 sm:$0xf]
        %v907 = vmul.f32 %v905, %v906
        %v908 = vld [vmem:[%s461] ss:$8 sm:$0xf]
        %v909 = vmul.f32 %v907, %v908
        %v911 = vlaneseq
        %v912 = vshrl.u32 %v911, 7
        %v913 = vsub.s32 0, %v912
        %v914 = vrot.slane %v909, %v913
        %v915 = vlaneseq
        %v916 = vshrl.u32 %v915, 7
        %v917 = vsub.s32 1, %v916
        %v918 = vrot.slane %v909, %v917
        %v919 = vlaneseq
        %v920 = vshrl.u32 %v919, 7
        %v921 = vsub.s32 2, %v920
        %v922 = vrot.slane %v909, %v921
        %v923 = vlaneseq
        %v924 = vshrl.u32 %v923, 7
        %v925 = vsub.s32 3, %v924
        %v926 = vrot.slane %v909, %v925
        %927 = vrot.lane.b32.xlu0 %v914, 73
        %v928 = vpop.permute.xlu0 %927
        %929 = vrot.lane.b32.xlu0 %v918, 73
        %v930 = vpop.permute.xlu0 %929
        %931 = vrot.lane.b32.xlu0 %v922, 73
        %v932 = vpop.permute.xlu0 %931
        %933 = vrot.lane.b32.xlu0 %v926, 73
        %v934 = vpop.permute.xlu0 %933
        %v935 = vsel %vm365, %v928, %v930
        %v936 = vsel %vm365, %v930, %v932
        %v937 = vsel %vm365, %v932, %v934
        %v943 = vmul.f32 %v900, %v928
        %v944 = vmul.f32 %v901, %v935
        %v945 = vmul.f32 %v902, %v936
        %v946 = vmul.f32 %v903, %v937
        %v947 = vmul.f32 %v904, %v934
        %953 = vrot.lane.b32.xlu0 %v943, 55
        %v954 = vpop.permute.xlu0 %953
        %955 = vrot.lane.b32.xlu0 %v944, 55
        %v956 = vpop.permute.xlu0 %955
        %957 = vrot.lane.b32.xlu0 %v945, 55
        %v958 = vpop.permute.xlu0 %957
        %959 = vrot.lane.b32.xlu0 %v946, 55
        %v960 = vpop.permute.xlu0 %959
        %961 = vrot.lane.b32.xlu0 %v947, 55
        %v962 = vpop.permute.xlu0 %961
        %v963 = vsel %vm336, %v954, %v956
        %v964 = vsel %vm336, %v956, %v958
        %v965 = vsel %vm336, %v958, %v960
        %v966 = vsel %vm336, %v960, %v962
        %971 = vst [vmem:[#allocation3 + $0x100] sm:$0xff] %v963
        %972 = vst [vmem:[#allocation3 + $0x108] sm:$0xff] %v964
        %973 = vst [vmem:[#allocation3 + $0x110] sm:$0xff] %v965
        %974 = vst [vmem:[#allocation3 + $0x118] sm:$0xff] %v966
        %v975 = vld [vmem:[#allocation2] sm:$0xff]
        %v976 = vld [vmem:[#allocation2 + $0x8] sm:$0xff]
        %v977 = vld [vmem:[#allocation2 + $0x10] sm:$0xff]
        %v978 = vld [vmem:[#allocation2 + $0x18] sm:$0xff]
        %v979 = vld [vmem:[#allocation2 + $0x20] sm:$0xff]
        %v980 = vld [vmem:[%s305] ss:$8 sm:$0xf]
        %v981 = vld [vmem:[%s308] ss:$8 sm:$0xf]
        %v982 = vmul.f32 %v980, %v981
        %v984 = vlaneseq
        %v985 = vshrl.u32 %v984, 7
        %v986 = vsub.s32 0, %v985
        %v987 = vrot.slane %v982, %v986
        %v988 = vlaneseq
        %v989 = vshrl.u32 %v988, 7
        %v990 = vsub.s32 1, %v989
        %v991 = vrot.slane %v982, %v990
        %v992 = vlaneseq
        %v993 = vshrl.u32 %v992, 7
        %v994 = vsub.s32 2, %v993
        %v995 = vrot.slane %v982, %v994
        %v996 = vlaneseq
        %v997 = vshrl.u32 %v996, 7
        %v998 = vsub.s32 3, %v997
        %v999 = vrot.slane %v982, %v998
        %1000 = vrot.lane.b32.xlu0 %v987, 119
        %v1001 = vpop.permute.xlu0 %1000
        %1002 = vrot.lane.b32.xlu0 %v991, 119
        %v1003 = vpop.permute.xlu0 %1002
        %1004 = vrot.lane.b32.xlu0 %v995, 119
        %v1005 = vpop.permute.xlu0 %1004
        %1006 = vrot.lane.b32.xlu0 %v999, 119
        %v1007 = vpop.permute.xlu0 %1006
        %vm1008 = vcmask 973824
        %v1009 = vsel %vm1008, %v1001, %v1003
        %v1010 = vsel %vm1008, %v1003, %v1005
        %v1011 = vsel %vm1008, %v1005, %v1007
        %v1017 = vmul.f32 %v975, %v1001
        %v1018 = vmul.f32 %v976, %v1009
        %v1019 = vmul.f32 %v977, %v1010
        %v1020 = vmul.f32 %v978, %v1011
        %v1021 = vmul.f32 %v979, %v1007
        %1027 = vrot.lane.b32.xlu0 %v1017, 9
        %v1028 = vpop.permute.xlu0 %1027
        %1029 = vrot.lane.b32.xlu0 %v1018, 9
        %v1030 = vpop.permute.xlu0 %1029
        %1031 = vrot.lane.b32.xlu0 %v1019, 9
        %v1032 = vpop.permute.xlu0 %1031
        %1033 = vrot.lane.b32.xlu0 %v1020, 9
        %v1034 = vpop.permute.xlu0 %1033
        %1035 = vrot.lane.b32.xlu0 %v1021, 9
        %v1036 = vpop.permute.xlu0 %1035
        %vm1037 = vcmask 72704
        %v1038 = vsel %vm1037, %v1028, %v1030
        %v1039 = vsel %vm1037, %v1030, %v1032
        %v1040 = vsel %vm1037, %v1032, %v1034
        %v1041 = vsel %vm1037, %v1034, %v1036
        %1046 = vst [vmem:[#allocation3 + $0x120] sm:$0xff] %v1038
        %1047 = vst [vmem:[#allocation3 + $0x128] sm:$0xff] %v1039
        %1048 = vst [vmem:[#allocation3 + $0x130] sm:$0xff] %v1040
        %1049 = vst [vmem:[#allocation3 + $0x138] sm:$0xff] %v1041
        %v1050 = vld [vmem:[#allocation2] sm:$0xff]
        %v1051 = vld [vmem:[#allocation2 + $0x8] sm:$0xff]
        %v1052 = vld [vmem:[#allocation2 + $0x10] sm:$0xff]
        %v1053 = vld [vmem:[#allocation2 + $0x18] sm:$0xff]
        %v1054 = vld [vmem:[#allocation2 + $0x20] sm:$0xff]
        %v1055 = vld [vmem:[%s305] ss:$8 sm:$0xf]
        %v1057 = vlaneseq
        %v1058 = vshrl.u32 %v1057, 7
        %v1059 = vsub.s32 0, %v1058
        %v1060 = vrot.slane %v1055, %v1059
        %v1061 = vlaneseq
        %v1062 = vshrl.u32 %v1061, 7
        %v1063 = vsub.s32 1, %v1062
        %v1064 = vrot.slane %v1055, %v1063
        %v1065 = vlaneseq
        %v1066 = vshrl.u32 %v1065, 7
        %v1067 = vsub.s32 2, %v1066
        %v1068 = vrot.slane %v1055, %v1067
        %v1069 = vlaneseq
        %v1070 = vshrl.u32 %v1069, 7
        %v1071 = vsub.s32 3, %v1070
        %v1072 = vrot.slane %v1055, %v1071
        %1073 = vrot.lane.b32.xlu0 %v1060, 120
        %v1074 = vpop.permute.xlu0 %1073
        %1075 = vrot.lane.b32.xlu0 %v1064, 120
        %v1076 = vpop.permute.xlu0 %1075
        %1077 = vrot.lane.b32.xlu0 %v1068, 120
        %v1078 = vpop.permute.xlu0 %1077
        %1079 = vrot.lane.b32.xlu0 %v1072, 120
        %v1080 = vpop.permute.xlu0 %1079
        %vm1081 = vcmask 982016
        %v1082 = vsel %vm1081, %v1074, %v1076
        %v1083 = vsel %vm1081, %v1076, %v1078
        %v1084 = vsel %vm1081, %v1078, %v1080
        %v1090 = vmul.f32 %v1050, %v1074
        %v1091 = vmul.f32 %v1051, %v1082
        %v1092 = vmul.f32 %v1052, %v1083
        %v1093 = vmul.f32 %v1053, %v1084
        %v1094 = vmul.f32 %v1054, %v1080
        %1100 = vrot.lane.b32.xlu0 %v1090, 8
        %v1101 = vpop.permute.xlu0 %1100
        %1102 = vrot.lane.b32.xlu0 %v1091, 8
        %v1103 = vpop.permute.xlu0 %1102
        %1104 = vrot.lane.b32.xlu0 %v1092, 8
        %v1105 = vpop.permute.xlu0 %1104
        %1106 = vrot.lane.b32.xlu0 %v1093, 8
        %v1107 = vpop.permute.xlu0 %1106
        %1108 = vrot.lane.b32.xlu0 %v1094, 8
        %v1109 = vpop.permute.xlu0 %1108
        %vm1110 = vcmask 64512
        %v1111 = vsel %vm1110, %v1101, %v1103
        %v1112 = vsel %vm1110, %v1103, %v1105
        %v1113 = vsel %vm1110, %v1105, %v1107
        %v1114 = vsel %vm1110, %v1107, %v1109
        %1119 = vst [vmem:[#allocation3 + $0x140] sm:$0xff] %v1111
        %1120 = vst [vmem:[#allocation3 + $0x148] sm:$0xff] %v1112
        %1121 = vst [vmem:[#allocation3 + $0x150] sm:$0xff] %v1113
        %1122 = vst [vmem:[#allocation3 + $0x158] sm:$0xff] %v1114
        %v1123 = vld [vmem:[#allocation2] sm:$0xff]
        %v1124 = vld [vmem:[#allocation2 + $0x8] sm:$0xff]
        %v1125 = vld [vmem:[#allocation2 + $0x10] sm:$0xff]
        %v1126 = vld [vmem:[#allocation2 + $0x18] sm:$0xff]
        %v1127 = vld [vmem:[#allocation2 + $0x20] sm:$0xff]
        %v1128 = vld [vmem:[%s305] ss:$8 sm:$0xf]
        %v1129 = vld [vmem:[%s461] ss:$8 sm:$0xf]
        %v1130 = vmul.f32 %v1128, %v1129
        %v1132 = vlaneseq
        %v1133 = vshrl.u32 %v1132, 7
        %v1134 = vsub.s32 0, %v1133
        %v1135 = vrot.slane %v1130, %v1134
        %v1136 = vlaneseq
        %v1137 = vshrl.u32 %v1136, 7
        %v1138 = vsub.s32 1, %v1137
        %v1139 = vrot.slane %v1130, %v1138
        %v1140 = vlaneseq
        %v1141 = vshrl.u32 %v1140, 7
        %v1142 = vsub.s32 2, %v1141
        %v1143 = vrot.slane %v1130, %v1142
        %v1144 = vlaneseq
        %v1145 = vshrl.u32 %v1144, 7
        %v1146 = vsub.s32 3, %v1145
        %v1147 = vrot.slane %v1130, %v1146
        %1148 = vrot.lane.b32.xlu0 %v1135, 121
        %v1149 = vpop.permute.xlu0 %1148
        %1150 = vrot.lane.b32.xlu0 %v1139, 121
        %v1151 = vpop.permute.xlu0 %1150
        %1152 = vrot.lane.b32.xlu0 %v1143, 121
        %v1153 = vpop.permute.xlu0 %1152
        %1154 = vrot.lane.b32.xlu0 %v1147, 121
        %v1155 = vpop.permute.xlu0 %1154
        %vm1156 = vcmask 990208
        %v1157 = vsel %vm1156, %v1149, %v1151
        %v1158 = vsel %vm1156, %v1151, %v1153
        %v1159 = vsel %vm1156, %v1153, %v1155
        %v1165 = vmul.f32 %v1123, %v1149
        %v1166 = vmul.f32 %v1124, %v1157
        %v1167 = vmul.f32 %v1125, %v1158
        %v1168 = vmul.f32 %v1126, %v1159
        %v1169 = vmul.f32 %v1127, %v1155
        %1175 = vrot.lane.b32.xlu0 %v1165, 7
        %v1176 = vpop.permute.xlu0 %1175
        %1177 = vrot.lane.b32.xlu0 %v1166, 7
        %v1178 = vpop.permute.xlu0 %1177
        %1179 = vrot.lane.b32.xlu0 %v1167, 7
        %v1180 = vpop.permute.xlu0 %1179
        %1181 = vrot.lane.b32.xlu0 %v1168, 7
        %v1182 = vpop.permute.xlu0 %1181
        %1183 = vrot.lane.b32.xlu0 %v1169, 7
        %v1184 = vpop.permute.xlu0 %1183
        %vm1185 = vcmask 56320
        %v1186 = vsel %vm1185, %v1176, %v1178
        %v1187 = vsel %vm1185, %v1178, %v1180
        %v1188 = vsel %vm1185, %v1180, %v1182
        %v1189 = vsel %vm1185, %v1182, %v1184
        %1194 = vst [vmem:[#allocation3 + $0x160] sm:$0xff] %v1186
        %1195 = vst [vmem:[#allocation3 + $0x168] sm:$0xff] %v1187
        %1196 = vst [vmem:[#allocation3 + $0x170] sm:$0xff] %v1188
        %1197 = vst [vmem:[#allocation3 + $0x178] sm:$0xff] %v1189
        %v1198 = vld [vmem:[#allocation2] sm:$0xff]
        %v1199 = vld [vmem:[#allocation2 + $0x8] sm:$0xff]
        %v1200 = vld [vmem:[#allocation2 + $0x10] sm:$0xff]
        %v1201 = vld [vmem:[#allocation2 + $0x18] sm:$0xff]
        %v1202 = vld [vmem:[#allocation2 + $0x20] sm:$0xff]
        %v1203 = vld [vmem:[%s308] ss:$8 sm:$0xf]
        %v1205 = vlaneseq
        %v1206 = vshrl.u32 %v1205, 7
        %v1207 = vsub.s32 0, %v1206
        %v1208 = vrot.slane %v1203, %v1207
        %v1209 = vlaneseq
        %v1210 = vshrl.u32 %v1209, 7
        %v1211 = vsub.s32 1, %v1210
        %v1212 = vrot.slane %v1203, %v1211
        %v1213 = vlaneseq
        %v1214 = vshrl.u32 %v1213, 7
        %v1215 = vsub.s32 2, %v1214
        %v1216 = vrot.slane %v1203, %v1215
        %v1217 = vlaneseq
        %v1218 = vshrl.u32 %v1217, 7
        %v1219 = vsub.s32 3, %v1218
        %v1220 = vrot.slane %v1203, %v1219
        %1221 = vrot.lane.b32.xlu0 %v1208, 127
        %v1222 = vpop.permute.xlu0 %1221
        %1223 = vrot.lane.b32.xlu0 %v1212, 127
        %v1224 = vpop.permute.xlu0 %1223
        %1225 = vrot.lane.b32.xlu0 %v1216, 127
        %v1226 = vpop.permute.xlu0 %1225
        %1227 = vrot.lane.b32.xlu0 %v1220, 127
        %v1228 = vpop.permute.xlu0 %1227
        %vm1229 = vcmask 1039360
        %v1230 = vsel %vm1229, %v1222, %v1224
        %v1231 = vsel %vm1229, %v1224, %v1226
        %v1232 = vsel %vm1229, %v1226, %v1228
        %v1238 = vmul.f32 %v1198, %v1222
        %v1239 = vmul.f32 %v1199, %v1230
        %v1240 = vmul.f32 %v1200, %v1231
        %v1241 = vmul.f32 %v1201, %v1232
        %v1242 = vmul.f32 %v1202, %v1228
        %1248 = vrot.lane.b32.xlu0 %v1238, 1
        %v1249 = vpop.permute.xlu0 %1248
        %1250 = vrot.lane.b32.xlu0 %v1239, 1
        %v1251 = vpop.permute.xlu0 %1250
        %1252 = vrot.lane.b32.xlu0 %v1240, 1
        %v1253 = vpop.permute.xlu0 %1252
        %1254 = vrot.lane.b32.xlu0 %v1241, 1
        %v1255 = vpop.permute.xlu0 %1254
        %1256 = vrot.lane.b32.xlu0 %v1242, 1
        %v1257 = vpop.permute.xlu0 %1256
        %vm1258 = vcmask 7168
        %v1259 = vsel %vm1258, %v1249, %v1251
        %v1260 = vsel %vm1258, %v1251, %v1253
        %v1261 = vsel %vm1258, %v1253, %v1255
        %v1262 = vsel %vm1258, %v1255, %v1257
        %1267 = vst [vmem:[#allocation3 + $0x180] sm:$0xff] %v1259
        %1268 = vst [vmem:[#allocation3 + $0x188] sm:$0xff] %v1260
        %1269 = vst [vmem:[#allocation3 + $0x190] sm:$0xff] %v1261
        %1270 = vst [vmem:[#allocation3 + $0x198] sm:$0xff] %v1262
        %v1271 = vld [vmem:[#allocation2 + $0x8] sm:$0xff]
        %v1272 = vld [vmem:[#allocation2 + $0x10] sm:$0xff]
        %v1273 = vld [vmem:[#allocation2 + $0x18] sm:$0xff]
        %v1274 = vld [vmem:[#allocation2 + $0x20] sm:$0xff]
        %1275 = vst [vmem:[#allocation3 + $0x1a0] sm:$0xff] %v1271
        %1276 = vst [vmem:[#allocation3 + $0x1a8] sm:$0xff] %v1272
        %1277 = vst [vmem:[#allocation3 + $0x1b0] sm:$0xff] %v1273
        %1278 = vst [vmem:[#allocation3 + $0x1b8] sm:$0xff] %v1274
        %v1279 = vld [vmem:[#allocation2 + $0x8] sm:$0xff]
        %v1280 = vld [vmem:[#allocation2 + $0x10] sm:$0xff]
        %v1281 = vld [vmem:[#allocation2 + $0x18] sm:$0xff]
        %v1282 = vld [vmem:[#allocation2 + $0x20] sm:$0xff]
        %v1283 = vld [vmem:[#allocation2 + $0x28] sm:$0xff]
        %v1284 = vld [vmem:[%s461] ss:$8 sm:$0xf]
        %v1286 = vlaneseq
        %v1287 = vshrl.u32 %v1286, 7
        %v1288 = vsub.s32 0, %v1287
        %v1289 = vrot.slane %v1284, %v1288
        %v1290 = vlaneseq
        %v1291 = vshrl.u32 %v1290, 7
        %v1292 = vsub.s32 1, %v1291
        %v1293 = vrot.slane %v1284, %v1292
        %v1294 = vlaneseq
        %v1295 = vshrl.u32 %v1294, 7
        %v1296 = vsub.s32 2, %v1295
        %v1297 = vrot.slane %v1284, %v1296
        %v1298 = vlaneseq
        %v1299 = vshrl.u32 %v1298, 7
        %v1300 = vsub.s32 3, %v1299
        %v1301 = vrot.slane %v1284, %v1300
        %1302 = vrot.lane.b32.xlu0 %v1289, 1
        %v1303 = vpop.permute.xlu0 %1302
        %1304 = vrot.lane.b32.xlu0 %v1293, 1
        %v1305 = vpop.permute.xlu0 %1304
        %1306 = vrot.lane.b32.xlu0 %v1297, 1
        %v1307 = vpop.permute.xlu0 %1306
        %1308 = vrot.lane.b32.xlu0 %v1301, 1
        %v1309 = vpop.permute.xlu0 %1308
        %v1310 = vsel %vm1258, %v1303, %v1305
        %v1311 = vsel %vm1258, %v1305, %v1307
        %v1312 = vsel %vm1258, %v1307, %v1309
        %v1318 = vmul.f32 %v1279, %v1303
        %v1319 = vmul.f32 %v1280, %v1310
        %v1320 = vmul.f32 %v1281, %v1311
        %v1321 = vmul.f32 %v1282, %v1312
        %v1322 = vmul.f32 %v1283, %v1309
        %1328 = vrot.lane.b32.xlu0 %v1318, 127
        %v1329 = vpop.permute.xlu0 %1328
        %1330 = vrot.lane.b32.xlu0 %v1319, 127
        %v1331 = vpop.permute.xlu0 %1330
        %1332 = vrot.lane.b32.xlu0 %v1320, 127
        %v1333 = vpop.permute.xlu0 %1332
        %1334 = vrot.lane.b32.xlu0 %v1321, 127
        %v1335 = vpop.permute.xlu0 %1334
        %1336 = vrot.lane.b32.xlu0 %v1322, 127
        %v1337 = vpop.permute.xlu0 %1336
        %v1338 = vsel %vm1229, %v1329, %v1331
        %v1339 = vsel %vm1229, %v1331, %v1333
        %v1340 = vsel %vm1229, %v1333, %v1335
        %v1341 = vsel %vm1229, %v1335, %v1337
        %1346 = vst [vmem:[#allocation3 + $0x1c0] sm:$0xff] %v1338
        %1347 = vst [vmem:[#allocation3 + $0x1c8] sm:$0xff] %v1339
        %1348 = vst [vmem:[#allocation3 + $0x1d0] sm:$0xff] %v1340
        %1349 = vst [vmem:[#allocation3 + $0x1d8] sm:$0xff] %v1341
        %v1350 = vld [vmem:[#allocation2 + $0x8] sm:$0xff]
        %v1351 = vld [vmem:[#allocation2 + $0x10] sm:$0xff]
        %v1352 = vld [vmem:[#allocation2 + $0x18] sm:$0xff]
        %v1353 = vld [vmem:[#allocation2 + $0x20] sm:$0xff]
        %v1354 = vld [vmem:[#allocation2 + $0x28] sm:$0xff]
        %v1355 = vld [vmem:[%s757] ss:$8 sm:$0xf]
        %v1356 = vld [vmem:[%s308] ss:$8 sm:$0xf]
        %v1357 = vmul.f32 %v1355, %v1356
        %v1359 = vlaneseq
        %v1360 = vshrl.u32 %v1359, 7
        %v1361 = vsub.s32 0, %v1360
        %v1362 = vrot.slane %v1357, %v1361
        %v1363 = vlaneseq
        %v1364 = vshrl.u32 %v1363, 7
        %v1365 = vsub.s32 1, %v1364
        %v1366 = vrot.slane %v1357, %v1365
        %v1367 = vlaneseq
        %v1368 = vshrl.u32 %v1367, 7
        %v1369 = vsub.s32 2, %v1368
        %v1370 = vrot.slane %v1357, %v1369
        %v1371 = vlaneseq
        %v1372 = vshrl.u32 %v1371, 7
        %v1373 = vsub.s32 3, %v1372
        %v1374 = vrot.slane %v1357, %v1373
        %1375 = vrot.lane.b32.xlu0 %v1362, 7
        %v1376 = vpop.permute.xlu0 %1375
        %1377 = vrot.lane.b32.xlu0 %v1366, 7
        %v1378 = vpop.permute.xlu0 %1377
        %1379 = vrot.lane.b32.xlu0 %v1370, 7
        %v1380 = vpop.permute.xlu0 %1379
        %1381 = vrot.lane.b32.xlu0 %v1374, 7
        %v1382 = vpop.permute.xlu0 %1381
        %v1383 = vsel %vm1185, %v1376, %v1378
        %v1384 = vsel %vm1185, %v1378, %v1380
        %v1385 = vsel %vm1185, %v1380, %v1382
        %v1391 = vmul.f32 %v1350, %v1376
        %v1392 = vmul.f32 %v1351, %v1383
        %v1393 = vmul.f32 %v1352, %v1384
        %v1394 = vmul.f32 %v1353, %v1385
        %v1395 = vmul.f32 %v1354, %v1382
        %1401 = vrot.lane.b32.xlu0 %v1391, 121
        %v1402 = vpop.permute.xlu0 %1401
        %1403 = vrot.lane.b32.xlu0 %v1392, 121
        %v1404 = vpop.permute.xlu0 %1403
        %1405 = vrot.lane.b32.xlu0 %v1393, 121
        %v1406 = vpop.permute.xlu0 %1405
        %1407 = vrot.lane.b32.xlu0 %v1394, 121
        %v1408 = vpop.permute.xlu0 %1407
        %1409 = vrot.lane.b32.xlu0 %v1395, 121
        %v1410 = vpop.permute.xlu0 %1409
        %v1411 = vsel %vm1156, %v1402, %v1404
        %v1412 = vsel %vm1156, %v1404, %v1406
        %v1413 = vsel %vm1156, %v1406, %v1408
        %v1414 = vsel %vm1156, %v1408, %v1410
        %1419 = vst [vmem:[#allocation3 + $0x1e0] sm:$0xff] %v1411
        %1420 = vst [vmem:[#allocation3 + $0x1e8] sm:$0xff] %v1412
        %1421 = vst [vmem:[#allocation3 + $0x1f0] sm:$0xff] %v1413
        %1422 = vst [vmem:[#allocation3 + $0x1f8] sm:$0xff] %v1414
        %v1423 = vld [vmem:[#allocation2 + $0x8] sm:$0xff]
        %v1424 = vld [vmem:[#allocation2 + $0x10] sm:$0xff]
        %v1425 = vld [vmem:[#allocation2 + $0x18] sm:$0xff]
        %v1426 = vld [vmem:[#allocation2 + $0x20] sm:$0xff]
        %v1427 = vld [vmem:[#allocation2 + $0x28] sm:$0xff]
        %v1428 = vld [vmem:[%s757] ss:$8 sm:$0xf]
        %v1430 = vlaneseq
        %v1431 = vshrl.u32 %v1430, 7
        %v1432 = vsub.s32 0, %v1431
        %v1433 = vrot.slane %v1428, %v1432
        %v1434 = vlaneseq
        %v1435 = vshrl.u32 %v1434, 7
        %v1436 = vsub.s32 1, %v1435
        %v1437 = vrot.slane %v1428, %v1436
        %v1438 = vlaneseq
        %v1439 = vshrl.u32 %v1438, 7
        %v1440 = vsub.s32 2, %v1439
        %v1441 = vrot.slane %v1428, %v1440
        %v1442 = vlaneseq
        %v1443 = vshrl.u32 %v1442, 7
        %v1444 = vsub.s32 3, %v1443
        %v1445 = vrot.slane %v1428, %v1444
        %1446 = vrot.lane.b32.xlu0 %v1433, 8
        %v1447 = vpop.permute.xlu0 %1446
        %1448 = vrot.lane.b32.xlu0 %v1437, 8
        %v1449 = vpop.permute.xlu0 %1448
        %1450 = vrot.lane.b32.xlu0 %v1441, 8
        %v1451 = vpop.permute.xlu0 %1450
        %1452 = vrot.lane.b32.xlu0 %v1445, 8
        %v1453 = vpop.permute.xlu0 %1452
        %v1454 = vsel %vm1110, %v1447, %v1449
        %v1455 = vsel %vm1110, %v1449, %v1451
        %v1456 = vsel %vm1110, %v1451, %v1453
        %v1462 = vmul.f32 %v1423, %v1447
        %v1463 = vmul.f32 %v1424, %v1454
        %v1464 = vmul.f32 %v1425, %v1455
        %v1465 = vmul.f32 %v1426, %v1456
        %v1466 = vmul.f32 %v1427, %v1453
        %1472 = vrot.lane.b32.xlu0 %v1462, 120
        %v1473 = vpop.permute.xlu0 %1472
        %1474 = vrot.lane.b32.xlu0 %v1463, 120
        %v1475 = vpop.permute.xlu0 %1474
        %1476 = vrot.lane.b32.xlu0 %v1464, 120
        %v1477 = vpop.permute.xlu0 %1476
        %1478 = vrot.lane.b32.xlu0 %v1465, 120
        %v1479 = vpop.permute.xlu0 %1478
        %1480 = vrot.lane.b32.xlu0 %v1466, 120
        %v1481 = vpop.permute.xlu0 %1480
        %v1482 = vsel %vm1081, %v1473, %v1475
        %v1483 = vsel %vm1081, %v1475, %v1477
        %v1484 = vsel %vm1081, %v1477, %v1479
        %v1485 = vsel %vm1081, %v1479, %v1481
        %1490 = vst [vmem:[#allocation3 + $0x200] sm:$0xff] %v1482
        %1491 = vst [vmem:[#allocation3 + $0x208] sm:$0xff] %v1483
        %1492 = vst [vmem:[#allocation3 + $0x210] sm:$0xff] %v1484
        %1493 = vst [vmem:[#allocation3 + $0x218] sm:$0xff] %v1485
        %v1494 = vld [vmem:[#allocation2 + $0x8] sm:$0xff]
        %v1495 = vld [vmem:[#allocation2 + $0x10] sm:$0xff]
        %v1496 = vld [vmem:[#allocation2 + $0x18] sm:$0xff]
        %v1497 = vld [vmem:[#allocation2 + $0x20] sm:$0xff]
        %v1498 = vld [vmem:[#allocation2 + $0x28] sm:$0xff]
        %v1499 = vld [vmem:[%s757] ss:$8 sm:$0xf]
        %v1500 = vld [vmem:[%s461] ss:$8 sm:$0xf]
        %v1501 = vmul.f32 %v1499, %v1500
        %v1503 = vlaneseq
        %v1504 = vshrl.u32 %v1503, 7
        %v1505 = vsub.s32 0, %v1504
        %v1506 = vrot.slane %v1501, %v1505
        %v1507 = vlaneseq
        %v1508 = vshrl.u32 %v1507, 7
        %v1509 = vsub.s32 1, %v1508
        %v1510 = vrot.slane %v1501, %v1509
        %v1511 = vlaneseq
        %v1512 = vshrl.u32 %v1511, 7
        %v1513 = vsub.s32 2, %v1512
        %v1514 = vrot.slane %v1501, %v1513
        %v1515 = vlaneseq
        %v1516 = vshrl.u32 %v1515, 7
        %v1517 = vsub.s32 3, %v1516
        %v1518 = vrot.slane %v1501, %v1517
        %1519 = vrot.lane.b32.xlu0 %v1506, 9
        %v1520 = vpop.permute.xlu0 %1519
        %1521 = vrot.lane.b32.xlu0 %v1510, 9
        %v1522 = vpop.permute.xlu0 %1521
        %1523 = vrot.lane.b32.xlu0 %v1514, 9
        %v1524 = vpop.permute.xlu0 %1523
        %1525 = vrot.lane.b32.xlu0 %v1518, 9
        %v1526 = vpop.permute.xlu0 %1525
        %v1527 = vsel %vm1037, %v1520, %v1522
        %v1528 = vsel %vm1037, %v1522, %v1524
        %v1529 = vsel %vm1037, %v1524, %v1526
        %v1535 = vmul.f32 %v1494, %v1520
        %v1536 = vmul.f32 %v1495, %v1527
        %v1537 = vmul.f32 %v1496, %v1528
        %v1538 = vmul.f32 %v1497, %v1529
        %v1539 = vmul.f32 %v1498, %v1526
        %1545 = vrot.lane.b32.xlu0 %v1535, 119
        %v1546 = vpop.permute.xlu0 %1545
        %1547 = vrot.lane.b32.xlu0 %v1536, 119
        %v1548 = vpop.permute.xlu0 %1547
        %1549 = vrot.lane.b32.xlu0 %v1537, 119
        %v1550 = vpop.permute.xlu0 %1549
        %1551 = vrot.lane.b32.xlu0 %v1538, 119
        %v1552 = vpop.permute.xlu0 %1551
        %1553 = vrot.lane.b32.xlu0 %v1539, 119
        %v1554 = vpop.permute.xlu0 %1553
        %v1555 = vsel %vm1008, %v1546, %v1548
        %v1556 = vsel %vm1008, %v1548, %v1550
        %v1557 = vsel %vm1008, %v1550, %v1552
        %v1558 = vsel %vm1008, %v1552, %v1554
        %1563 = vst [vmem:[#allocation3 + $0x220] sm:$0xff] %v1555
        %1564 = vst [vmem:[#allocation3 + $0x228] sm:$0xff] %v1556
        %1565 = vst [vmem:[#allocation3 + $0x230] sm:$0xff] %v1557
        %1566 = vst [vmem:[#allocation3 + $0x238] sm:$0xff] %v1558
        %v1567 = vld [vmem:[#allocation2 + $0x8] sm:$0xff]
        %v1568 = vld [vmem:[#allocation2 + $0x10] sm:$0xff]
        %v1569 = vld [vmem:[#allocation2 + $0x18] sm:$0xff]
        %v1570 = vld [vmem:[#allocation2 + $0x20] sm:$0xff]
        %v1571 = vld [vmem:[#allocation2 + $0x28] sm:$0xff]
        %s1572 = scalar_lea.vmem [#allocation7], 1
        %v1573 = vld [vmem:[%s1572] ss:$8 sm:$0xf]
        %v1574 = vld [vmem:[%s305] ss:$8 sm:$0xf]
        %v1575 = vmul.f32 %v1573, %v1574
        %v1576 = vld [vmem:[%s308] ss:$8 sm:$0xf]
        %v1577 = vmul.f32 %v1575, %v1576
        %v1579 = vlaneseq
        %v1580 = vshrl.u32 %v1579, 7
        %v1581 = vsub.s32 0, %v1580
        %v1582 = vrot.slane %v1577, %v1581
        %v1583 = vlaneseq
        %v1584 = vshrl.u32 %v1583, 7
        %v1585 = vsub.s32 1, %v1584
        %v1586 = vrot.slane %v1577, %v1585
        %v1587 = vlaneseq
        %v1588 = vshrl.u32 %v1587, 7
        %v1589 = vsub.s32 2, %v1588
        %v1590 = vrot.slane %v1577, %v1589
        %v1591 = vlaneseq
        %v1592 = vshrl.u32 %v1591, 7
        %v1593 = vsub.s32 3, %v1592
        %v1594 = vrot.slane %v1577, %v1593
        %1595 = vrot.lane.b32.xlu0 %v1582, 55
        %v1596 = vpop.permute.xlu0 %1595
        %1597 = vrot.lane.b32.xlu0 %v1586, 55
        %v1598 = vpop.permute.xlu0 %1597
        %1599 = vrot.lane.b32.xlu0 %v1590, 55
        %v1600 = vpop.permute.xlu0 %1599
        %1601 = vrot.lane.b32.xlu0 %v1594, 55
        %v1602 = vpop.permute.xlu0 %1601
        %v1603 = vsel %vm336, %v1596, %v1598
        %v1604 = vsel %vm336, %v1598, %v1600
        %v1605 = vsel %vm336, %v1600, %v1602
        %v1611 = vmul.f32 %v1567, %v1596
        %v1612 = vmul.f32 %v1568, %v1603
        %v1613 = vmul.f32 %v1569, %v1604
        %v1614 = vmul.f32 %v1570, %v1605
        %v1615 = vmul.f32 %v1571, %v1602
        %1621 = vrot.lane.b32.xlu0 %v1611, 73
        %v1622 = vpop.permute.xlu0 %1621
        %1623 = vrot.lane.b32.xlu0 %v1612, 73
        %v1624 = vpop.permute.xlu0 %1623
        %1625 = vrot.lane.b32.xlu0 %v1613, 73
        %v1626 = vpop.permute.xlu0 %1625
        %1627 = vrot.lane.b32.xlu0 %v1614, 73
        %v1628 = vpop.permute.xlu0 %1627
        %1629 = vrot.lane.b32.xlu0 %v1615, 73
        %v1630 = vpop.permute.xlu0 %1629
        %v1631 = vsel %vm365, %v1622, %v1624
        %v1632 = vsel %vm365, %v1624, %v1626
        %v1633 = vsel %vm365, %v1626, %v1628
        %v1634 = vsel %vm365, %v1628, %v1630
        %1639 = vst [vmem:[#allocation3 + $0x240] sm:$0xff] %v1631
        %1640 = vst [vmem:[#allocation3 + $0x248] sm:$0xff] %v1632
        %1641 = vst [vmem:[#allocation3 + $0x250] sm:$0xff] %v1633
        %1642 = vst [vmem:[#allocation3 + $0x258] sm:$0xff] %v1634
        %v1643 = vld [vmem:[#allocation2 + $0x8] sm:$0xff]
        %v1644 = vld [vmem:[#allocation2 + $0x10] sm:$0xff]
        %v1645 = vld [vmem:[#allocation2 + $0x18] sm:$0xff]
        %v1646 = vld [vmem:[#allocation2 + $0x20] sm:$0xff]
        %v1647 = vld [vmem:[#allocation2 + $0x28] sm:$0xff]
        %v1648 = vld [vmem:[%s1572] ss:$8 sm:$0xf]
        %v1649 = vld [vmem:[%s305] ss:$8 sm:$0xf]
        %v1650 = vmul.f32 %v1648, %v1649
        %v1652 = vlaneseq
        %v1653 = vshrl.u32 %v1652, 7
        %v1654 = vsub.s32 0, %v1653
        %v1655 = vrot.slane %v1650, %v1654
        %v1656 = vlaneseq
        %v1657 = vshrl.u32 %v1656, 7
        %v1658 = vsub.s32 1, %v1657
        %v1659 = vrot.slane %v1650, %v1658
        %v1660 = vlaneseq
        %v1661 = vshrl.u32 %v1660, 7
        %v1662 = vsub.s32 2, %v1661
        %v1663 = vrot.slane %v1650, %v1662
        %v1664 = vlaneseq
        %v1665 = vshrl.u32 %v1664, 7
        %v1666 = vsub.s32 3, %v1665
        %v1667 = vrot.slane %v1650, %v1666
        %1668 = vrot.lane.b32.xlu0 %v1655, 56
        %v1669 = vpop.permute.xlu0 %1668
        %1670 = vrot.lane.b32.xlu0 %v1659, 56
        %v1671 = vpop.permute.xlu0 %1670
        %1672 = vrot.lane.b32.xlu0 %v1663, 56
        %v1673 = vpop.permute.xlu0 %1672
        %1674 = vrot.lane.b32.xlu0 %v1667, 56
        %v1675 = vpop.permute.xlu0 %1674
        %v1676 = vsel %vm411, %v1669, %v1671
        %v1677 = vsel %vm411, %v1671, %v1673
        %v1678 = vsel %vm411, %v1673, %v1675
        %v1684 = vmul.f32 %v1643, %v1669
        %v1685 = vmul.f32 %v1644, %v1676
        %v1686 = vmul.f32 %v1645, %v1677
        %v1687 = vmul.f32 %v1646, %v1678
        %v1688 = vmul.f32 %v1647, %v1675
        %1694 = vrot.lane.b32.xlu0 %v1684, 72
        %v1695 = vpop.permute.xlu0 %1694
        %1696 = vrot.lane.b32.xlu0 %v1685, 72
        %v1697 = vpop.permute.xlu0 %1696
        %1698 = vrot.lane.b32.xlu0 %v1686, 72
        %v1699 = vpop.permute.xlu0 %1698
        %1700 = vrot.lane.b32.xlu0 %v1687, 72
        %v1701 = vpop.permute.xlu0 %1700
        %1702 = vrot.lane.b32.xlu0 %v1688, 72
        %v1703 = vpop.permute.xlu0 %1702
        %v1704 = vsel %vm440, %v1695, %v1697
        %v1705 = vsel %vm440, %v1697, %v1699
        %v1706 = vsel %vm440, %v1699, %v1701
        %v1707 = vsel %vm440, %v1701, %v1703
        %1712 = vst [vmem:[#allocation3 + $0x260] sm:$0xff] %v1704
        %1713 = vst [vmem:[#allocation3 + $0x268] sm:$0xff] %v1705
        %1714 = vst [vmem:[#allocation3 + $0x270] sm:$0xff] %v1706
        %1715 = vst [vmem:[#allocation3 + $0x278] sm:$0xff] %v1707
        %v1716 = vld [vmem:[#allocation2 + $0x8] sm:$0xff]
        %v1717 = vld [vmem:[#allocation2 + $0x10] sm:$0xff]
        %v1718 = vld [vmem:[#allocation2 + $0x18] sm:$0xff]
        %v1719 = vld [vmem:[#allocation2 + $0x20] sm:$0xff]
        %v1720 = vld [vmem:[#allocation2 + $0x28] sm:$0xff]
        %v1721 = vld [vmem:[%s1572] ss:$8 sm:$0xf]
        %v1722 = vld [vmem:[%s305] ss:$8 sm:$0xf]
        %v1723 = vmul.f32 %v1721, %v1722
        %v1724 = vld [vmem:[%s461] ss:$8 sm:$0xf]
        %v1725 = vmul.f32 %v1723, %v1724
        %v1727 = vlaneseq
        %v1728 = vshrl.u32 %v1727, 7
        %v1729 = vsub.s32 0, %v1728
        %v1730 = vrot.slane %v1725, %v1729
        %v1731 = vlaneseq
        %v1732 = vshrl.u32 %v1731, 7
        %v1733 = vsub.s32 1, %v1732
        %v1734 = vrot.slane %v1725, %v1733
        %v1735 = vlaneseq
        %v1736 = vshrl.u32 %v1735, 7
        %v1737 = vsub.s32 2, %v1736
        %v1738 = vrot.slane %v1725, %v1737
        %v1739 = vlaneseq
        %v1740 = vshrl.u32 %v1739, 7
        %v1741 = vsub.s32 3, %v1740
        %v1742 = vrot.slane %v1725, %v1741
        %1743 = vrot.lane.b32.xlu0 %v1730, 57
        %v1744 = vpop.permute.xlu0 %1743
        %1745 = vrot.lane.b32.xlu0 %v1734, 57
        %v1746 = vpop.permute.xlu0 %1745
        %1747 = vrot.lane.b32.xlu0 %v1738, 57
        %v1748 = vpop.permute.xlu0 %1747
        %1749 = vrot.lane.b32.xlu0 %v1742, 57
        %v1750 = vpop.permute.xlu0 %1749
        %v1751 = vsel %vm489, %v1744, %v1746
        %v1752 = vsel %vm489, %v1746, %v1748
        %v1753 = vsel %vm489, %v1748, %v1750
        %v1759 = vmul.f32 %v1716, %v1744
        %v1760 = vmul.f32 %v1717, %v1751
        %v1761 = vmul.f32 %v1718, %v1752
        %v1762 = vmul.f32 %v1719, %v1753
        %v1763 = vmul.f32 %v1720, %v1750
        %1769 = vrot.lane.b32.xlu0 %v1759, 71
        %v1770 = vpop.permute.xlu0 %1769
        %1771 = vrot.lane.b32.xlu0 %v1760, 71
        %v1772 = vpop.permute.xlu0 %1771
        %1773 = vrot.lane.b32.xlu0 %v1761, 71
        %v1774 = vpop.permute.xlu0 %1773
        %1775 = vrot.lane.b32.xlu0 %v1762, 71
        %v1776 = vpop.permute.xlu0 %1775
        %1777 = vrot.lane.b32.xlu0 %v1763, 71
        %v1778 = vpop.permute.xlu0 %1777
        %v1779 = vsel %vm518, %v1770, %v1772
        %v1780 = vsel %vm518, %v1772, %v1774
        %v1781 = vsel %vm518, %v1774, %v1776
        %v1782 = vsel %vm518, %v1776, %v1778
        %1787 = vst [vmem:[#allocation3 + $0x280] sm:$0xff] %v1779
        %1788 = vst [vmem:[#allocation3 + $0x288] sm:$0xff] %v1780
        %1789 = vst [vmem:[#allocation3 + $0x290] sm:$0xff] %v1781
        %1790 = vst [vmem:[#allocation3 + $0x298] sm:$0xff] %v1782
        %v1791 = vld [vmem:[#allocation2 + $0x8] sm:$0xff]
        %v1792 = vld [vmem:[#allocation2 + $0x10] sm:$0xff]
        %v1793 = vld [vmem:[#allocation2 + $0x18] sm:$0xff]
        %v1794 = vld [vmem:[#allocation2 + $0x20] sm:$0xff]
        %v1795 = vld [vmem:[#allocation2 + $0x28] sm:$0xff]
        %v1796 = vld [vmem:[%s1572] ss:$8 sm:$0xf]
        %v1797 = vld [vmem:[%s308] ss:$8 sm:$0xf]
        %v1798 = vmul.f32 %v1796, %v1797
        %v1800 = vlaneseq
        %v1801 = vshrl.u32 %v1800, 7
        %v1802 = vsub.s32 0, %v1801
        %v1803 = vrot.slane %v1798, %v1802
        %v1804 = vlaneseq
        %v1805 = vshrl.u32 %v1804, 7
        %v1806 = vsub.s32 1, %v1805
        %v1807 = vrot.slane %v1798, %v1806
        %v1808 = vlaneseq
        %v1809 = vshrl.u32 %v1808, 7
        %v1810 = vsub.s32 2, %v1809
        %v1811 = vrot.slane %v1798, %v1810
        %v1812 = vlaneseq
        %v1813 = vshrl.u32 %v1812, 7
        %v1814 = vsub.s32 3, %v1813
        %v1815 = vrot.slane %v1798, %v1814
        %1816 = vrot.lane.b32.xlu0 %v1803, 63
        %v1817 = vpop.permute.xlu0 %1816
        %1818 = vrot.lane.b32.xlu0 %v1807, 63
        %v1819 = vpop.permute.xlu0 %1818
        %1820 = vrot.lane.b32.xlu0 %v1811, 63
        %v1821 = vpop.permute.xlu0 %1820
        %1822 = vrot.lane.b32.xlu0 %v1815, 63
        %v1823 = vpop.permute.xlu0 %1822
        %v1824 = vsel %vm564, %v1817, %v1819
        %v1825 = vsel %vm564, %v1819, %v1821
        %v1826 = vsel %vm564, %v1821, %v1823
        %v1832 = vmul.f32 %v1791, %v1817
        %v1833 = vmul.f32 %v1792, %v1824
        %v1834 = vmul.f32 %v1793, %v1825
        %v1835 = vmul.f32 %v1794, %v1826
        %v1836 = vmul.f32 %v1795, %v1823
        %1842 = vrot.lane.b32.xlu0 %v1832, 65
        %v1843 = vpop.permute.xlu0 %1842
        %1844 = vrot.lane.b32.xlu0 %v1833, 65
        %v1845 = vpop.permute.xlu0 %1844
        %1846 = vrot.lane.b32.xlu0 %v1834, 65
        %v1847 = vpop.permute.xlu0 %1846
        %1848 = vrot.lane.b32.xlu0 %v1835, 65
        %v1849 = vpop.permute.xlu0 %1848
        %1850 = vrot.lane.b32.xlu0 %v1836, 65
        %v1851 = vpop.permute.xlu0 %1850
        %v1852 = vsel %vm593, %v1843, %v1845
        %v1853 = vsel %vm593, %v1845, %v1847
        %v1854 = vsel %vm593, %v1847, %v1849
        %v1855 = vsel %vm593, %v1849, %v1851
        %1860 = vst [vmem:[#allocation3 + $0x2a0] sm:$0xff] %v1852
        %1861 = vst [vmem:[#allocation3 + $0x2a8] sm:$0xff] %v1853
        %1862 = vst [vmem:[#allocation3 + $0x2b0] sm:$0xff] %v1854
        %1863 = vst [vmem:[#allocation3 + $0x2b8] sm:$0xff] %v1855
        %v1864 = vld [vmem:[#allocation2 + $0x8] sm:$0xff]
        %v1865 = vld [vmem:[#allocation2 + $0x10] sm:$0xff]
        %v1866 = vld [vmem:[#allocation2 + $0x18] sm:$0xff]
        %v1867 = vld [vmem:[#allocation2 + $0x20] sm:$0xff]
        %v1868 = vld [vmem:[#allocation2 + $0x28] sm:$0xff]
        %v1869 = vld [vmem:[%s1572] ss:$8 sm:$0xf]
        %v1871 = vlaneseq
        %v1872 = vshrl.u32 %v1871, 7
        %v1873 = vsub.s32 0, %v1872
        %v1874 = vrot.slane %v1869, %v1873
        %v1875 = vlaneseq
        %v1876 = vshrl.u32 %v1875, 7
        %v1877 = vsub.s32 1, %v1876
        %v1878 = vrot.slane %v1869, %v1877
        %v1879 = vlaneseq
        %v1880 = vshrl.u32 %v1879, 7
        %v1881 = vsub.s32 2, %v1880
        %v1882 = vrot.slane %v1869, %v1881
        %v1883 = vlaneseq
        %v1884 = vshrl.u32 %v1883, 7
        %v1885 = vsub.s32 3, %v1884
        %v1886 = vrot.slane %v1869, %v1885
        %1887 = vrot.lane.b32.xlu0 %v1874, 64
        %v1888 = vpop.permute.xlu0 %1887
        %1889 = vrot.lane.b32.xlu0 %v1878, 64
        %v1890 = vpop.permute.xlu0 %1889
        %1891 = vrot.lane.b32.xlu0 %v1882, 64
        %v1892 = vpop.permute.xlu0 %1891
        %1893 = vrot.lane.b32.xlu0 %v1886, 64
        %v1894 = vpop.permute.xlu0 %1893
        %v1895 = vsel %vm637, %v1888, %v1890
        %v1896 = vsel %vm637, %v1890, %v1892
        %v1897 = vsel %vm637, %v1892, %v1894
        %v1903 = vmul.f32 %v1864, %v1888
        %v1904 = vmul.f32 %v1865, %v1895
        %v1905 = vmul.f32 %v1866, %v1896
        %v1906 = vmul.f32 %v1867, %v1897
        %v1907 = vmul.f32 %v1868, %v1894
        %1913 = vrot.lane.b32.xlu0 %v1903, 64
        %v1914 = vpop.permute.xlu0 %1913
        %1915 = vrot.lane.b32.xlu0 %v1904, 64
        %v1916 = vpop.permute.xlu0 %1915
        %1917 = vrot.lane.b32.xlu0 %v1905, 64
        %v1918 = vpop.permute.xlu0 %1917
        %1919 = vrot.lane.b32.xlu0 %v1906, 64
        %v1920 = vpop.permute.xlu0 %1919
        %1921 = vrot.lane.b32.xlu0 %v1907, 64
        %v1922 = vpop.permute.xlu0 %1921
        %v1923 = vsel %vm637, %v1914, %v1916
        %v1924 = vsel %vm637, %v1916, %v1918
        %v1925 = vsel %vm637, %v1918, %v1920
        %v1926 = vsel %vm637, %v1920, %v1922
        %1931 = vst [vmem:[#allocation3 + $0x2c0] sm:$0xff] %v1923
        %1932 = vst [vmem:[#allocation3 + $0x2c8] sm:$0xff] %v1924
        %1933 = vst [vmem:[#allocation3 + $0x2d0] sm:$0xff] %v1925
        %1934 = vst [vmem:[#allocation3 + $0x2d8] sm:$0xff] %v1926
        %v1935 = vld [vmem:[#allocation2 + $0x8] sm:$0xff]
        %v1936 = vld [vmem:[#allocation2 + $0x10] sm:$0xff]
        %v1937 = vld [vmem:[#allocation2 + $0x18] sm:$0xff]
        %v1938 = vld [vmem:[#allocation2 + $0x20] sm:$0xff]
        %v1939 = vld [vmem:[#allocation2 + $0x28] sm:$0xff]
        %v1940 = vld [vmem:[%s1572] ss:$8 sm:$0xf]
        %v1941 = vld [vmem:[%s461] ss:$8 sm:$0xf]
        %v1942 = vmul.f32 %v1940, %v1941
        %v1944 = vlaneseq
        %v1945 = vshrl.u32 %v1944, 7
        %v1946 = vsub.s32 0, %v1945
        %v1947 = vrot.slane %v1942, %v1946
        %v1948 = vlaneseq
        %v1949 = vshrl.u32 %v1948, 7
        %v1950 = vsub.s32 1, %v1949
        %v1951 = vrot.slane %v1942, %v1950
        %v1952 = vlaneseq
        %v1953 = vshrl.u32 %v1952, 7
        %v1954 = vsub.s32 2, %v1953
        %v1955 = vrot.slane %v1942, %v1954
        %v1956 = vlaneseq
        %v1957 = vshrl.u32 %v1956, 7
        %v1958 = vsub.s32 3, %v1957
        %v1959 = vrot.slane %v1942, %v1958
        %1960 = vrot.lane.b32.xlu0 %v1947, 65
        %v1961 = vpop.permute.xlu0 %1960
        %1962 = vrot.lane.b32.xlu0 %v1951, 65
        %v1963 = vpop.permute.xlu0 %1962
        %1964 = vrot.lane.b32.xlu0 %v1955, 65
        %v1965 = vpop.permute.xlu0 %1964
        %1966 = vrot.lane.b32.xlu0 %v1959, 65
        %v1967 = vpop.permute.xlu0 %1966
        %v1968 = vsel %vm593, %v1961, %v1963
        %v1969 = vsel %vm593, %v1963, %v1965
        %v1970 = vsel %vm593, %v1965, %v1967
        %v1976 = vmul.f32 %v1935, %v1961
        %v1977 = vmul.f32 %v1936, %v1968
        %v1978 = vmul.f32 %v1937, %v1969
        %v1979 = vmul.f32 %v1938, %v1970
        %v1980 = vmul.f32 %v1939, %v1967
        %1986 = vrot.lane.b32.xlu0 %v1976, 63
        %v1987 = vpop.permute.xlu0 %1986
        %1988 = vrot.lane.b32.xlu0 %v1977, 63
        %v1989 = vpop.permute.xlu0 %1988
        %1990 = vrot.lane.b32.xlu0 %v1978, 63
        %v1991 = vpop.permute.xlu0 %1990
        %1992 = vrot.lane.b32.xlu0 %v1979, 63
        %v1993 = vpop.permute.xlu0 %1992
        %1994 = vrot.lane.b32.xlu0 %v1980, 63
        %v1995 = vpop.permute.xlu0 %1994
        %v1996 = vsel %vm564, %v1987, %v1989
        %v1997 = vsel %vm564, %v1989, %v1991
        %v1998 = vsel %vm564, %v1991, %v1993
        %v1999 = vsel %vm564, %v1993, %v1995
        %2004 = vst [vmem:[#allocation3 + $0x2e0] sm:$0xff] %v1996
        %2005 = vst [vmem:[#allocation3 + $0x2e8] sm:$0xff] %v1997
        %2006 = vst [vmem:[#allocation3 + $0x2f0] sm:$0xff] %v1998
        %2007 = vst [vmem:[#allocation3 + $0x2f8] sm:$0xff] %v1999
        %v2008 = vld [vmem:[#allocation2 + $0x8] sm:$0xff]
        %v2009 = vld [vmem:[#allocation2 + $0x10] sm:$0xff]
        %v2010 = vld [vmem:[#allocation2 + $0x18] sm:$0xff]
        %v2011 = vld [vmem:[#allocation2 + $0x20] sm:$0xff]
        %v2012 = vld [vmem:[#allocation2 + $0x28] sm:$0xff]
        %v2013 = vld [vmem:[%s1572] ss:$8 sm:$0xf]
        %v2014 = vld [vmem:[%s757] ss:$8 sm:$0xf]
        %v2015 = vmul.f32 %v2013, %v2014
        %v2016 = vld [vmem:[%s308] ss:$8 sm:$0xf]
        %v2017 = vmul.f32 %v2015, %v2016
        %v2019 = vlaneseq
        %v2020 = vshrl.u32 %v2019, 7
        %v2021 = vsub.s32 0, %v2020
        %v2022 = vrot.slane %v2017, %v2021
        %v2023 = vlaneseq
        %v2024 = vshrl.u32 %v2023, 7
        %v2025 = vsub.s32 1, %v2024
        %v2026 = vrot.slane %v2017, %v2025
        %v2027 = vlaneseq
        %v2028 = vshrl.u32 %v2027, 7
        %v2029 = vsub.s32 2, %v2028
        %v2030 = vrot.slane %v2017, %v2029
        %v2031 = vlaneseq
        %v2032 = vshrl.u32 %v2031, 7
        %v2033 = vsub.s32 3, %v2032
        %v2034 = vrot.slane %v2017, %v2033
        %2035 = vrot.lane.b32.xlu0 %v2022, 71
        %v2036 = vpop.permute.xlu0 %2035
        %2037 = vrot.lane.b32.xlu0 %v2026, 71
        %v2038 = vpop.permute.xlu0 %2037
        %2039 = vrot.lane.b32.xlu0 %v2030, 71
        %v2040 = vpop.permute.xlu0 %2039
        %2041 = vrot.lane.b32.xlu0 %v2034, 71
        %v2042 = vpop.permute.xlu0 %2041
        %v2043 = vsel %vm518, %v2036, %v2038
        %v2044 = vsel %vm518, %v2038, %v2040
        %v2045 = vsel %vm518, %v2040, %v2042
        %v2051 = vmul.f32 %v2008, %v2036
        %v2052 = vmul.f32 %v2009, %v2043
        %v2053 = vmul.f32 %v2010, %v2044
        %v2054 = vmul.f32 %v2011, %v2045
        %v2055 = vmul.f32 %v2012, %v2042
        %2061 = vrot.lane.b32.xlu0 %v2051, 57
        %v2062 = vpop.permute.xlu0 %2061
        %2063 = vrot.lane.b32.xlu0 %v2052, 57
        %v2064 = vpop.permute.xlu0 %2063
        %2065 = vrot.lane.b32.xlu0 %v2053, 57
        %v2066 = vpop.permute.xlu0 %2065
        %2067 = vrot.lane.b32.xlu0 %v2054, 57
        %v2068 = vpop.permute.xlu0 %2067
        %2069 = vrot.lane.b32.xlu0 %v2055, 57
        %v2070 = vpop.permute.xlu0 %2069
        %v2071 = vsel %vm489, %v2062, %v2064
        %v2072 = vsel %vm489, %v2064, %v2066
        %v2073 = vsel %vm489, %v2066, %v2068
        %v2074 = vsel %vm489, %v2068, %v2070
        %2079 = vst [vmem:[#allocation3 + $0x300] sm:$0xff] %v2071
        %2080 = vst [vmem:[#allocation3 + $0x308] sm:$0xff] %v2072
        %2081 = vst [vmem:[#allocation3 + $0x310] sm:$0xff] %v2073
        %2082 = vst [vmem:[#allocation3 + $0x318] sm:$0xff] %v2074
        %v2083 = vld [vmem:[#allocation2 + $0x8] sm:$0xff]
        %v2084 = vld [vmem:[#allocation2 + $0x10] sm:$0xff]
        %v2085 = vld [vmem:[#allocation2 + $0x18] sm:$0xff]
        %v2086 = vld [vmem:[#allocation2 + $0x20] sm:$0xff]
        %v2087 = vld [vmem:[#allocation2 + $0x28] sm:$0xff]
        %v2088 = vld [vmem:[%s1572] ss:$8 sm:$0xf]
        %v2089 = vld [vmem:[%s757] ss:$8 sm:$0xf]
        %v2090 = vmul.f32 %v2088, %v2089
        %v2092 = vlaneseq
        %v2093 = vshrl.u32 %v2092, 7
        %v2094 = vsub.s32 0, %v2093
        %v2095 = vrot.slane %v2090, %v2094
        %v2096 = vlaneseq
        %v2097 = vshrl.u32 %v2096, 7
        %v2098 = vsub.s32 1, %v2097
        %v2099 = vrot.slane %v2090, %v2098
        %v2100 = vlaneseq
        %v2101 = vshrl.u32 %v2100, 7
        %v2102 = vsub.s32 2, %v2101
        %v2103 = vrot.slane %v2090, %v2102
        %v2104 = vlaneseq
        %v2105 = vshrl.u32 %v2104, 7
        %v2106 = vsub.s32 3, %v2105
        %v2107 = vrot.slane %v2090, %v2106
        %2108 = vrot.lane.b32.xlu0 %v2095, 72
        %v2109 = vpop.permute.xlu0 %2108
        %2110 = vrot.lane.b32.xlu0 %v2099, 72
        %v2111 = vpop.permute.xlu0 %2110
        %2112 = vrot.lane.b32.xlu0 %v2103, 72
        %v2113 = vpop.permute.xlu0 %2112
        %2114 = vrot.lane.b32.xlu0 %v2107, 72
        %v2115 = vpop.permute.xlu0 %2114
        %v2116 = vsel %vm440, %v2109, %v2111
        %v2117 = vsel %vm440, %v2111, %v2113
        %v2118 = vsel %vm440, %v2113, %v2115
        %v2124 = vmul.f32 %v2083, %v2109
        %v2125 = vmul.f32 %v2084, %v2116
        %v2126 = vmul.f32 %v2085, %v2117
        %v2127 = vmul.f32 %v2086, %v2118
        %v2128 = vmul.f32 %v2087, %v2115
        %2134 = vrot.lane.b32.xlu0 %v2124, 56
        %v2135 = vpop.permute.xlu0 %2134
        %2136 = vrot.lane.b32.xlu0 %v2125, 56
        %v2137 = vpop.permute.xlu0 %2136
        %2138 = vrot.lane.b32.xlu0 %v2126, 56
        %v2139 = vpop.permute.xlu0 %2138
        %2140 = vrot.lane.b32.xlu0 %v2127, 56
        %v2141 = vpop.permute.xlu0 %2140
        %2142 = vrot.lane.b32.xlu0 %v2128, 56
        %v2143 = vpop.permute.xlu0 %2142
        %v2144 = vsel %vm411, %v2135, %v2137
        %v2145 = vsel %vm411, %v2137, %v2139
        %v2146 = vsel %vm411, %v2139, %v2141
        %v2147 = vsel %vm411, %v2141, %v2143
        %2152 = vst [vmem:[#allocation3 + $0x320] sm:$0xff] %v2144
        %2153 = vst [vmem:[#allocation3 + $0x328] sm:$0xff] %v2145
        %2154 = vst [vmem:[#allocation3 + $0x330] sm:$0xff] %v2146
        %2155 = vst [vmem:[#allocation3 + $0x338] sm:$0xff] %v2147
        %v2156 = vld [vmem:[#allocation2 + $0x8] sm:$0xff]
        %v2157 = vld [vmem:[#allocation2 + $0x10] sm:$0xff]
        %v2158 = vld [vmem:[#allocation2 + $0x18] sm:$0xff]
        %v2159 = vld [vmem:[#allocation2 + $0x20] sm:$0xff]
        %v2160 = vld [vmem:[#allocation2 + $0x28] sm:$0xff]
        %v2161 = vld [vmem:[%s1572] ss:$8 sm:$0xf]
        %v2162 = vld [vmem:[%s757] ss:$8 sm:$0xf]
        %v2163 = vmul.f32 %v2161, %v2162
        %v2164 = vld [vmem:[%s461] ss:$8 sm:$0xf]
        %v2165 = vmul.f32 %v2163, %v2164
        %v2167 = vlaneseq
        %v2168 = vshrl.u32 %v2167, 7
        %v2169 = vsub.s32 0, %v2168
        %v2170 = vrot.slane %v2165, %v2169
        %v2171 = vlaneseq
        %v2172 = vshrl.u32 %v2171, 7
        %v2173 = vsub.s32 1, %v2172
        %v2174 = vrot.slane %v2165, %v2173
        %v2175 = vlaneseq
        %v2176 = vshrl.u32 %v2175, 7
        %v2177 = vsub.s32 2, %v2176
        %v2178 = vrot.slane %v2165, %v2177
        %v2179 = vlaneseq
        %v2180 = vshrl.u32 %v2179, 7
        %v2181 = vsub.s32 3, %v2180
        %v2182 = vrot.slane %v2165, %v2181
        %2183 = vrot.lane.b32.xlu0 %v2170, 73
        %v2184 = vpop.permute.xlu0 %2183
        %2185 = vrot.lane.b32.xlu0 %v2174, 73
        %v2186 = vpop.permute.xlu0 %2185
        %2187 = vrot.lane.b32.xlu0 %v2178, 73
        %v2188 = vpop.permute.xlu0 %2187
        %2189 = vrot.lane.b32.xlu0 %v2182, 73
        %v2190 = vpop.permute.xlu0 %2189
        %v2191 = vsel %vm365, %v2184, %v2186
        %v2192 = vsel %vm365, %v2186, %v2188
        %v2193 = vsel %vm365, %v2188, %v2190
        %v2199 = vmul.f32 %v2156, %v2184
        %v2200 = vmul.f32 %v2157, %v2191
        %v2201 = vmul.f32 %v2158, %v2192
        %v2202 = vmul.f32 %v2159, %v2193
        %v2203 = vmul.f32 %v2160, %v2190
        %2209 = vrot.lane.b32.xlu0 %v2199, 55
        %v2210 = vpop.permute.xlu0 %2209
        %2211 = vrot.lane.b32.xlu0 %v2200, 55
        %v2212 = vpop.permute.xlu0 %2211
        %2213 = vrot.lane.b32.xlu0 %v2201, 55
        %v2214 = vpop.permute.xlu0 %2213
        %2215 = vrot.lane.b32.xlu0 %v2202, 55
        %v2216 = vpop.permute.xlu0 %2215
        %2217 = vrot.lane.b32.xlu0 %v2203, 55
        %v2218 = vpop.permute.xlu0 %2217
        %v2219 = vsel %vm336, %v2210, %v2212
        %v2220 = vsel %vm336, %v2212, %v2214
        %v2221 = vsel %vm336, %v2214, %v2216
        %v2222 = vsel %vm336, %v2216, %v2218
        %2227 = vst [vmem:[#allocation3 + $0x340] sm:$0xff] %v2219
        %2228 = vst [vmem:[#allocation3 + $0x348] sm:$0xff] %v2220
        %2229 = vst [vmem:[#allocation3 + $0x350] sm:$0xff] %v2221
        %2230 = vst [vmem:[#allocation3 + $0x358] sm:$0xff] %v2222
        %v2231 = vld [vmem:[%s2] sm:$0xff]
        %v2232 = vld [vmem:[%s2 + $0x8] sm:$0xff]
        %v2233 = vld [vmem:[#allocation3] sm:$0xff]
        %v2234 = vld [vmem:[#allocation3 + $0x8] sm:$0xff]
        %v2235 = vld [vmem:[#allocation3 + $0x10] sm:$0xff]
        %v2236 = vld [vmem:[#allocation3 + $0x18] sm:$0xff]
        %v2237 = vld [vmem:[#allocation3 + $0x20] sm:$0xff]
        %v2238 = vld [vmem:[#allocation3 + $0x28] sm:$0xff]
        %v2239 = vld [vmem:[#allocation3 + $0x30] sm:$0xff]
        %v2240 = vld [vmem:[#allocation3 + $0x38] sm:$0xff]
        %v2241 = vld [vmem:[#allocation3 + $0x40] sm:$0xff]
        %v2242 = vld [vmem:[#allocation3 + $0x48] sm:$0xff]
        %v2243 = vld [vmem:[#allocation3 + $0x50] sm:$0xff]
        %v2244 = vld [vmem:[#allocation3 + $0x58] sm:$0xff]
        %v2245 = vld [vmem:[#allocation3 + $0x60] sm:$0xff]
        %v2246 = vld [vmem:[#allocation3 + $0x68] sm:$0xff]
        %v2247 = vld [vmem:[#allocation3 + $0x70] sm:$0xff]
        %v2248 = vld [vmem:[#allocation3 + $0x78] sm:$0xff]
        %v2249 = vld [vmem:[#allocation3 + $0x80] sm:$0xff]
        %v2250 = vld [vmem:[#allocation3 + $0x88] sm:$0xff]
        %v2251 = vld [vmem:[#allocation3 + $0x90] sm:$0xff]
        %v2252 = vld [vmem:[#allocation3 + $0x98] sm:$0xff]
        %v2253 = vld [vmem:[#allocation3 + $0xa0] sm:$0xff]
        %v2254 = vld [vmem:[#allocation3 + $0xa8] sm:$0xff]
        %v2255 = vld [vmem:[#allocation3 + $0xb0] sm:$0xff]
        %v2256 = vld [vmem:[#allocation3 + $0xb8] sm:$0xff]
        %v2257 = vld [vmem:[#allocation3 + $0xc0] sm:$0xff]
        %v2258 = vld [vmem:[#allocation3 + $0xc8] sm:$0xff]
        %v2259 = vld [vmem:[#allocation3 + $0xd0] sm:$0xff]
        %v2260 = vld [vmem:[#allocation3 + $0xd8] sm:$0xff]
        %v2261 = vld [vmem:[#allocation3 + $0xe0] sm:$0xff]
        %v2262 = vld [vmem:[#allocation3 + $0xe8] sm:$0xff]
        %v2263 = vld [vmem:[#allocation3 + $0xf0] sm:$0xff]
        %v2264 = vld [vmem:[#allocation3 + $0xf8] sm:$0xff]
        %v2265 = vld [vmem:[#allocation3 + $0x100] sm:$0xff]
        %v2266 = vld [vmem:[#allocation3 + $0x108] sm:$0xff]
        %v2267 = vld [vmem:[#allocation3 + $0x110] sm:$0xff]
        %v2268 = vld [vmem:[#allocation3 + $0x118] sm:$0xff]
        %v2269 = vld [vmem:[#allocation3 + $0x120] sm:$0xff]
        %v2270 = vld [vmem:[#allocation3 + $0x128] sm:$0xff]
        %v2271 = vld [vmem:[#allocation3 + $0x130] sm:$0xff]
        %v2272 = vld [vmem:[#allocation3 + $0x138] sm:$0xff]
        %v2273 = vld [vmem:[#allocation3 + $0x140] sm:$0xff]
        %v2274 = vld [vmem:[#allocation3 + $0x148] sm:$0xff]
        %v2275 = vld [vmem:[#allocation3 + $0x150] sm:$0xff]
        %v2276 = vld [vmem:[#allocation3 + $0x158] sm:$0xff]
        %v2277 = vld [vmem:[#allocation3 + $0x160] sm:$0xff]
        %v2278 = vld [vmem:[#allocation3 + $0x168] sm:$0xff]
        %v2279 = vld [vmem:[#allocation3 + $0x170] sm:$0xff]
        %v2280 = vld [vmem:[#allocation3 + $0x178] sm:$0xff]
        %v2281 = vld [vmem:[#allocation3 + $0x180] sm:$0xff]
        %v2282 = vld [vmem:[#allocation3 + $0x188] sm:$0xff]
        %v2283 = vld [vmem:[#allocation3 + $0x190] sm:$0xff]
        %v2284 = vld [vmem:[#allocation3 + $0x198] sm:$0xff]
        %v2285 = vld [vmem:[#allocation3 + $0x1a0] sm:$0xff]
        %v2286 = vld [vmem:[#allocation3 + $0x1a8] sm:$0xff]
        %v2287 = vld [vmem:[#allocation3 + $0x1b0] sm:$0xff]
        %v2288 = vld [vmem:[#allocation3 + $0x1b8] sm:$0xff]
        %v2289 = vld [vmem:[#allocation3 + $0x1c0] sm:$0xff]
        %v2290 = vld [vmem:[#allocation3 + $0x1c8] sm:$0xff]
        %v2291 = vld [vmem:[#allocation3 + $0x1d0] sm:$0xff]
        %v2292 = vld [vmem:[#allocation3 + $0x1d8] sm:$0xff]
        %v2293 = vld [vmem:[#allocation3 + $0x1e0] sm:$0xff]
        %v2294 = vld [vmem:[#allocation3 + $0x1e8] sm:$0xff]
        %v2295 = vld [vmem:[#allocation3 + $0x1f0] sm:$0xff]
        %v2296 = vld [vmem:[#allocation3 + $0x1f8] sm:$0xff]
        %v2297 = vld [vmem:[#allocation3 + $0x200] sm:$0xff]
        %v2298 = vld [vmem:[#allocation3 + $0x208] sm:$0xff]
        %v2299 = vld [vmem:[#allocation3 + $0x210] sm:$0xff]
        %v2300 = vld [vmem:[#allocation3 + $0x218] sm:$0xff]
        %v2301 = vld [vmem:[#allocation3 + $0x220] sm:$0xff]
        %v2302 = vld [vmem:[#allocation3 + $0x228] sm:$0xff]
        %v2303 = vld [vmem:[#allocation3 + $0x230] sm:$0xff]
        %v2304 = vld [vmem:[#allocation3 + $0x238] sm:$0xff]
        %v2305 = vld [vmem:[#allocation3 + $0x240] sm:$0xff]
        %v2306 = vld [vmem:[#allocation3 + $0x248] sm:$0xff]
        %v2307 = vld [vmem:[#allocation3 + $0x250] sm:$0xff]
        %v2308 = vld [vmem:[#allocation3 + $0x258] sm:$0xff]
        %v2309 = vld [vmem:[#allocation3 + $0x260] sm:$0xff]
        %v2310 = vld [vmem:[#allocation3 + $0x268] sm:$0xff]
        %v2311 = vld [vmem:[#allocation3 + $0x270] sm:$0xff]
        %v2312 = vld [vmem:[#allocation3 + $0x278] sm:$0xff]
        %v2313 = vld [vmem:[#allocation3 + $0x280] sm:$0xff]
        %v2314 = vld [vmem:[#allocation3 + $0x288] sm:$0xff]
        %v2315 = vld [vmem:[#allocation3 + $0x290] sm:$0xff]
        %v2316 = vld [vmem:[#allocation3 + $0x298] sm:$0xff]
        %v2317 = vld [vmem:[#allocation3 + $0x2a0] sm:$0xff]
        %v2318 = vld [vmem:[#allocation3 + $0x2a8] sm:$0xff]
        %v2319 = vld [vmem:[#allocation3 + $0x2b0] sm:$0xff]
        %v2320 = vld [vmem:[#allocation3 + $0x2b8] sm:$0xff]
        %v2321 = vld [vmem:[#allocation3 + $0x2c0] sm:$0xff]
        %v2322 = vld [vmem:[#allocation3 + $0x2c8] sm:$0xff]
        %v2323 = vld [vmem:[#allocation3 + $0x2d0] sm:$0xff]
        %v2324 = vld [vmem:[#allocation3 + $0x2d8] sm:$0xff]
        %v2325 = vld [vmem:[#allocation3 + $0x2e0] sm:$0xff]
        %v2326 = vld [vmem:[#allocation3 + $0x2e8] sm:$0xff]
        %v2327 = vld [vmem:[#allocation3 + $0x2f0] sm:$0xff]
        %v2328 = vld [vmem:[#allocation3 + $0x2f8] sm:$0xff]
        %v2329 = vld [vmem:[#allocation3 + $0x300] sm:$0xff]
        %v2330 = vld [vmem:[#allocation3 + $0x308] sm:$0xff]
        %v2331 = vld [vmem:[#allocation3 + $0x310] sm:$0xff]
        %v2332 = vld [vmem:[#allocation3 + $0x318] sm:$0xff]
        %v2333 = vld [vmem:[#allocation3 + $0x320] sm:$0xff]
        %v2334 = vld [vmem:[#allocation3 + $0x328] sm:$0xff]
        %v2335 = vld [vmem:[#allocation3 + $0x330] sm:$0xff]
        %v2336 = vld [vmem:[#allocation3 + $0x338] sm:$0xff]
        %v2337 = vld [vmem:[#allocation3 + $0x340] sm:$0xff]
        %v2338 = vld [vmem:[#allocation3 + $0x348] sm:$0xff]
        %v2339 = vld [vmem:[#allocation3 + $0x350] sm:$0xff]
        %v2340 = vld [vmem:[#allocation3 + $0x358] sm:$0xff]
        %v2341 = vld [vmem:[%s3] sm:$0xff]
        %2343 = vset.pattern.permute.xlu0 0
        %2344 = vperm.xlu0 %2343, %v2341
        %v2345 = vpop.permute.xlu0 %2344
        %vm2347 = vcmask 719872
        %v2349 = vsel %vm2347, %v2232, 0
        %2351 = vmatprep.subr.mxu0 %v2234
        %2352 = vmatpush1.msra.mxu0 %v2233
        %2353 = vmatprep.subr.mxu0 %v2238
        %2354 = vmatpush1.msra.mxu0 %v2237
        %2355 = vmatprep.subr.mxu0 %v2242
        %2356 = vmatpush1.msra.mxu0 %v2241
        %2357 = vmatprep.subr.mxu0 %v2246
        %2358 = vmatpush1.msra.mxu0 %v2245
        %2359 = vmatprep.subr.mxu0 %v2250
        %2360 = vmatpush1.msra.mxu0 %v2249
        %2361 = vmatprep.subr.mxu0 %v2254
        %2362 = vmatpush1.msra.mxu0 %v2253
        %2363 = vmatprep.subr.mxu0 %v2258
        %2364 = vmatpush1.msra.mxu0 %v2257
        %2365 = vmatprep.subr.mxu0 %v2262
        %2366 = vmatpush1.msra.mxu0 %v2261
        %2367 = vmatprep.subr.mxu0 %v2266
        %2368 = vmatpush1.msra.mxu0 %v2265
        %2369 = vmatprep.subr.mxu0 %v2270
        %2370 = vmatpush1.msra.mxu0 %v2269
        %2371 = vmatprep.subr.mxu0 %v2274
        %2372 = vmatpush1.msra.mxu0 %v2273
        %2373 = vmatprep.subr.mxu0 %v2278
        %2374 = vmatpush1.msra.mxu0 %v2277
        %2375 = vmatprep.subr.mxu0 %v2282
        %2376 = vmatpush1.msra.mxu0 %v2281
        %2377 = vmatprep.subr.mxu0 %v2286
        %2378 = vmatpush1.msra.mxu0 %v2285
        %2379 = vmatprep.subr.mxu0 %v2290
        %2380 = vmatpush1.msra.mxu0 %v2289
        %2381 = vmatprep.subr.mxu0 %v2294
        %2382 = vmatpush1.msra.mxu0 %v2293
        %2383 = vmatprep.subr.mxu0 %v2298
        %2384 = vmatpush1.msra.mxu0 %v2297
        %2385 = vmatprep.subr.mxu0 %v2302
        %2386 = vmatpush1.msra.mxu0 %v2301
        %2387 = vmatprep.subr.mxu0 %v2306
        %2388 = vmatpush1.msra.mxu0 %v2305
        %2389 = vmatprep.subr.mxu0 %v2310
        %2390 = vmatpush1.msra.mxu0 %v2309
        %2391 = vmatprep.subr.mxu0 %v2314
        %2392 = vmatpush1.msra.mxu0 %v2313
        %2393 = vmatprep.subr.mxu0 %v2318
        %2394 = vmatpush1.msra.mxu0 %v2317
        %2395 = vmatprep.subr.mxu0 %v2322
        %2396 = vmatpush1.msra.mxu0 %v2321
        %2397 = vmatprep.subr.mxu0 %v2326
        %2398 = vmatpush1.msra.mxu0 %v2325
        %2399 = vmatprep.subr.mxu0 %v2330
        %2400 = vmatpush1.msra.mxu0 %v2329
        %2401 = vmatprep.subr.mxu0 %v2334
        %2402 = vmatpush1.msra.mxu0 %v2333
        %2403 = vmatprep.subr.mxu0 %v2338
        %2404 = vmatpush1.msra.mxu0 %v2337
        %2405 = vmatprep.subr.mxu0 0.0
        %2406 = vmatpush1.msra.mxu0 0.0
        %2407 = vmatprep.subr.mxu0 0.0
        %2408 = vmatpush1.msra.mxu0 0.0
        %2409 = vmatprep.subr.mxu0 0.0
        %2410 = vmatpush1.msra.mxu0 0.0
        %2411 = vmatprep.subr.mxu0 0.0
        %2412 = vmatpush1.msra.mxu0 0.0
        %2413 = vmatprep.subr.mxu0 0.0
        %2414 = vmatpush1.msra.mxu0 0.0
        %2415 = vmatprep.mubr.f32.mxu0 %v2349
        %2416 = vmatmul.mubr.f32.gmra.mrb[0].mxu0 %v2231
        %v2417 = vpop.f32.mrb[0].mxu0
        %v2418 = vadd.f32 %v2345, %v2417
        %v2419 = vpop.f32.mrb[0].mxu0
        %v2420 = vadd.f32 %v2345, %v2419
        %2421 = vdwg.mxu0
        %2422 = vmatprep.subr.mxu0 %v2236
        %2423 = vmatpush1.msra.mxu0 %v2235
        %2424 = vmatprep.subr.mxu0 %v2240
        %2425 = vmatpush1.msra.mxu0 %v2239
        %2426 = vmatprep.subr.mxu0 %v2244
        %2427 = vmatpush1.msra.mxu0 %v2243
        %2428 = vmatprep.subr.mxu0 %v2248
        %2429 = vmatpush1.msra.mxu0 %v2247
        %2430 = vmatprep.subr.mxu0 %v2252
        %2431 = vmatpush1.msra.mxu0 %v2251
        %2432 = vmatprep.subr.mxu0 %v2256
        %2433 = vmatpush1.msra.mxu0 %v2255
        %2434 = vmatprep.subr.mxu0 %v2260
        %2435 = vmatpush1.msra.mxu0 %v2259
        %2436 = vmatprep.subr.mxu0 %v2264
        %2437 = vmatpush1.msra.mxu0 %v2263
        %2438 = vmatprep.subr.mxu0 %v2268
        %2439 = vmatpush1.msra.mxu0 %v2267
        %2440 = vmatprep.subr.mxu0 %v2272
        %2441 = vmatpush1.msra.mxu0 %v2271
        %2442 = vmatprep.subr.mxu0 %v2276
        %2443 = vmatpush1.msra.mxu0 %v2275
        %2444 = vmatprep.subr.mxu0 %v2280
        %2445 = vmatpush1.msra.mxu0 %v2279
        %2446 = vmatprep.subr.mxu0 %v2284
        %2447 = vmatpush1.msra.mxu0 %v2283
        %2448 = vmatprep.subr.mxu0 %v2288
        %2449 = vmatpush1.msra.mxu0 %v2287
        %2450 = vmatprep.subr.mxu0 %v2292
        %2451 = vmatpush1.msra.mxu0 %v2291
        %2452 = vmatprep.subr.mxu0 %v2296
        %2453 = vmatpush1.msra.mxu0 %v2295
        %2454 = vmatprep.subr.mxu0 %v2300
        %2455 = vmatpush1.msra.mxu0 %v2299
        %2456 = vmatprep.subr.mxu0 %v2304
        %2457 = vmatpush1.msra.mxu0 %v2303
        %2458 = vmatprep.subr.mxu0 %v2308
        %2459 = vmatpush1.msra.mxu0 %v2307
        %2460 = vmatprep.subr.mxu0 %v2312
        %2461 = vmatpush1.msra.mxu0 %v2311
        %2462 = vmatprep.subr.mxu0 %v2316
        %2463 = vmatpush1.msra.mxu0 %v2315
        %2464 = vmatprep.subr.mxu0 %v2320
        %2465 = vmatpush1.msra.mxu0 %v2319
        %2466 = vmatprep.subr.mxu0 %v2324
        %2467 = vmatpush1.msra.mxu0 %v2323
        %2468 = vmatprep.subr.mxu0 %v2328
        %2469 = vmatpush1.msra.mxu0 %v2327
        %2470 = vmatprep.subr.mxu0 %v2332
        %2471 = vmatpush1.msra.mxu0 %v2331
        %2472 = vmatprep.subr.mxu0 %v2336
        %2473 = vmatpush1.msra.mxu0 %v2335
        %2474 = vmatprep.subr.mxu0 %v2340
        %2475 = vmatpush1.msra.mxu0 %v2339
        %2476 = vmatprep.subr.mxu0 0.0
        %2477 = vmatpush1.msra.mxu0 0.0
        %2478 = vmatprep.subr.mxu0 0.0
        %2479 = vmatpush1.msra.mxu0 0.0
        %2480 = vmatprep.subr.mxu0 0.0
        %2481 = vmatpush1.msra.mxu0 0.0
        %2482 = vmatprep.subr.mxu0 0.0
        %2483 = vmatpush1.msra.mxu0 0.0
        %2484 = vmatprep.subr.mxu0 0.0
        %2485 = vmatpush1.msra.mxu0 0.0
        %2486 = vmatprep.mubr.f32.mxu0 %v2349
        %2487 = vmatmul.mubr.f32.gmra.mrb[0].mxu0 %v2231
        %v2488 = vpop.f32.mrb[0].mxu0
        %v2489 = vadd.f32 %v2345, %v2488
        %v2490 = vpop.f32.mrb[0].mxu0
        %v2491 = vadd.f32 %v2345, %v2490
        %2492 = vdwg.mxu0
        %v2493 = vadd.f32 %v2418, %v2420
        %v2494 = vadd.f32 %v2493, %v2489
        %v2495 = vadd.f32 %v2494, %v2491
        %2496 = vadd.xlane.f32.xlu0 %v2495
        %v2497 = vpop.xlane.xlu0 %2496
        %v2498 = vmul.f32 %v2497, 0.001953125
        %v2499 = vsub.f32 %v2418, %v2498
        %v2500 = vsub.f32 %v2420, %v2498
        %v2501 = vsub.f32 %v2489, %v2498
        %v2502 = vsub.f32 %v2491, %v2498
        %v2503 = vmul.f32 %v2499, %v2499
        %v2504 = vmul.f32 %v2500, %v2500
        %v2505 = vmul.f32 %v2501, %v2501
        %v2506 = vmul.f32 %v2502, %v2502
        %v2507 = vadd.f32 %v2503, %v2504
        %v2508 = vadd.f32 %v2507, %v2505
        %v2509 = vadd.f32 %v2508, %v2506
        %2510 = vadd.xlane.f32.xlu0 %v2509
        %v2511 = vpop.xlane.xlu0 %2510
        %v2512 = vmul.f32 %v2511, 0.001953125
        %v2513 = vadd.f32 %v2512, 1e-05
        %v2514 = vrsqrt.pop %v2513
        %v2515 = vmul.f32 %v2499, %v2514
        %v2516 = vmul.f32 %v2500, %v2514
        %v2517 = vmul.f32 %v2501, %v2514
        %v2518 = vmul.f32 %v2502, %v2514
        %v2519 = vmax.f32 %v2515, 0.0
        %v2520 = vmax.f32 %v2516, 0.0
        %v2521 = vmax.f32 %v2517, 0.0
        %v2522 = vmax.f32 %v2518, 0.0
        %v2523 = vld [vmem:[%s4] sm:$0xff]
        %v2524 = vld [vmem:[%s5] sm:$0xff]
        %2526 = vset.pattern.permute.xlu0 0
        %2527 = vperm.xlu0 %2526, %v2524
        %v2528 = vpop.permute.xlu0 %2527
        %v2531 = vsel %vm1110, %v2523, 0
        %2533 = vmatprep.subr.mxu0 %v2520
        %2534 = vmatpush1.msra.mxu0 %v2519
        %2535 = vmatprep.subr.mxu0 0.0
        %2536 = vmatpush1.msra.mxu0 0.0
        %2537 = vmatprep.subr.mxu0 0.0
        %2538 = vmatpush1.msra.mxu0 0.0
        %2539 = vmatprep.subr.mxu0 0.0
        %2540 = vmatpush1.msra.mxu0 0.0
        %2541 = vmatprep.subr.mxu0 0.0
        %2542 = vmatpush1.msra.mxu0 0.0
        %2543 = vmatprep.subr.mxu0 0.0
        %2544 = vmatpush1.msra.mxu0 0.0
        %2545 = vmatprep.subr.mxu0 0.0
        %2546 = vmatpush1.msra.mxu0 0.0
        %2547 = vmatprep.subr.mxu0 0.0
        %2548 = vmatpush1.msra.mxu0 0.0
        %2549 = vmatprep.subr.mxu0 0.0
        %2550 = vmatpush1.msra.mxu0 0.0
        %2551 = vmatprep.subr.mxu0 0.0
        %2552 = vmatpush1.msra.mxu0 0.0
        %2553 = vmatprep.subr.mxu0 0.0
        %2554 = vmatpush1.msra.mxu0 0.0
        %2555 = vmatprep.subr.mxu0 0.0
        %2556 = vmatpush1.msra.mxu0 0.0
        %2557 = vmatprep.subr.mxu0 0.0
        %2558 = vmatpush1.msra.mxu0 0.0
        %2559 = vmatprep.subr.mxu0 0.0
        %2560 = vmatpush1.msra.mxu0 0.0
        %2561 = vmatprep.subr.mxu0 0.0
        %2562 = vmatpush1.msra.mxu0 0.0
        %2563 = vmatprep.subr.mxu0 0.0
        %2564 = vmatpush1.msra.mxu0 0.0
        %2565 = vmatprep.subr.mxu0 0.0
        %2566 = vmatpush1.msra.mxu0 0.0
        %2567 = vmatprep.subr.mxu0 0.0
        %2568 = vmatpush1.msra.mxu0 0.0
        %2569 = vmatprep.subr.mxu0 0.0
        %2570 = vmatpush1.msra.mxu0 0.0
        %2571 = vmatprep.subr.mxu0 0.0
        %2572 = vmatpush1.msra.mxu0 0.0
        %2573 = vmatprep.subr.mxu0 0.0
        %2574 = vmatpush1.msra.mxu0 0.0
        %2575 = vmatprep.subr.mxu0 0.0
        %2576 = vmatpush1.msra.mxu0 0.0
        %2577 = vmatprep.subr.mxu0 0.0
        %2578 = vmatpush1.msra.mxu0 0.0
        %2579 = vmatprep.subr.mxu0 0.0
        %2580 = vmatpush1.msra.mxu0 0.0
        %2581 = vmatprep.subr.mxu0 0.0
        %2582 = vmatpush1.msra.mxu0 0.0
        %2583 = vmatprep.subr.mxu0 0.0
        %2584 = vmatpush1.msra.mxu0 0.0
        %2585 = vmatprep.subr.mxu0 0.0
        %2586 = vmatpush1.msra.mxu0 0.0
        %2587 = vmatprep.subr.mxu0 0.0
        %2588 = vmatpush1.msra.mxu0 0.0
        %2589 = vmatprep.subr.mxu0 0.0
        %2590 = vmatpush1.msra.mxu0 0.0
        %2591 = vmatprep.subr.mxu0 0.0
        %2592 = vmatpush1.msra.mxu0 0.0
        %2593 = vmatprep.subr.mxu0 0.0
        %2594 = vmatpush1.msra.mxu0 0.0
        %2595 = vmatprep.subr.mxu0 0.0
        %2596 = vmatpush1.msra.mxu0 0.0
        %2597 = vmatprep.mubr.f32.mxu0 0.0
        %2598 = vmatmul.mubr.f32.gmra.mrb[0].mxu0 %v2531
        %v2599 = vpop.f32.mrb[0].mxu0
        %v2600 = vadd.f32 %v2528, %v2599
        %v2601 = vpop.f32.mrb[0].mxu0
        %v2602 = vadd.f32 %v2528, %v2601
        %2603 = vdwg.mxu0
        %2604 = vmatprep.subr.mxu0 %v2522
        %2605 = vmatpush1.msra.mxu0 %v2521
        %2606 = vmatprep.subr.mxu0 0.0
        %2607 = vmatpush1.msra.mxu0 0.0
        %2608 = vmatprep.subr.mxu0 0.0
        %2609 = vmatpush1.msra.mxu0 0.0
        %2610 = vmatprep.subr.mxu0 0.0
        %2611 = vmatpush1.msra.mxu0 0.0
        %2612 = vmatprep.subr.mxu0 0.0
        %2613 = vmatpush1.msra.mxu0 0.0
        %2614 = vmatprep.subr.mxu0 0.0
        %2615 = vmatpush1.msra.mxu0 0.0
        %2616 = vmatprep.subr.mxu0 0.0
        %2617 = vmatpush1.msra.mxu0 0.0
        %2618 = vmatprep.subr.mxu0 0.0
        %2619 = vmatpush1.msra.mxu0 0.0
        %2620 = vmatprep.subr.mxu0 0.0
        %2621 = vmatpush1.msra.mxu0 0.0
        %2622 = vmatprep.subr.mxu0 0.0
        %2623 = vmatpush1.msra.mxu0 0.0
        %2624 = vmatprep.subr.mxu0 0.0
        %2625 = vmatpush1.msra.mxu0 0.0
        %2626 = vmatprep.subr.mxu0 0.0
        %2627 = vmatpush1.msra.mxu0 0.0
        %2628 = vmatprep.subr.mxu0 0.0
        %2629 = vmatpush1.msra.mxu0 0.0
        %2630 = vmatprep.subr.mxu0 0.0
        %2631 = vmatpush1.msra.mxu0 0.0
        %2632 = vmatprep.subr.mxu0 0.0
        %2633 = vmatpush1.msra.mxu0 0.0
        %2634 = vmatprep.subr.mxu0 0.0
        %2635 = vmatpush1.msra.mxu0 0.0
        %2636 = vmatprep.subr.mxu0 0.0
        %2637 = vmatpush1.msra.mxu0 0.0
        %2638 = vmatprep.subr.mxu0 0.0
        %2639 = vmatpush1.msra.mxu0 0.0
        %2640 = vmatprep.subr.mxu0 0.0
        %2641 = vmatpush1.msra.mxu0 0.0
        %2642 = vmatprep.subr.mxu0 0.0
        %2643 = vmatpush1.msra.mxu0 0.0
        %2644 = vmatprep.subr.mxu0 0.0
        %2645 = vmatpush1.msra.mxu0 0.0
        %2646 = vmatprep.subr.mxu0 0.0
        %2647 = vmatpush1.msra.mxu0 0.0
        %2648 = vmatprep.subr.mxu0 0.0
        %2649 = vmatpush1.msra.mxu0 0.0
        %2650 = vmatprep.subr.mxu0 0.0
        %2651 = vmatpush1.msra.mxu0 0.0
        %2652 = vmatprep.subr.mxu0 0.0
        %2653 = vmatpush1.msra.mxu0 0.0
        %2654 = vmatprep.subr.mxu0 0.0
        %2655 = vmatpush1.msra.mxu0 0.0
        %2656 = vmatprep.subr.mxu0 0.0
        %2657 = vmatpush1.msra.mxu0 0.0
        %2658 = vmatprep.subr.mxu0 0.0
        %2659 = vmatpush1.msra.mxu0 0.0
        %2660 = vmatprep.subr.mxu0 0.0
        %2661 = vmatpush1.msra.mxu0 0.0
        %2662 = vmatprep.subr.mxu0 0.0
        %2663 = vmatpush1.msra.mxu0 0.0
        %2664 = vmatprep.subr.mxu0 0.0
        %2665 = vmatpush1.msra.mxu0 0.0
        %2666 = vmatprep.subr.mxu0 0.0
        %2667 = vmatpush1.msra.mxu0 0.0
        %2668 = vmatprep.mubr.f32.mxu0 0.0
        %2669 = vmatmul.mubr.f32.gmra.mrb[0].mxu0 %v2531
        %v2670 = vpop.f32.mrb[0].mxu0
        %v2671 = vadd.f32 %v2528, %v2670
        %v2672 = vpop.f32.mrb[0].mxu0
        %v2673 = vadd.f32 %v2528, %v2672
        %2674 = vdwg.mxu0
        %v2675 = vadd.f32 %v2600, %v2602
        %v2676 = vadd.f32 %v2675, %v2671
        %v2677 = vadd.f32 %v2676, %v2673
        %2678 = vadd.xlane.f32.xlu0 %v2677
        %v2679 = vpop.xlane.xlu0 %2678
        %v2680 = vmul.f32 %v2679, 0.001953125
        %v2681 = vsub.f32 %v2600, %v2680
        %v2682 = vsub.f32 %v2602, %v2680
        %v2683 = vsub.f32 %v2671, %v2680
        %v2684 = vsub.f32 %v2673, %v2680
        %v2685 = vmul.f32 %v2681, %v2681
        %v2686 = vmul.f32 %v2682, %v2682
        %v2687 = vmul.f32 %v2683, %v2683
        %v2688 = vmul.f32 %v2684, %v2684
        %v2689 = vadd.f32 %v2685, %v2686
        %v2690 = vadd.f32 %v2689, %v2687
        %v2691 = vadd.f32 %v2690, %v2688
        %2692 = vadd.xlane.f32.xlu0 %v2691
        %v2693 = vpop.xlane.xlu0 %2692
        %v2694 = vmul.f32 %v2693, 0.001953125
        %v2695 = vadd.f32 %v2694, 1e-05
        %v2696 = vrsqrt.pop %v2695
        %v2697 = vmul.f32 %v2681, %v2696
        %v2698 = vmul.f32 %v2682, %v2696
        %v2699 = vmul.f32 %v2683, %v2696
        %v2700 = vmul.f32 %v2684, %v2696
        %v2701 = vmax.f32 %v2697, 0.0
        %v2702 = vmax.f32 %v2698, 0.0
        %v2703 = vmax.f32 %v2699, 0.0
        %v2704 = vmax.f32 %v2700, 0.0
        %v2705 = vld [vmem:[%s248] sm:$0xff]
        %v2706 = vld [vmem:[%s248 + $0x8] sm:$0xff]
        %v2707 = vadd.f32 %v2701, %v2519
        %v2708 = vadd.f32 %v2702, %v2520
        %v2709 = vadd.f32 %v2703, %v2521
        %v2710 = vadd.f32 %v2704, %v2522
        %v2713 = vcombine.high %v2705, %v2705
        %v2714 = vcombine.high %v2706, %v2706
        %v2717 = vadd.f32 %v2707, %v2705
        %v2718 = vadd.f32 %v2708, %v2713
        %v2719 = vadd.f32 %v2709, %v2706
        %v2720 = vadd.f32 %v2710, %v2714
        %v2721 = vmax.f32 %v2717, 0.0
        %v2722 = vmax.f32 %v2718, 0.0
        %v2723 = vmax.f32 %v2719, 0.0
        %v2724 = vmax.f32 %v2720, 0.0
        %v2729 = vcombine.low %v2721, %v2722
        %v2730 = vcombine.low %v2723, %v2724
        %2733 = vst [vmem:[%s280] sm:$0xff] %v2729
        %2734 = vst [vmem:[%s280 + $0x8] sm:$0xff] %v2730
        %s2735 = sand.u32 %s163, 1
        %s2736 = scalar_lea.sflag [#allocation6], %s2735
        %s2737 = sand.u32 %s163, 1
        %s2738 = smul.addr %s2737, 16
        %s2739 = scalar_lea.vmem [#allocation9], %s2738
        // Predicated region
        $region53: #{tpu_custom_call.1} parent=43 // pred_check
          %p2740 = pneg %p173
        $region54: #{tpu_custom_call.1} parent=43 // pred_check_branch
          %2742 = sbr.rel (%p2740) target = $region56
        $region55: #{tpu_custom_call.1} parent=43 // pred_region
          %s2744 = ssub.s32 256, 256
          %2745 = vsyncadd %s2736, %s2744
          %s2746 = smul.addr %s24, 4
          %s2747 = smul.addr %s2746, 64
          %s2748 = scalar_lea.hbm %s6, %s2747
          %s2750 = sshll.u32 %s2739, 4
          %s2751 = int_to_ptr.vmem [resolvable:$true] %s2750
          %2753 = dma.vmem_to_hbm [thread:$0]  %s2751, 256, %s2748, %s2736
        $region56: #{tpu_custom_call.1} parent=43 // pred_fallthru
          _
      $region44: #{tpu_custom_call.1} parent=5 // pred_fallthru
        _
      %p2754 = scmp.le.s32.totalorder 2, %s19
      // Predicated region
      $region57: #{tpu_custom_call.1} parent=5 // pred_check
        %p2755 = pneg %p2754
      $region58: #{tpu_custom_call.1} parent=5 // pred_check_branch
        %2757 = sbr.rel (%p2755) target = $region60
      $region59: #{tpu_custom_call.1} parent=5 // pred_region
        %s2758 = ssub.s32 %s19, 2
        // Predicated region
        $region61: #{tpu_custom_call.1} parent=59 // pred_check
          %p2759 = pneg %p179
        $region62: #{tpu_custom_call.1} parent=59 // pred_check_branch
          %2761 = sbr.rel (%p2759) target = $region64
        $region63: #{tpu_custom_call.1} parent=59 // pred_region
          %s2762 = sand.u32 %s164, 1
          %s2763 = scalar_lea.sflag [#allocation6], %s2762
          %s2764 = sand.u32 %s164, 1
          %s2765 = smul.addr %s2764, 16
          %s2766 = scalar_lea.vmem [#allocation9], %s2765
          %2767 = dma.done %s2763, 256
        $region64: #{tpu_custom_call.1} parent=59 // pred_fallthru
          _
      $region60: #{tpu_custom_call.1} parent=5 // pred_fallthru
        _
    $region6: #{tpu_custom_call.1} parent=1 // loop_footer
      %s23 = sadd.s32 1, %s19
    $region7: #{tpu_custom_call.1} parent=1 // loop_footer_branch
      %18 = sbr.rel target = $region3
    $region8: #{tpu_custom_call.1} parent=1 // loop_exit
      _
    %2768 = vsyncpa [#allocation5], 1
    %s2769 = scalar_lea.sflag [#allocation5], 1
    %2770 = vsyncpa %s2769, 1
    %2771 = vsyncpa [#allocation8], 1
    %2772 = vsyncpa [#allocation6], 1
    %s2773 = scalar_lea.sflag [#allocation6], 1
    %2774 = vsyncpa %s2773, 1

</llo_original>
